<compile_context>
chip_gen: v7x
topology: tpu7x:2x2x1
jax: 0.10.0
libtpu: 0.0.40
codegen_flags: <defaults>
</compile_context>

<pallas_src>
import numpy as np
import jax
import jax.numpy as jnp
from jax import lax
from jax.experimental import pallas as pl
from jax.experimental.pallas import tpu as pltpu

# Small, module-consistent shapes (module default n_embed=384/n_head=6; shrunk
# but kept divisible: head_size = n_embed // n_head).
N_EMBED = 128
N_HEAD = 4
HEAD_SIZE = N_EMBED // N_HEAD
FFN_HIDDEN = 4 * N_EMBED
BATCH = 2
SEQ = 16
EPS = 1e-5
NEG_INF = -1e30


def _layernorm(z, g, b):
    mu = jnp.mean(z, axis=-1, keepdims=True)
    var = jnp.mean(jnp.square(z - mu), axis=-1, keepdims=True)
    return (z - mu) * lax.rsqrt(var + EPS) * g + b


def _div_const(a, n):
    # integer divide by a compile-time constant; shift when power of two
    if n & (n - 1) == 0:
        return jnp.right_shift(a, int(n).bit_length() - 1)
    return a // n


def _mod_const(a, n):
    if n & (n - 1) == 0:
        return jnp.bitwise_and(a, n - 1)
    return a % n


def decode_layer_kernel(x_ref, b_ref, w_ref, wf1_ref, wf2_ref, o_ref):
    bb, T, C = x_ref.shape                 # bb = batch rows folded in this step
    M = bb * T
    x = x_ref[...].reshape(M, C)

    bias = b_ref[...]                      # (16, C) packed bias/gamma/beta slab
    bq1, bk1, bv1, bo1 = bias[0:1], bias[1:2], bias[2:3], bias[3:4]
    g1, be1 = bias[4:5], bias[5:6]
    bq2, bk2, bv2, bo2 = bias[6:7], bias[7:8], bias[8:9], bias[9:10]
    g2, be2 = bias[10:11], bias[11:12]
    bf2, g3, be3 = bias[12:13], bias[13:14], bias[14:15]

    # ---- per-step constants, built once and shared by both MHA sublayers ----
    # Block-diagonal causal mask over the (possibly batch-folded) M rows:
    # token i attends to token j iff same sequence AND j's position <= i's.
    row = lax.broadcasted_iota(jnp.int32, (M, M), 0)
    col = lax.broadcasted_iota(jnp.int32, (M, M), 1)
    causal = (_div_const(row, T) == _div_const(col, T)) & (
        _mod_const(row, T) >= _mod_const(col, T))

    # RoPE tables at full (M, C) width.  All rotary frequencies are exactly 1.0
    # (integer-division quirk of the torch code), so angle == position index.
    pos = _mod_const(lax.broadcasted_iota(jnp.int32, (M, C), 0), T).astype(jnp.float32)
    cosv = jnp.cos(pos)
    sinv = jnp.sin(pos)

    # Signed pair-swap permutation (the global even/odd pair swap equals the
    # block-diagonal of per-head swaps since head_size is even):
    #   rot = u @ P  ->  rot[:, 2j] = -u[:, 2j+1],  rot[:, 2j+1] = u[:, 2j]
    rr = lax.broadcasted_iota(jnp.int32, (C, C), 0)
    cc = lax.broadcasted_iota(jnp.int32, (C, C), 1)
    r_even = _mod_const(rr, 2) == 0
    P = jnp.where((cc == rr + 1) & r_even, 1.0,
                  jnp.where((cc == rr - 1) & (~r_even), -1.0, 0.0))

    scale = C ** -0.5          # reference scales by n_embed (C), not head_size
    hs = C // N_HEAD

    def rope(u):               # u: (M, C), full-width rotation
        rot = jnp.dot(u, P, preferred_element_type=jnp.float32)
        return u * cosv + rot * sinv

    def mha(z, wq, bq, wk, bk, wv, bv, wo, bo):
        q = rope(jnp.dot(z, wq, preferred_element_type=jnp.float32) + bq)
        k = rope(jnp.dot(z, wk, preferred_element_type=jnp.float32) + bk)
        v = jnp.dot(z, wv, preferred_element_type=jnp.float32) + bv
        heads = []
        for h in range(N_HEAD):                      # static unroll over heads
            sl = slice(h * hs, (h + 1) * hs)
            s = lax.dot_general(q[:, sl], k[:, sl], (((1,), (1,)), ((), ())),
                                preferred_element_type=jnp.float32) * scale
            s = jnp.where(causal, s, NEG_INF)
            s = s - jnp.max(s, axis=-1, keepdims=True)
            e = jnp.exp(s)
            # one reciprocal per row instead of an (M, M)-wide divide.
            # approx=True would move it to the EUP but costs ~1e-3 accuracy;
            # kept exact to stay within 2e-3 of the f32 reference.
            p_attn = e * pl.reciprocal(jnp.sum(e, axis=-1, keepdims=True),
                                       approx=False)
            heads.append(jnp.dot(p_attn, v[:, sl],
                                 preferred_element_type=jnp.float32))
        cat = jnp.concatenate(heads, axis=-1)        # (M, C)
        return jnp.dot(cat, wo, preferred_element_type=jnp.float32) + bo

    a1 = mha(x, w_ref[0], bq1, w_ref[1], bk1, w_ref[2], bv1, w_ref[3], bo1)
    o1 = _layernorm(x + a1, g1, be1)
    a2 = mha(o1, w_ref[4], bq2, w_ref[5], bk2, w_ref[6], bv2, w_ref[7], bo2)
    o2 = _layernorm(o1 + a2, g2, be2)

    wf1 = wf1_ref[0:C, :]                  # (C, 4C)
    bf1 = wf1_ref[C:C + 1, :]              # (1, 4C)
    hdn = jnp.maximum(jnp.dot(o2, wf1, preferred_element_type=jnp.float32) + bf1, 0.0)
    f = jnp.dot(hdn, wf2_ref[...], preferred_element_type=jnp.float32) + bf2

    o_ref[...] = _layernorm(o2 + f, g3, be3).reshape(bb, T, C)


def _batch_block_size(batch):
    """Fold the whole batch on single-TensorCore chips (v5e/v6e); keep a
    parallel per-batch grid on dual-TensorCore v7x so both cores get work."""
    try:
        kind = jax.devices()[0].device_kind.lower()
    except Exception:
        kind = ""
    if ("v7" in kind or "7x" in kind) and batch % 2 == 0:
        return max(batch // 2, 1)
    return batch


def decode_layer(x, p):
    B, T, C = x.shape
    bb = _batch_block_size(B)
    n_blocks = B // bb

    # Pack the 29 original parameters into 4 DMA slabs (5 inputs total).
    bias_slab = jnp.concatenate(
        [p["bq1"], p["bk1"], p["bv1"], p["bo1"], p["g1"], p["be1"],
         p["bq2"], p["bk2"], p["bv2"], p["bo2"], p["g2"], p["be2"],
         p["bf2"], p["g3"], p["be3"],
         jnp.zeros((1, C), jnp.float32)], axis=0)                          # (16, C)
    attn_w = jnp.stack([p["wq1"], p["wk1"], p["wv1"], p["wo1"],
                        p["wq2"], p["wk2"], p["wv2"], p["wo2"]], axis=0)   # (8, C, C)
    wf1b = jnp.concatenate([p["wf1"], p["bf1"]], axis=0)                   # (C+1, 4C)
    wf2 = p["wf2"]                                                         # (4C, C)

    return pl.pallas_call(
        decode_layer_kernel,
        out_shape=jax.ShapeDtypeStruct((B, T, C), jnp.float32),
        grid_spec=pltpu.PrefetchScalarGridSpec(
            num_scalar_prefetch=0,
            grid=(n_blocks,),
            in_specs=[
                pl.BlockSpec((bb, T, C), lambda i: (i, 0, 0)),
                pl.BlockSpec(bias_slab.shape, lambda i: (0, 0)),
                pl.BlockSpec(attn_w.shape, lambda i: (0, 0, 0)),
                pl.BlockSpec(wf1b.shape, lambda i: (0, 0)),
                pl.BlockSpec(wf2.shape, lambda i: (0, 0)),
            ],
            out_specs=pl.BlockSpec((bb, T, C), lambda i: (i, 0, 0)),
        ),
        compiler_params=pltpu.CompilerParams(dimension_semantics=("parallel",)),
    )(x, bias_slab, attn_w, wf1b, wf2)


# ---------------- pure-JAX reference (mirrors the torch forward) ----------------

def _rope_ref(u):
    B, T, D = u.shape
    theta = jnp.arange(T, dtype=jnp.float32)[None, :, None]      # freq == 1.0 everywhere
    c, s = jnp.cos(theta), jnp.sin(theta)
    a, b = u[..., 0::2], u[..., 1::2]
    return jnp.stack([a * c - b * s, a * s + b * c], axis=-1).reshape(B, T, D)


def _mha_ref(x, wq, bq, wk, bk, wv, bv, wo, bo):
    B, T, C = x.shape
    mask = jnp.tril(jnp.ones((T, T), bool))
    outs = []
    for h in range(N_HEAD):
        sl = slice(h * HEAD_SIZE, (h + 1) * HEAD_SIZE)
        q = _rope_ref(jnp.einsum("btc,cd->btd", x, wq[:, sl], precision="highest") + bq[0, sl])
        k = _rope_ref(jnp.einsum("btc,cd->btd", x, wk[:, sl], precision="highest") + bk[0, sl])
        v = jnp.einsum("btc,cd->btd", x, wv[:, sl], precision="highest") + bv[0, sl]
        wei = jnp.einsum("btd,bsd->bts", q, k, precision="highest") * (C ** -0.5)
        wei = jnp.where(mask, wei, NEG_INF)
        wei = jax.nn.softmax(wei, axis=-1)
        outs.append(jnp.einsum("bts,bsd->btd", wei, v, precision="highest"))
    cat = jnp.concatenate(outs, axis=-1)
    return jnp.einsum("btc,cd->btd", cat, wo, precision="highest") + bo[0]


def _decode_layer_ref(x, p):
    a1 = _mha_ref(x, p["wq1"], p["bq1"], p["wk1"], p["bk1"], p["wv1"], p["bv1"], p["wo1"], p["bo1"])
    o1 = _layernorm(x + a1, p["g1"], p["be1"])
    a2 = _mha_ref(o1, p["wq2"], p["bq2"], p["wk2"], p["bk2"], p["wv2"], p["bv2"], p["wo2"], p["bo2"])
    o2 = _layernorm(o1 + a2, p["g2"], p["be2"])
    h = jnp.maximum(jnp.einsum("btc,cd->btd", o2, p["wf1"], precision="highest") + p["bf1"][0], 0.0)
    f = jnp.einsum("btc,cd->btd", h, p["wf2"], precision="highest") + p["bf2"][0]
    return _layernorm(o2 + f, p["g3"], p["be3"])


if __name__ == "__main__":
    key = jax.random.PRNGKey(0)
    kx, kp = jax.random.split(key)
    keys = list(jax.random.split(kp, 16))
    ki = iter(keys)

    def lin(k, fan_in, fan_out):
        kw, kb = jax.random.split(k)
        w = jax.random.normal(kw, (fan_in, fan_out), jnp.float32) / np.sqrt(fan_in)
        b = jax.random.normal(kb, (1, fan_out), jnp.float32) * 0.02
        return w, b

    p = {}
    for i in (1, 2):
        p[f"wq{i}"], p[f"bq{i}"] = lin(next(ki), N_EMBED, N_EMBED)
        p[f"wk{i}"], p[f"bk{i}"] = lin(next(ki), N_EMBED, N_EMBED)
        p[f"wv{i}"], p[f"bv{i}"] = lin(next(ki), N_EMBED, N_EMBED)
        p[f"wo{i}"], p[f"bo{i}"] = lin(next(ki), N_EMBED, N_EMBED)
        p[f"g{i}"] = jnp.ones((1, N_EMBED), jnp.float32)   # nn.LayerNorm default
        p[f"be{i}"] = jnp.zeros((1, N_EMBED), jnp.float32)
    p["wf1"], p["bf1"] = lin(next(ki), N_EMBED, FFN_HIDDEN)
    p["wf2"], p["bf2"] = lin(next(ki), FFN_HIDDEN, N_EMBED)
    p["g3"] = jnp.ones((1, N_EMBED), jnp.float32)
    p["be3"] = jnp.zeros((1, N_EMBED), jnp.float32)

    x = jax.random.normal(kx, (BATCH, SEQ, N_EMBED), jnp.float32)

    out = jax.block_until_ready(decode_layer(x, p))
    ref = jax.block_until_ready(_decode_layer_ref(x, p))

    np.testing.assert_allclose(np.asarray(out), np.asarray(ref), rtol=2e-3, atol=2e-3)
    print("KERNEL_OK")
</pallas_src>

<mosaic_0001>
module attributes {stable_mosaic.version = 11 : i64} {
  func.func @decode_layer_kernel(%arg0: i32, %arg1: memref<2x16x128xf32, #tpu.memory_space<vmem>>, %arg2: memref<16x128xf32, #tpu.memory_space<vmem>>, %arg3: memref<8x128x128xf32, #tpu.memory_space<vmem>>, %arg4: memref<129x512xf32, #tpu.memory_space<vmem>>, %arg5: memref<512x128xf32, #tpu.memory_space<vmem>>, %arg6: memref<2x16x128xf32, #tpu.memory_space<vmem>>) attributes {dimension_semantics = [#tpu.dimension_semantics<parallel>], iteration_bounds = array<i64: 1>, scalar_prefetch = 0 : i64, scratch_operands = 0 : i64, tpu.core_type = #tpu.core_type<tc>, window_params = [{transform_indices = @transform_0, window_bounds = array<i64: 2, 16, 128>}, {pipeline_mode = #tpu.pipeline_mode<synchronous>, transform_indices = @transform_1, window_bounds = array<i64: 16, 128>}, {pipeline_mode = #tpu.pipeline_mode<synchronous>, transform_indices = @transform_2, window_bounds = array<i64: 8, 128, 128>}, {pipeline_mode = #tpu.pipeline_mode<synchronous>, transform_indices = @transform_3, window_bounds = array<i64: 129, 512>}, {pipeline_mode = #tpu.pipeline_mode<synchronous>, transform_indices = @transform_4, window_bounds = array<i64: 512, 128>}, {transform_indices = @transform_5, window_bounds = array<i64: 2, 16, 128>}]} {
    %c0 = arith.constant 0 : index
    %c0_0 = arith.constant 0 : index
    %c0_1 = arith.constant 0 : index
    %0 = vector.load %arg1[%c0, %c0_0, %c0_1] : memref<2x16x128xf32, #tpu.memory_space<vmem>>, vector<2x16x128xf32>
    %1 = vector.shape_cast %0 : vector<2x16x128xf32> to vector<32x128xf32>
    %c0_2 = arith.constant 0 : index
    %c0_3 = arith.constant 0 : index
    %2 = vector.load %arg2[%c0_2, %c0_3] : memref<16x128xf32, #tpu.memory_space<vmem>>, vector<16x128xf32>
    %3 = vector.extract_strided_slice %2 {offsets = [0, 0], sizes = [1, 128], strides = [1, 1]} : vector<16x128xf32> to vector<1x128xf32>
    %4 = vector.extract_strided_slice %2 {offsets = [1, 0], sizes = [1, 128], strides = [1, 1]} : vector<16x128xf32> to vector<1x128xf32>
    %5 = vector.extract_strided_slice %2 {offsets = [2, 0], sizes = [1, 128], strides = [1, 1]} : vector<16x128xf32> to vector<1x128xf32>
    %6 = vector.extract_strided_slice %2 {offsets = [3, 0], sizes = [1, 128], strides = [1, 1]} : vector<16x128xf32> to vector<1x128xf32>
    %7 = vector.extract_strided_slice %2 {offsets = [4, 0], sizes = [1, 128], strides = [1, 1]} : vector<16x128xf32> to vector<1x128xf32>
    %8 = vector.extract_strided_slice %2 {offsets = [5, 0], sizes = [1, 128], strides = [1, 1]} : vector<16x128xf32> to vector<1x128xf32>
    %9 = vector.extract_strided_slice %2 {offsets = [6, 0], sizes = [1, 128], strides = [1, 1]} : vector<16x128xf32> to vector<1x128xf32>
    %10 = vector.extract_strided_slice %2 {offsets = [7, 0], sizes = [1, 128], strides = [1, 1]} : vector<16x128xf32> to vector<1x128xf32>
    %11 = vector.extract_strided_slice %2 {offsets = [8, 0], sizes = [1, 128], strides = [1, 1]} : vector<16x128xf32> to vector<1x128xf32>
    %12 = vector.extract_strided_slice %2 {offsets = [9, 0], sizes = [1, 128], strides = [1, 1]} : vector<16x128xf32> to vector<1x128xf32>
    %13 = vector.extract_strided_slice %2 {offsets = [10, 0], sizes = [1, 128], strides = [1, 1]} : vector<16x128xf32> to vector<1x128xf32>
    %14 = vector.extract_strided_slice %2 {offsets = [11, 0], sizes = [1, 128], strides = [1, 1]} : vector<16x128xf32> to vector<1x128xf32>
    %15 = vector.extract_strided_slice %2 {offsets = [12, 0], sizes = [1, 128], strides = [1, 1]} : vector<16x128xf32> to vector<1x128xf32>
    %16 = vector.extract_strided_slice %2 {offsets = [13, 0], sizes = [1, 128], strides = [1, 1]} : vector<16x128xf32> to vector<1x128xf32>
    %17 = vector.extract_strided_slice %2 {offsets = [14, 0], sizes = [1, 128], strides = [1, 1]} : vector<16x128xf32> to vector<1x128xf32>
    %18 = tpu.iota {dimensions = array<i32: 0>} : vector<32x32xi32>
    %19 = tpu.iota {dimensions = array<i32: 1>} : vector<32x32xi32>
    %c4_i32 = arith.constant 4 : i32
    %20 = vector.broadcast %c4_i32 : i32 to vector<32x32xi32>
    %21 = arith.shrsi %18, %20 : vector<32x32xi32>
    %c4_i32_4 = arith.constant 4 : i32
    %22 = vector.broadcast %c4_i32_4 : i32 to vector<32x32xi32>
    %23 = arith.shrsi %19, %22 : vector<32x32xi32>
    %24 = arith.cmpi eq, %21, %23 : vector<32x32xi32>
    %c15_i32 = arith.constant 15 : i32
    %25 = vector.broadcast %c15_i32 : i32 to vector<32x32xi32>
    %26 = arith.andi %18, %25 : vector<32x32xi32>
    %c15_i32_5 = arith.constant 15 : i32
    %27 = vector.broadcast %c15_i32_5 : i32 to vector<32x32xi32>
    %28 = arith.andi %19, %27 : vector<32x32xi32>
    %29 = arith.cmpi sge, %26, %28 : vector<32x32xi32>
    %30 = arith.andi %24, %29 : vector<32x32xi1>
    %31 = tpu.iota {dimensions = array<i32: 0>} : vector<32x128xi32>
    %c15_i32_6 = arith.constant 15 : i32
    %32 = vector.broadcast %c15_i32_6 : i32 to vector<32x128xi32>
    %33 = arith.andi %31, %32 : vector<32x128xi32>
    %34 = arith.sitofp %33 : vector<32x128xi32> to vector<32x128xf32>
    %35 = math.cos %34 : vector<32x128xf32>
    %36 = math.sin %34 : vector<32x128xf32>
    %37 = tpu.iota {dimensions = array<i32: 0>} : vector<128x128xi32>
    %38 = tpu.iota {dimensions = array<i32: 1>} : vector<128x128xi32>
    %c1_i32 = arith.constant 1 : i32
    %39 = vector.broadcast %c1_i32 : i32 to vector<128x128xi32>
    %40 = arith.andi %37, %39 : vector<128x128xi32>
    %c0_i32 = arith.constant 0 : i32
    %41 = vector.broadcast %c0_i32 : i32 to vector<128x128xi32>
    %42 = arith.cmpi eq, %40, %41 : vector<128x128xi32>
    %c1_i32_7 = arith.constant 1 : i32
    %43 = vector.broadcast %c1_i32_7 : i32 to vector<128x128xi32>
    %44 = arith.addi %37, %43 : vector<128x128xi32>
    %45 = arith.cmpi eq, %38, %44 : vector<128x128xi32>
    %46 = arith.andi %45, %42 : vector<128x128xi1>
    %c1_i32_8 = arith.constant 1 : i32
    %47 = vector.broadcast %c1_i32_8 : i32 to vector<128x128xi32>
    %48 = arith.subi %37, %47 : vector<128x128xi32>
    %49 = arith.cmpi eq, %38, %48 : vector<128x128xi32>
    %cst = arith.constant dense<true> : vector<128x128xi1>
    %50 = arith.xori %42, %cst : vector<128x128xi1>
    %51 = arith.andi %49, %50 : vector<128x128xi1>
    %cst_9 = arith.constant -1.000000e+00 : f32
    %cst_10 = arith.constant 0.000000e+00 : f32
    %52 = vector.broadcast %cst_9 : f32 to vector<128x128xf32>
    %53 = vector.broadcast %cst_10 : f32 to vector<128x128xf32>
    %54 = arith.select %51, %52, %53 : vector<128x128xi1>, vector<128x128xf32>
    %cst_11 = arith.constant 1.000000e+00 : f32
    %55 = vector.broadcast %cst_11 : f32 to vector<128x128xf32>
    %56 = arith.select %46, %55, %54 : vector<128x128xi1>, vector<128x128xf32>
    %c0_12 = arith.constant 0 : index
    %c0_13 = arith.constant 0 : index
    %c0_14 = arith.constant 0 : index
    %57 = vector.load %arg3[%c0_12, %c0_13, %c0_14] : memref<8x128x128xf32, #tpu.memory_space<vmem>>, vector<1x128x128xf32>
    %58 = vector.shape_cast %57 : vector<1x128x128xf32> to vector<128x128xf32>
    %c1 = arith.constant 1 : index
    %c0_15 = arith.constant 0 : index
    %c0_16 = arith.constant 0 : index
    %59 = vector.load %arg3[%c1, %c0_15, %c0_16] : memref<8x128x128xf32, #tpu.memory_space<vmem>>, vector<1x128x128xf32>
    %60 = vector.shape_cast %59 : vector<1x128x128xf32> to vector<128x128xf32>
    %c2 = arith.constant 2 : index
    %c0_17 = arith.constant 0 : index
    %c0_18 = arith.constant 0 : index
    %61 = vector.load %arg3[%c2, %c0_17, %c0_18] : memref<8x128x128xf32, #tpu.memory_space<vmem>>, vector<1x128x128xf32>
    %62 = vector.shape_cast %61 : vector<1x128x128xf32> to vector<128x128xf32>
    %c3 = arith.constant 3 : index
    %c0_19 = arith.constant 0 : index
    %c0_20 = arith.constant 0 : index
    %63 = vector.load %arg3[%c3, %c0_19, %c0_20] : memref<8x128x128xf32, #tpu.memory_space<vmem>>, vector<1x128x128xf32>
    %64 = vector.shape_cast %63 : vector<1x128x128xf32> to vector<128x128xf32>
    %cst_21 = arith.constant dense<0.000000e+00> : vector<32x128xf32>
    %65 = tpu.matmul %1, %58, %cst_21 {dimension_numbers = #tpu.dot_dimension_numbers<[1], [0], [0], [1], [0, 0, 1, 1], [], []>} : vector<32x128xf32>, vector<128x128xf32>, vector<32x128xf32> -> vector<32x128xf32>
    %66 = vector.broadcast %3 : vector<1x128xf32> to vector<32x128xf32>
    %67 = arith.addf %65, %66 : vector<32x128xf32>
    %cst_22 = arith.constant dense<0.000000e+00> : vector<32x128xf32>
    %68 = tpu.matmul %67, %56, %cst_22 {dimension_numbers = #tpu.dot_dimension_numbers<[1], [0], [0], [1], [0, 0, 1, 1], [], []>} : vector<32x128xf32>, vector<128x128xf32>, vector<32x128xf32> -> vector<32x128xf32>
    %69 = arith.mulf %67, %35 : vector<32x128xf32>
    %70 = arith.mulf %68, %36 : vector<32x128xf32>
    %71 = arith.addf %69, %70 : vector<32x128xf32>
    %cst_23 = arith.constant dense<0.000000e+00> : vector<32x128xf32>
    %72 = tpu.matmul %1, %60, %cst_23 {dimension_numbers = #tpu.dot_dimension_numbers<[1], [0], [0], [1], [0, 0, 1, 1], [], []>} : vector<32x128xf32>, vector<128x128xf32>, vector<32x128xf32> -> vector<32x128xf32>
    %73 = vector.broadcast %4 : vector<1x128xf32> to vector<32x128xf32>
    %74 = arith.addf %72, %73 : vector<32x128xf32>
    %cst_24 = arith.constant dense<0.000000e+00> : vector<32x128xf32>
    %75 = tpu.matmul %74, %56, %cst_24 {dimension_numbers = #tpu.dot_dimension_numbers<[1], [0], [0], [1], [0, 0, 1, 1], [], []>} : vector<32x128xf32>, vector<128x128xf32>, vector<32x128xf32> -> vector<32x128xf32>
    %76 = arith.mulf %74, %35 : vector<32x128xf32>
    %77 = arith.mulf %75, %36 : vector<32x128xf32>
    %78 = arith.addf %76, %77 : vector<32x128xf32>
    %cst_25 = arith.constant dense<0.000000e+00> : vector<32x128xf32>
    %79 = tpu.matmul %1, %62, %cst_25 {dimension_numbers = #tpu.dot_dimension_numbers<[1], [0], [0], [1], [0, 0, 1, 1], [], []>} : vector<32x128xf32>, vector<128x128xf32>, vector<32x128xf32> -> vector<32x128xf32>
    %80 = vector.broadcast %5 : vector<1x128xf32> to vector<32x128xf32>
    %81 = arith.addf %79, %80 : vector<32x128xf32>
    %82 = vector.extract_strided_slice %71 {offsets = [0, 0], sizes = [32, 32], strides = [1, 1]} : vector<32x128xf32> to vector<32x32xf32>
    %83 = vector.extract_strided_slice %78 {offsets = [0, 0], sizes = [32, 32], strides = [1, 1]} : vector<32x128xf32> to vector<32x32xf32>
    %cst_26 = arith.constant dense<0.000000e+00> : vector<32x32xf32>
    %84 = tpu.matmul %82, %83, %cst_26 {dimension_numbers = #tpu.dot_dimension_numbers<[1], [1], [0], [0], [0, 0, 1, 0], [], []>} : vector<32x32xf32>, vector<32x32xf32>, vector<32x32xf32> -> vector<32x32xf32>
    %cst_27 = arith.constant 0.0883883461 : f32
    %85 = vector.broadcast %cst_27 : f32 to vector<32x32xf32>
    %86 = arith.mulf %84, %85 : vector<32x32xf32>
    %cst_28 = arith.constant -1.000000e+30 : f32
    %87 = vector.broadcast %cst_28 : f32 to vector<32x32xf32>
    %88 = arith.select %30, %86, %87 : vector<32x32xi1>, vector<32x32xf32>
    %cst_29 = arith.constant dense<0xFF800000> : vector<32xf32>
    %89 = vector.multi_reduction <maximumf>, %88, %cst_29 [1] : vector<32x32xf32> to vector<32xf32>
    %90 = vector.shape_cast %89 : vector<32xf32> to vector<32x1xf32>
    %91 = vector.broadcast %90 : vector<32x1xf32> to vector<32x32xf32>
    %92 = arith.subf %88, %91 : vector<32x32xf32>
    %93 = math.exp %92 : vector<32x32xf32>
    %cst_30 = arith.constant dense<0.000000e+00> : vector<32xf32>
    %94 = vector.multi_reduction <add>, %93, %cst_30 [1] : vector<32x32xf32> to vector<32xf32>
    %95 = vector.shape_cast %94 : vector<32xf32> to vector<32x1xf32>
    %96 = tpu.reciprocal %95 : vector<32x1xf32> -> vector<32x1xf32>
    %97 = vector.broadcast %96 : vector<32x1xf32> to vector<32x32xf32>
    %98 = arith.mulf %93, %97 : vector<32x32xf32>
    %99 = vector.extract_strided_slice %81 {offsets = [0, 0], sizes = [32, 32], strides = [1, 1]} : vector<32x128xf32> to vector<32x32xf32>
    %cst_31 = arith.constant dense<0.000000e+00> : vector<32x32xf32>
    %100 = tpu.matmul %98, %99, %cst_31 {dimension_numbers = #tpu.dot_dimension_numbers<[1], [0], [0], [1], [0, 0, 1, 1], [], []>} : vector<32x32xf32>, vector<32x32xf32>, vector<32x32xf32> -> vector<32x32xf32>
    %101 = vector.extract_strided_slice %71 {offsets = [0, 32], sizes = [32, 32], strides = [1, 1]} : vector<32x128xf32> to vector<32x32xf32>
    %102 = vector.extract_strided_slice %78 {offsets = [0, 32], sizes = [32, 32], strides = [1, 1]} : vector<32x128xf32> to vector<32x32xf32>
    %cst_32 = arith.constant dense<0.000000e+00> : vector<32x32xf32>
    %103 = tpu.matmul %101, %102, %cst_32 {dimension_numbers = #tpu.dot_dimension_numbers<[1], [1], [0], [0], [0, 0, 1, 0], [], []>} : vector<32x32xf32>, vector<32x32xf32>, vector<32x32xf32> -> vector<32x32xf32>
    %cst_33 = arith.constant 0.0883883461 : f32
    %104 = vector.broadcast %cst_33 : f32 to vector<32x32xf32>
    %105 = arith.mulf %103, %104 : vector<32x32xf32>
    %cst_34 = arith.constant -1.000000e+30 : f32
    %106 = vector.broadcast %cst_34 : f32 to vector<32x32xf32>
    %107 = arith.select %30, %105, %106 : vector<32x32xi1>, vector<32x32xf32>
    %cst_35 = arith.constant dense<0xFF800000> : vector<32xf32>
    %108 = vector.multi_reduction <maximumf>, %107, %cst_35 [1] : vector<32x32xf32> to vector<32xf32>
    %109 = vector.shape_cast %108 : vector<32xf32> to vector<32x1xf32>
    %110 = vector.broadcast %109 : vector<32x1xf32> to vector<32x32xf32>
    %111 = arith.subf %107, %110 : vector<32x32xf32>
    %112 = math.exp %111 : vector<32x32xf32>
    %cst_36 = arith.constant dense<0.000000e+00> : vector<32xf32>
    %113 = vector.multi_reduction <add>, %112, %cst_36 [1] : vector<32x32xf32> to vector<32xf32>
    %114 = vector.shape_cast %113 : vector<32xf32> to vector<32x1xf32>
    %115 = tpu.reciprocal %114 : vector<32x1xf32> -> vector<32x1xf32>
    %116 = vector.broadcast %115 : vector<32x1xf32> to vector<32x32xf32>
    %117 = arith.mulf %112, %116 : vector<32x32xf32>
    %118 = vector.extract_strided_slice %81 {offsets = [0, 32], sizes = [32, 32], strides = [1, 1]} : vector<32x128xf32> to vector<32x32xf32>
    %cst_37 = arith.constant dense<0.000000e+00> : vector<32x32xf32>
    %119 = tpu.matmul %117, %118, %cst_37 {dimension_numbers = #tpu.dot_dimension_numbers<[1], [0], [0], [1], [0, 0, 1, 1], [], []>} : vector<32x32xf32>, vector<32x32xf32>, vector<32x32xf32> -> vector<32x32xf32>
    %120 = vector.extract_strided_slice %71 {offsets = [0, 64], sizes = [32, 32], strides = [1, 1]} : vector<32x128xf32> to vector<32x32xf32>
    %121 = vector.extract_strided_slice %78 {offsets = [0, 64], sizes = [32, 32], strides = [1, 1]} : vector<32x128xf32> to vector<32x32xf32>
    %cst_38 = arith.constant dense<0.000000e+00> : vector<32x32xf32>
    %122 = tpu.matmul %120, %121, %cst_38 {dimension_numbers = #tpu.dot_dimension_numbers<[1], [1], [0], [0], [0, 0, 1, 0], [], []>} : vector<32x32xf32>, vector<32x32xf32>, vector<32x32xf32> -> vector<32x32xf32>
    %cst_39 = arith.constant 0.0883883461 : f32
    %123 = vector.broadcast %cst_39 : f32 to vector<32x32xf32>
    %124 = arith.mulf %122, %123 : vector<32x32xf32>
    %cst_40 = arith.constant -1.000000e+30 : f32
    %125 = vector.broadcast %cst_40 : f32 to vector<32x32xf32>
    %126 = arith.select %30, %124, %125 : vector<32x32xi1>, vector<32x32xf32>
    %cst_41 = arith.constant dense<0xFF800000> : vector<32xf32>
    %127 = vector.multi_reduction <maximumf>, %126, %cst_41 [1] : vector<32x32xf32> to vector<32xf32>
    %128 = vector.shape_cast %127 : vector<32xf32> to vector<32x1xf32>
    %129 = vector.broadcast %128 : vector<32x1xf32> to vector<32x32xf32>
    %130 = arith.subf %126, %129 : vector<32x32xf32>
    %131 = math.exp %130 : vector<32x32xf32>
    %cst_42 = arith.constant dense<0.000000e+00> : vector<32xf32>
    %132 = vector.multi_reduction <add>, %131, %cst_42 [1] : vector<32x32xf32> to vector<32xf32>
    %133 = vector.shape_cast %132 : vector<32xf32> to vector<32x1xf32>
    %134 = tpu.reciprocal %133 : vector<32x1xf32> -> vector<32x1xf32>
    %135 = vector.broadcast %134 : vector<32x1xf32> to vector<32x32xf32>
    %136 = arith.mulf %131, %135 : vector<32x32xf32>
    %137 = vector.extract_strided_slice %81 {offsets = [0, 64], sizes = [32, 32], strides = [1, 1]} : vector<32x128xf32> to vector<32x32xf32>
    %cst_43 = arith.constant dense<0.000000e+00> : vector<32x32xf32>
    %138 = tpu.matmul %136, %137, %cst_43 {dimension_numbers = #tpu.dot_dimension_numbers<[1], [0], [0], [1], [0, 0, 1, 1], [], []>} : vector<32x32xf32>, vector<32x32xf32>, vector<32x32xf32> -> vector<32x32xf32>
    %139 = vector.extract_strided_slice %71 {offsets = [0, 96], sizes = [32, 32], strides = [1, 1]} : vector<32x128xf32> to vector<32x32xf32>
    %140 = vector.extract_strided_slice %78 {offsets = [0, 96], sizes = [32, 32], strides = [1, 1]} : vector<32x128xf32> to vector<32x32xf32>
    %cst_44 = arith.constant dense<0.000000e+00> : vector<32x32xf32>
    %141 = tpu.matmul %139, %140, %cst_44 {dimension_numbers = #tpu.dot_dimension_numbers<[1], [1], [0], [0], [0, 0, 1, 0], [], []>} : vector<32x32xf32>, vector<32x32xf32>, vector<32x32xf32> -> vector<32x32xf32>
    %cst_45 = arith.constant 0.0883883461 : f32
    %142 = vector.broadcast %cst_45 : f32 to vector<32x32xf32>
    %143 = arith.mulf %141, %142 : vector<32x32xf32>
    %cst_46 = arith.constant -1.000000e+30 : f32
    %144 = vector.broadcast %cst_46 : f32 to vector<32x32xf32>
    %145 = arith.select %30, %143, %144 : vector<32x32xi1>, vector<32x32xf32>
    %cst_47 = arith.constant dense<0xFF800000> : vector<32xf32>
    %146 = vector.multi_reduction <maximumf>, %145, %cst_47 [1] : vector<32x32xf32> to vector<32xf32>
    %147 = vector.shape_cast %146 : vector<32xf32> to vector<32x1xf32>
    %148 = vector.broadcast %147 : vector<32x1xf32> to vector<32x32xf32>
    %149 = arith.subf %145, %148 : vector<32x32xf32>
    %150 = math.exp %149 : vector<32x32xf32>
    %cst_48 = arith.constant dense<0.000000e+00> : vector<32xf32>
    %151 = vector.multi_reduction <add>, %150, %cst_48 [1] : vector<32x32xf32> to vector<32xf32>
    %152 = vector.shape_cast %151 : vector<32xf32> to vector<32x1xf32>
    %153 = tpu.reciprocal %152 : vector<32x1xf32> -> vector<32x1xf32>
    %154 = vector.broadcast %153 : vector<32x1xf32> to vector<32x32xf32>
    %155 = arith.mulf %150, %154 : vector<32x32xf32>
    %156 = vector.extract_strided_slice %81 {offsets = [0, 96], sizes = [32, 32], strides = [1, 1]} : vector<32x128xf32> to vector<32x32xf32>
    %cst_49 = arith.constant dense<0.000000e+00> : vector<32x32xf32>
    %157 = tpu.matmul %155, %156, %cst_49 {dimension_numbers = #tpu.dot_dimension_numbers<[1], [0], [0], [1], [0, 0, 1, 1], [], []>} : vector<32x32xf32>, vector<32x32xf32>, vector<32x32xf32> -> vector<32x32xf32>
    %158 = tpu.concatenate %100, %119, %138, %157 in 1 : vector<32x32xf32>, vector<32x32xf32>, vector<32x32xf32>, vector<32x32xf32> -> vector<32x128xf32>
    %cst_50 = arith.constant dense<0.000000e+00> : vector<32x128xf32>
    %159 = tpu.matmul %158, %64, %cst_50 {dimension_numbers = #tpu.dot_dimension_numbers<[1], [0], [0], [1], [0, 0, 1, 1], [], []>} : vector<32x128xf32>, vector<128x128xf32>, vector<32x128xf32> -> vector<32x128xf32>
    %160 = vector.broadcast %6 : vector<1x128xf32> to vector<32x128xf32>
    %161 = arith.addf %159, %160 : vector<32x128xf32>
    %162 = arith.addf %1, %161 : vector<32x128xf32>
    %cst_51 = arith.constant dense<0.000000e+00> : vector<32xf32>
    %163 = vector.multi_reduction <add>, %162, %cst_51 [1] : vector<32x128xf32> to vector<32xf32>
    %164 = vector.shape_cast %163 : vector<32xf32> to vector<32x1xf32>
    %cst_52 = arith.constant 1.280000e+02 : f32
    %165 = vector.broadcast %cst_52 : f32 to vector<32x1xf32>
    %166 = arith.divf %164, %165 : vector<32x1xf32>
    %167 = vector.broadcast %166 : vector<32x1xf32> to vector<32x128xf32>
    %168 = arith.subf %162, %167 : vector<32x128xf32>
    %169 = arith.mulf %168, %168 : vector<32x128xf32>
    %cst_53 = arith.constant dense<0.000000e+00> : vector<32xf32>
    %170 = vector.multi_reduction <add>, %169, %cst_53 [1] : vector<32x128xf32> to vector<32xf32>
    %171 = vector.shape_cast %170 : vector<32xf32> to vector<32x1xf32>
    %cst_54 = arith.constant 1.280000e+02 : f32
    %172 = vector.broadcast %cst_54 : f32 to vector<32x1xf32>
    %173 = arith.divf %171, %172 : vector<32x1xf32>
    %174 = vector.broadcast %166 : vector<32x1xf32> to vector<32x128xf32>
    %175 = arith.subf %162, %174 : vector<32x128xf32>
    %cst_55 = arith.constant 9.99999974E-6 : f32
    %176 = vector.broadcast %cst_55 : f32 to vector<32x1xf32>
    %177 = arith.addf %173, %176 : vector<32x1xf32>
    %178 = math.rsqrt %177 : vector<32x1xf32>
    %179 = vector.broadcast %178 : vector<32x1xf32> to vector<32x128xf32>
    %180 = arith.mulf %175, %179 : vector<32x128xf32>
    %181 = vector.broadcast %7 : vector<1x128xf32> to vector<32x128xf32>
    %182 = arith.mulf %180, %181 : vector<32x128xf32>
    %183 = vector.broadcast %8 : vector<1x128xf32> to vector<32x128xf32>
    %184 = arith.addf %182, %183 : vector<32x128xf32>
    %c4 = arith.constant 4 : index
    %c0_56 = arith.constant 0 : index
    %c0_57 = arith.constant 0 : index
    %185 = vector.load %arg3[%c4, %c0_56, %c0_57] : memref<8x128x128xf32, #tpu.memory_space<vmem>>, vector<1x128x128xf32>
    %186 = vector.shape_cast %185 : vector<1x128x128xf32> to vector<128x128xf32>
    %c5 = arith.constant 5 : index
    %c0_58 = arith.constant 0 : index
    %c0_59 = arith.constant 0 : index
    %187 = vector.load %arg3[%c5, %c0_58, %c0_59] : memref<8x128x128xf32, #tpu.memory_space<vmem>>, vector<1x128x128xf32>
    %188 = vector.shape_cast %187 : vector<1x128x128xf32> to vector<128x128xf32>
    %c6 = arith.constant 6 : index
    %c0_60 = arith.constant 0 : index
    %c0_61 = arith.constant 0 : index
    %189 = vector.load %arg3[%c6, %c0_60, %c0_61] : memref<8x128x128xf32, #tpu.memory_space<vmem>>, vector<1x128x128xf32>
    %190 = vector.shape_cast %189 : vector<1x128x128xf32> to vector<128x128xf32>
    %c7 = arith.constant 7 : index
    %c0_62 = arith.constant 0 : index
    %c0_63 = arith.constant 0 : index
    %191 = vector.load %arg3[%c7, %c0_62, %c0_63] : memref<8x128x128xf32, #tpu.memory_space<vmem>>, vector<1x128x128xf32>
    %192 = vector.shape_cast %191 : vector<1x128x128xf32> to vector<128x128xf32>
    %cst_64 = arith.constant dense<0.000000e+00> : vector<32x128xf32>
    %193 = tpu.matmul %184, %186, %cst_64 {dimension_numbers = #tpu.dot_dimension_numbers<[1], [0], [0], [1], [0, 0, 1, 1], [], []>} : vector<32x128xf32>, vector<128x128xf32>, vector<32x128xf32> -> vector<32x128xf32>
    %194 = vector.broadcast %9 : vector<1x128xf32> to vector<32x128xf32>
    %195 = arith.addf %193, %194 : vector<32x128xf32>
    %cst_65 = arith.constant dense<0.000000e+00> : vector<32x128xf32>
    %196 = tpu.matmul %195, %56, %cst_65 {dimension_numbers = #tpu.dot_dimension_numbers<[1], [0], [0], [1], [0, 0, 1, 1], [], []>} : vector<32x128xf32>, vector<128x128xf32>, vector<32x128xf32> -> vector<32x128xf32>
    %197 = arith.mulf %195, %35 : vector<32x128xf32>
    %198 = arith.mulf %196, %36 : vector<32x128xf32>
    %199 = arith.addf %197, %198 : vector<32x128xf32>
    %cst_66 = arith.constant dense<0.000000e+00> : vector<32x128xf32>
    %200 = tpu.matmul %184, %188, %cst_66 {dimension_numbers = #tpu.dot_dimension_numbers<[1], [0], [0], [1], [0, 0, 1, 1], [], []>} : vector<32x128xf32>, vector<128x128xf32>, vector<32x128xf32> -> vector<32x128xf32>
    %201 = vector.broadcast %10 : vector<1x128xf32> to vector<32x128xf32>
    %202 = arith.addf %200, %201 : vector<32x128xf32>
    %cst_67 = arith.constant dense<0.000000e+00> : vector<32x128xf32>
    %203 = tpu.matmul %202, %56, %cst_67 {dimension_numbers = #tpu.dot_dimension_numbers<[1], [0], [0], [1], [0, 0, 1, 1], [], []>} : vector<32x128xf32>, vector<128x128xf32>, vector<32x128xf32> -> vector<32x128xf32>
    %204 = arith.mulf %202, %35 : vector<32x128xf32>
    %205 = arith.mulf %203, %36 : vector<32x128xf32>
    %206 = arith.addf %204, %205 : vector<32x128xf32>
    %cst_68 = arith.constant dense<0.000000e+00> : vector<32x128xf32>
    %207 = tpu.matmul %184, %190, %cst_68 {dimension_numbers = #tpu.dot_dimension_numbers<[1], [0], [0], [1], [0, 0, 1, 1], [], []>} : vector<32x128xf32>, vector<128x128xf32>, vector<32x128xf32> -> vector<32x128xf32>
    %208 = vector.broadcast %11 : vector<1x128xf32> to vector<32x128xf32>
    %209 = arith.addf %207, %208 : vector<32x128xf32>
    %210 = vector.extract_strided_slice %199 {offsets = [0, 0], sizes = [32, 32], strides = [1, 1]} : vector<32x128xf32> to vector<32x32xf32>
    %211 = vector.extract_strided_slice %206 {offsets = [0, 0], sizes = [32, 32], strides = [1, 1]} : vector<32x128xf32> to vector<32x32xf32>
    %cst_69 = arith.constant dense<0.000000e+00> : vector<32x32xf32>
    %212 = tpu.matmul %210, %211, %cst_69 {dimension_numbers = #tpu.dot_dimension_numbers<[1], [1], [0], [0], [0, 0, 1, 0], [], []>} : vector<32x32xf32>, vector<32x32xf32>, vector<32x32xf32> -> vector<32x32xf32>
    %cst_70 = arith.constant 0.0883883461 : f32
    %213 = vector.broadcast %cst_70 : f32 to vector<32x32xf32>
    %214 = arith.mulf %212, %213 : vector<32x32xf32>
    %cst_71 = arith.constant -1.000000e+30 : f32
    %215 = vector.broadcast %cst_71 : f32 to vector<32x32xf32>
    %216 = arith.select %30, %214, %215 : vector<32x32xi1>, vector<32x32xf32>
    %cst_72 = arith.constant dense<0xFF800000> : vector<32xf32>
    %217 = vector.multi_reduction <maximumf>, %216, %cst_72 [1] : vector<32x32xf32> to vector<32xf32>
    %218 = vector.shape_cast %217 : vector<32xf32> to vector<32x1xf32>
    %219 = vector.broadcast %218 : vector<32x1xf32> to vector<32x32xf32>
    %220 = arith.subf %216, %219 : vector<32x32xf32>
    %221 = math.exp %220 : vector<32x32xf32>
    %cst_73 = arith.constant dense<0.000000e+00> : vector<32xf32>
    %222 = vector.multi_reduction <add>, %221, %cst_73 [1] : vector<32x32xf32> to vector<32xf32>
    %223 = vector.shape_cast %222 : vector<32xf32> to vector<32x1xf32>
    %224 = tpu.reciprocal %223 : vector<32x1xf32> -> vector<32x1xf32>
    %225 = vector.broadcast %224 : vector<32x1xf32> to vector<32x32xf32>
    %226 = arith.mulf %221, %225 : vector<32x32xf32>
    %227 = vector.extract_strided_slice %209 {offsets = [0, 0], sizes = [32, 32], strides = [1, 1]} : vector<32x128xf32> to vector<32x32xf32>
    %cst_74 = arith.constant dense<0.000000e+00> : vector<32x32xf32>
    %228 = tpu.matmul %226, %227, %cst_74 {dimension_numbers = #tpu.dot_dimension_numbers<[1], [0], [0], [1], [0, 0, 1, 1], [], []>} : vector<32x32xf32>, vector<32x32xf32>, vector<32x32xf32> -> vector<32x32xf32>
    %229 = vector.extract_strided_slice %199 {offsets = [0, 32], sizes = [32, 32], strides = [1, 1]} : vector<32x128xf32> to vector<32x32xf32>
    %230 = vector.extract_strided_slice %206 {offsets = [0, 32], sizes = [32, 32], strides = [1, 1]} : vector<32x128xf32> to vector<32x32xf32>
    %cst_75 = arith.constant dense<0.000000e+00> : vector<32x32xf32>
    %231 = tpu.matmul %229, %230, %cst_75 {dimension_numbers = #tpu.dot_dimension_numbers<[1], [1], [0], [0], [0, 0, 1, 0], [], []>} : vector<32x32xf32>, vector<32x32xf32>, vector<32x32xf32> -> vector<32x32xf32>
    %cst_76 = arith.constant 0.0883883461 : f32
    %232 = vector.broadcast %cst_76 : f32 to vector<32x32xf32>
    %233 = arith.mulf %231, %232 : vector<32x32xf32>
    %cst_77 = arith.constant -1.000000e+30 : f32
    %234 = vector.broadcast %cst_77 : f32 to vector<32x32xf32>
    %235 = arith.select %30, %233, %234 : vector<32x32xi1>, vector<32x32xf32>
    %cst_78 = arith.constant dense<0xFF800000> : vector<32xf32>
    %236 = vector.multi_reduction <maximumf>, %235, %cst_78 [1] : vector<32x32xf32> to vector<32xf32>
    %237 = vector.shape_cast %236 : vector<32xf32> to vector<32x1xf32>
    %238 = vector.broadcast %237 : vector<32x1xf32> to vector<32x32xf32>
    %239 = arith.subf %235, %238 : vector<32x32xf32>
    %240 = math.exp %239 : vector<32x32xf32>
    %cst_79 = arith.constant dense<0.000000e+00> : vector<32xf32>
    %241 = vector.multi_reduction <add>, %240, %cst_79 [1] : vector<32x32xf32> to vector<32xf32>
    %242 = vector.shape_cast %241 : vector<32xf32> to vector<32x1xf32>
    %243 = tpu.reciprocal %242 : vector<32x1xf32> -> vector<32x1xf32>
    %244 = vector.broadcast %243 : vector<32x1xf32> to vector<32x32xf32>
    %245 = arith.mulf %240, %244 : vector<32x32xf32>
    %246 = vector.extract_strided_slice %209 {offsets = [0, 32], sizes = [32, 32], strides = [1, 1]} : vector<32x128xf32> to vector<32x32xf32>
    %cst_80 = arith.constant dense<0.000000e+00> : vector<32x32xf32>
    %247 = tpu.matmul %245, %246, %cst_80 {dimension_numbers = #tpu.dot_dimension_numbers<[1], [0], [0], [1], [0, 0, 1, 1], [], []>} : vector<32x32xf32>, vector<32x32xf32>, vector<32x32xf32> -> vector<32x32xf32>
    %248 = vector.extract_strided_slice %199 {offsets = [0, 64], sizes = [32, 32], strides = [1, 1]} : vector<32x128xf32> to vector<32x32xf32>
    %249 = vector.extract_strided_slice %206 {offsets = [0, 64], sizes = [32, 32], strides = [1, 1]} : vector<32x128xf32> to vector<32x32xf32>
    %cst_81 = arith.constant dense<0.000000e+00> : vector<32x32xf32>
    %250 = tpu.matmul %248, %249, %cst_81 {dimension_numbers = #tpu.dot_dimension_numbers<[1], [1], [0], [0], [0, 0, 1, 0], [], []>} : vector<32x32xf32>, vector<32x32xf32>, vector<32x32xf32> -> vector<32x32xf32>
    %cst_82 = arith.constant 0.0883883461 : f32
    %251 = vector.broadcast %cst_82 : f32 to vector<32x32xf32>
    %252 = arith.mulf %250, %251 : vector<32x32xf32>
    %cst_83 = arith.constant -1.000000e+30 : f32
    %253 = vector.broadcast %cst_83 : f32 to vector<32x32xf32>
    %254 = arith.select %30, %252, %253 : vector<32x32xi1>, vector<32x32xf32>
    %cst_84 = arith.constant dense<0xFF800000> : vector<32xf32>
    %255 = vector.multi_reduction <maximumf>, %254, %cst_84 [1] : vector<32x32xf32> to vector<32xf32>
    %256 = vector.shape_cast %255 : vector<32xf32> to vector<32x1xf32>
    %257 = vector.broadcast %256 : vector<32x1xf32> to vector<32x32xf32>
    %258 = arith.subf %254, %257 : vector<32x32xf32>
    %259 = math.exp %258 : vector<32x32xf32>
    %cst_85 = arith.constant dense<0.000000e+00> : vector<32xf32>
    %260 = vector.multi_reduction <add>, %259, %cst_85 [1] : vector<32x32xf32> to vector<32xf32>
    %261 = vector.shape_cast %260 : vector<32xf32> to vector<32x1xf32>
    %262 = tpu.reciprocal %261 : vector<32x1xf32> -> vector<32x1xf32>
    %263 = vector.broadcast %262 : vector<32x1xf32> to vector<32x32xf32>
    %264 = arith.mulf %259, %263 : vector<32x32xf32>
    %265 = vector.extract_strided_slice %209 {offsets = [0, 64], sizes = [32, 32], strides = [1, 1]} : vector<32x128xf32> to vector<32x32xf32>
    %cst_86 = arith.constant dense<0.000000e+00> : vector<32x32xf32>
    %266 = tpu.matmul %264, %265, %cst_86 {dimension_numbers = #tpu.dot_dimension_numbers<[1], [0], [0], [1], [0, 0, 1, 1], [], []>} : vector<32x32xf32>, vector<32x32xf32>, vector<32x32xf32> -> vector<32x32xf32>
    %267 = vector.extract_strided_slice %199 {offsets = [0, 96], sizes = [32, 32], strides = [1, 1]} : vector<32x128xf32> to vector<32x32xf32>
    %268 = vector.extract_strided_slice %206 {offsets = [0, 96], sizes = [32, 32], strides = [1, 1]} : vector<32x128xf32> to vector<32x32xf32>
    %cst_87 = arith.constant dense<0.000000e+00> : vector<32x32xf32>
    %269 = tpu.matmul %267, %268, %cst_87 {dimension_numbers = #tpu.dot_dimension_numbers<[1], [1], [0], [0], [0, 0, 1, 0], [], []>} : vector<32x32xf32>, vector<32x32xf32>, vector<32x32xf32> -> vector<32x32xf32>
    %cst_88 = arith.constant 0.0883883461 : f32
    %270 = vector.broadcast %cst_88 : f32 to vector<32x32xf32>
    %271 = arith.mulf %269, %270 : vector<32x32xf32>
    %cst_89 = arith.constant -1.000000e+30 : f32
    %272 = vector.broadcast %cst_89 : f32 to vector<32x32xf32>
    %273 = arith.select %30, %271, %272 : vector<32x32xi1>, vector<32x32xf32>
    %cst_90 = arith.constant dense<0xFF800000> : vector<32xf32>
    %274 = vector.multi_reduction <maximumf>, %273, %cst_90 [1] : vector<32x32xf32> to vector<32xf32>
    %275 = vector.shape_cast %274 : vector<32xf32> to vector<32x1xf32>
    %276 = vector.broadcast %275 : vector<32x1xf32> to vector<32x32xf32>
    %277 = arith.subf %273, %276 : vector<32x32xf32>
    %278 = math.exp %277 : vector<32x32xf32>
    %cst_91 = arith.constant dense<0.000000e+00> : vector<32xf32>
    %279 = vector.multi_reduction <add>, %278, %cst_91 [1] : vector<32x32xf32> to vector<32xf32>
    %280 = vector.shape_cast %279 : vector<32xf32> to vector<32x1xf32>
    %281 = tpu.reciprocal %280 : vector<32x1xf32> -> vector<32x1xf32>
    %282 = vector.broadcast %281 : vector<32x1xf32> to vector<32x32xf32>
    %283 = arith.mulf %278, %282 : vector<32x32xf32>
    %284 = vector.extract_strided_slice %209 {offsets = [0, 96], sizes = [32, 32], strides = [1, 1]} : vector<32x128xf32> to vector<32x32xf32>
    %cst_92 = arith.constant dense<0.000000e+00> : vector<32x32xf32>
    %285 = tpu.matmul %283, %284, %cst_92 {dimension_numbers = #tpu.dot_dimension_numbers<[1], [0], [0], [1], [0, 0, 1, 1], [], []>} : vector<32x32xf32>, vector<32x32xf32>, vector<32x32xf32> -> vector<32x32xf32>
    %286 = tpu.concatenate %228, %247, %266, %285 in 1 : vector<32x32xf32>, vector<32x32xf32>, vector<32x32xf32>, vector<32x32xf32> -> vector<32x128xf32>
    %cst_93 = arith.constant dense<0.000000e+00> : vector<32x128xf32>
    %287 = tpu.matmul %286, %192, %cst_93 {dimension_numbers = #tpu.dot_dimension_numbers<[1], [0], [0], [1], [0, 0, 1, 1], [], []>} : vector<32x128xf32>, vector<128x128xf32>, vector<32x128xf32> -> vector<32x128xf32>
    %288 = vector.broadcast %12 : vector<1x128xf32> to vector<32x128xf32>
    %289 = arith.addf %287, %288 : vector<32x128xf32>
    %290 = arith.addf %184, %289 : vector<32x128xf32>
    %cst_94 = arith.constant dense<0.000000e+00> : vector<32xf32>
    %291 = vector.multi_reduction <add>, %290, %cst_94 [1] : vector<32x128xf32> to vector<32xf32>
    %292 = vector.shape_cast %291 : vector<32xf32> to vector<32x1xf32>
    %cst_95 = arith.constant 1.280000e+02 : f32
    %293 = vector.broadcast %cst_95 : f32 to vector<32x1xf32>
    %294 = arith.divf %292, %293 : vector<32x1xf32>
    %295 = vector.broadcast %294 : vector<32x1xf32> to vector<32x128xf32>
    %296 = arith.subf %290, %295 : vector<32x128xf32>
    %297 = arith.mulf %296, %296 : vector<32x128xf32>
    %cst_96 = arith.constant dense<0.000000e+00> : vector<32xf32>
    %298 = vector.multi_reduction <add>, %297, %cst_96 [1] : vector<32x128xf32> to vector<32xf32>
    %299 = vector.shape_cast %298 : vector<32xf32> to vector<32x1xf32>
    %cst_97 = arith.constant 1.280000e+02 : f32
    %300 = vector.broadcast %cst_97 : f32 to vector<32x1xf32>
    %301 = arith.divf %299, %300 : vector<32x1xf32>
    %302 = vector.broadcast %294 : vector<32x1xf32> to vector<32x128xf32>
    %303 = arith.subf %290, %302 : vector<32x128xf32>
    %cst_98 = arith.constant 9.99999974E-6 : f32
    %304 = vector.broadcast %cst_98 : f32 to vector<32x1xf32>
    %305 = arith.addf %301, %304 : vector<32x1xf32>
    %306 = math.rsqrt %305 : vector<32x1xf32>
    %307 = vector.broadcast %306 : vector<32x1xf32> to vector<32x128xf32>
    %308 = arith.mulf %303, %307 : vector<32x128xf32>
    %309 = vector.broadcast %13 : vector<1x128xf32> to vector<32x128xf32>
    %310 = arith.mulf %308, %309 : vector<32x128xf32>
    %311 = vector.broadcast %14 : vector<1x128xf32> to vector<32x128xf32>
    %312 = arith.addf %310, %311 : vector<32x128xf32>
    %c0_99 = arith.constant 0 : index
    %c0_100 = arith.constant 0 : index
    %313 = vector.load %arg4[%c0_99, %c0_100] : memref<129x512xf32, #tpu.memory_space<vmem>>, vector<128x512xf32>
    %c128 = arith.constant 128 : index
    %c0_101 = arith.constant 0 : index
    %314 = vector.load %arg4[%c128, %c0_101] : memref<129x512xf32, #tpu.memory_space<vmem>>, vector<1x512xf32>
    %cst_102 = arith.constant dense<0.000000e+00> : vector<32x512xf32>
    %315 = tpu.matmul %312, %313, %cst_102 {dimension_numbers = #tpu.dot_dimension_numbers<[1], [0], [0], [1], [0, 0, 1, 1], [], []>} : vector<32x128xf32>, vector<128x512xf32>, vector<32x512xf32> -> vector<32x512xf32>
    %316 = vector.broadcast %314 : vector<1x512xf32> to vector<32x512xf32>
    %317 = arith.addf %315, %316 : vector<32x512xf32>
    %cst_103 = arith.constant 0.000000e+00 : f32
    %318 = vector.broadcast %cst_103 : f32 to vector<32x512xf32>
    %319 = arith.maximumf %317, %318 : vector<32x512xf32>
    %c0_104 = arith.constant 0 : index
    %c0_105 = arith.constant 0 : index
    %320 = vector.load %arg5[%c0_104, %c0_105] : memref<512x128xf32, #tpu.memory_space<vmem>>, vector<512x128xf32>
    %cst_106 = arith.constant dense<0.000000e+00> : vector<32x128xf32>
    %321 = tpu.matmul %319, %320, %cst_106 {dimension_numbers = #tpu.dot_dimension_numbers<[1], [0], [0], [1], [0, 0, 1, 1], [], []>} : vector<32x512xf32>, vector<512x128xf32>, vector<32x128xf32> -> vector<32x128xf32>
    %322 = vector.broadcast %15 : vector<1x128xf32> to vector<32x128xf32>
    %323 = arith.addf %321, %322 : vector<32x128xf32>
    %324 = arith.addf %312, %323 : vector<32x128xf32>
    %cst_107 = arith.constant dense<0.000000e+00> : vector<32xf32>
    %325 = vector.multi_reduction <add>, %324, %cst_107 [1] : vector<32x128xf32> to vector<32xf32>
    %326 = vector.shape_cast %325 : vector<32xf32> to vector<32x1xf32>
    %cst_108 = arith.constant 1.280000e+02 : f32
    %327 = vector.broadcast %cst_108 : f32 to vector<32x1xf32>
    %328 = arith.divf %326, %327 : vector<32x1xf32>
    %329 = vector.broadcast %328 : vector<32x1xf32> to vector<32x128xf32>
    %330 = arith.subf %324, %329 : vector<32x128xf32>
    %331 = arith.mulf %330, %330 : vector<32x128xf32>
    %cst_109 = arith.constant dense<0.000000e+00> : vector<32xf32>
    %332 = vector.multi_reduction <add>, %331, %cst_109 [1] : vector<32x128xf32> to vector<32xf32>
    %333 = vector.shape_cast %332 : vector<32xf32> to vector<32x1xf32>
    %cst_110 = arith.constant 1.280000e+02 : f32
    %334 = vector.broadcast %cst_110 : f32 to vector<32x1xf32>
    %335 = arith.divf %333, %334 : vector<32x1xf32>
    %336 = vector.broadcast %328 : vector<32x1xf32> to vector<32x128xf32>
    %337 = arith.subf %324, %336 : vector<32x128xf32>
    %cst_111 = arith.constant 9.99999974E-6 : f32
    %338 = vector.broadcast %cst_111 : f32 to vector<32x1xf32>
    %339 = arith.addf %335, %338 : vector<32x1xf32>
    %340 = math.rsqrt %339 : vector<32x1xf32>
    %341 = vector.broadcast %340 : vector<32x1xf32> to vector<32x128xf32>
    %342 = arith.mulf %337, %341 : vector<32x128xf32>
    %343 = vector.broadcast %16 : vector<1x128xf32> to vector<32x128xf32>
    %344 = arith.mulf %342, %343 : vector<32x128xf32>
    %345 = vector.broadcast %17 : vector<1x128xf32> to vector<32x128xf32>
    %346 = arith.addf %344, %345 : vector<32x128xf32>
    %347 = vector.shape_cast %346 : vector<32x128xf32> to vector<2x16x128xf32>
    %c0_112 = arith.constant 0 : index
    %c0_113 = arith.constant 0 : index
    %c0_114 = arith.constant 0 : index
    %348 = vector.load %arg6[%c0_112, %c0_113, %c0_114] : memref<2x16x128xf32, #tpu.memory_space<vmem>>, vector<2x16x128xf32>
    tpu.vector_store %arg6[%c0_112, %c0_113, %c0_114], %347 {strides = array<i32>} : memref<2x16x128xf32, #tpu.memory_space<vmem>>, vector<2x16x128xf32>,
    return
  }
  func.func @transform_0(%arg0: i32) -> (i32, i32, i32) {
    %c0_i32 = arith.constant 0 : i32
    %c0_i32_0 = arith.constant 0 : i32
    %c0_i32_1 = arith.constant 0 : i32
    return %arg0, %c0_i32, %c0_i32_0 : i32, i32, i32
  }
  func.func @transform_1(%arg0: i32) -> (i32, i32) {
    %c0_i32 = arith.constant 0 : i32
    %c0_i32_0 = arith.constant 0 : i32
    %c0_i32_1 = arith.constant 0 : i32
    return %c0_i32, %c0_i32_0 : i32, i32
  }
  func.func @transform_2(%arg0: i32) -> (i32, i32, i32) {
    %c0_i32 = arith.constant 0 : i32
    %c0_i32_0 = arith.constant 0 : i32
    %c0_i32_1 = arith.constant 0 : i32
    %c0_i32_2 = arith.constant 0 : i32
    return %c0_i32, %c0_i32_0, %c0_i32_1 : i32, i32, i32
  }
  func.func @transform_3(%arg0: i32) -> (i32, i32) {
    %c0_i32 = arith.constant 0 : i32
    %c0_i32_0 = arith.constant 0 : i32
    %c0_i32_1 = arith.constant 0 : i32
    return %c0_i32, %c0_i32_0 : i32, i32
  }
  func.func @transform_4(%arg0: i32) -> (i32, i32) {
    %c0_i32 = arith.constant 0 : i32
    %c0_i32_0 = arith.constant 0 : i32
    %c0_i32_1 = arith.constant 0 : i32
    return %c0_i32, %c0_i32_0 : i32, i32
  }
  func.func @transform_5(%arg0: i32) -> (i32, i32, i32) {
    %c0_i32 = arith.constant 0 : i32
    %c0_i32_0 = arith.constant 0 : i32
    %c0_i32_1 = arith.constant 0 : i32
    return %arg0, %c0_i32, %c0_i32_0 : i32, i32, i32
  }
}

</mosaic_0001>

<llo_original>
// kernel: tpu_custom_call.1
$region0: #{tpu_custom_call.1}
  #allocation0 [shape = 'u32[]', space=smem, size = 0x4, offset = 0x4, fixed_abs, tag = 'smem constant byte address 0x4 - core index']
  #allocation1 [shape = 'u32[144,128]{1,0:T(1,128)}', space=vmem, size = 0x12000, scoped, tag = 'internal scratch']
  %s0 = inlined_call_operand.hbm [shape: f32[2,16,128], index: 0, kind: input, shape index: {}]
  %s1 = inlined_call_operand.hbm [shape: f32[16,128], index: 1, kind: input, shape index: {}]
  %s2 = inlined_call_operand.hbm [shape: f32[8,128,128], index: 2, kind: input, shape index: {}]
  %s3 = inlined_call_operand.hbm [shape: f32[129,512], index: 3, kind: input, shape index: {}]
  %s4 = inlined_call_operand.hbm [shape: f32[512,128], index: 4, kind: input, shape index: {}]
  %s5 = inlined_call_operand.hbm [shape: f32[2,16,128], index: 5, kind: output, shape index: {}]
  %s6 = sld [smem:[#allocation0]]
  $region50: #{tpu_custom_call.1} parent=0
    _
  %s8 = ssub.s32 1, %s6
  %s9 = scalar_select 0, %s8, %s6
  $region1: #{tpu_custom_call.1} parent=0
    #allocation2 [shape = 'u8[16384]{0}', space=vmem, size = 0x4000, scoped, tag = 'input window, operand 0, single buffered']
    #allocation3 [shape = 's32[1]{0}', space=sflag, size = 0x4, scoped, tag = 'scoped memory for tpu_custom_call.1']
    #allocation4 [shape = 's32[1]{0}', space=sflag, size = 0x4, scoped, tag = 'scoped memory for tpu_custom_call.1']
    #allocation5 [shape = 'u8[8192]{0}', space=vmem, size = 0x2000, scoped, tag = 'input window, operand 1, single buffered']
    #allocation6 [shape = 's32[1]{0}', space=sflag, size = 0x4, scoped, tag = 'scoped memory for tpu_custom_call.1']
    #allocation7 [shape = 'u8[524288]{0}', space=vmem, size = 0x80000, scoped, tag = 'input window, operand 2, single buffered']
    #allocation8 [shape = 'u8[278528]{0}', space=vmem, size = 0x44000, scoped, tag = 'input window, operand 3, single buffered']
    #allocation9 [shape = 's32[1]{0}', space=sflag, size = 0x4, scoped, tag = 'scoped memory for tpu_custom_call.1']
    #allocation10 [shape = 'u8[262144]{0}', space=vmem, size = 0x40000, scoped, tag = 'input window, operand 4, single buffered']
    #allocation11 [shape = 'u8[16384]{0}', space=vmem, size = 0x4000, scoped, tag = 'output window, operand 0, single buffered']
    %10 = vsyncpa [#allocation3], 0
    %11 = vsyncpa [#allocation6], 0
    %12 = vsyncpa [#allocation9], 0
    %13 = vsyncpa [#allocation4], 0
    // Predicated region
    $region2: #{tpu_custom_call.1} parent=1 // pred_check
      _
    $region3: #{tpu_custom_call.1} parent=1 // pred_check_branch
      %15 = sbr.rel (0) target = $region5
    $region4: #{tpu_custom_call.1} parent=1 // pred_region
      %s17 = ssub.s32 512, 512
      %18 = vsyncadd [#allocation3], %s17
      %s19 = sshll.u32 [#allocation2], 4
      %s20 = int_to_ptr.vmem [resolvable:$true] %s19
      %25 = dma.hbm_to_vmem [thread:$0]  %s0, 512, %s20, [#allocation3], 128, 128, 8
    $region5: #{tpu_custom_call.1} parent=1 // pred_fallthru
      _
    // Predicated region
    $region6: #{tpu_custom_call.1} parent=1 // pred_check
      _
    $region7: #{tpu_custom_call.1} parent=1 // pred_check_branch
      %27 = sbr.rel (0) target = $region9
    $region8: #{tpu_custom_call.1} parent=1 // pred_region
      %s29 = ssub.s32 256, 256
      %30 = vsyncadd [#allocation6], %s29
      %s31 = sshll.u32 [#allocation5], 4
      %s32 = int_to_ptr.vmem [resolvable:$true] %s31
      %37 = dma.hbm_to_vmem [thread:$0]  %s1, 256, %s32, [#allocation6], 128, 128, 8
    $region9: #{tpu_custom_call.1} parent=1 // pred_fallthru
      _
    // Predicated region
    $region10: #{tpu_custom_call.1} parent=1 // pred_check
      _
    $region11: #{tpu_custom_call.1} parent=1 // pred_check_branch
      %39 = sbr.rel (0) target = $region13
    $region12: #{tpu_custom_call.1} parent=1 // pred_region
      %s41 = ssub.s32 16384, 16384
      %42 = vsyncadd [#allocation6], %s41
      %s43 = sshll.u32 [#allocation7], 4
      %s44 = int_to_ptr.vmem [resolvable:$true] %s43
      %49 = dma.hbm_to_vmem [thread:$0]  %s2, 16384, %s44, [#allocation6], 128, 128, 8
    $region13: #{tpu_custom_call.1} parent=1 // pred_fallthru
      _
    // Predicated region
    $region14: #{tpu_custom_call.1} parent=1 // pred_check
      _
    $region15: #{tpu_custom_call.1} parent=1 // pred_check_branch
      %51 = sbr.rel (0) target = $region17
    $region16: #{tpu_custom_call.1} parent=1 // pred_region
      %s53 = ssub.s32 8704, 8704
      %54 = vsyncadd [#allocation9], %s53
      %s55 = sshll.u32 [#allocation8], 4
      %s56 = int_to_ptr.vmem [resolvable:$true] %s55
      %61 = dma.hbm_to_vmem [thread:$0]  %s3, 8704, %s56, [#allocation9], 512, 512, 32
    $region17: #{tpu_custom_call.1} parent=1 // pred_fallthru
      _
    // Predicated region
    $region18: #{tpu_custom_call.1} parent=1 // pred_check
      _
    $region19: #{tpu_custom_call.1} parent=1 // pred_check_branch
      %63 = sbr.rel (0) target = $region21
    $region20: #{tpu_custom_call.1} parent=1 // pred_region
      %s65 = ssub.s32 8192, 8192
      %66 = vsyncadd [#allocation9], %s65
      %s67 = sshll.u32 [#allocation10], 4
      %s68 = int_to_ptr.vmem [resolvable:$true] %s67
      %73 = dma.hbm_to_vmem [thread:$0]  %s4, 8192, %s68, [#allocation9], 128, 128, 8
    $region21: #{tpu_custom_call.1} parent=1 // pred_fallthru
      _
    // Predicated region
    $region22: #{tpu_custom_call.1} parent=1 // pred_check
      _
    $region23: #{tpu_custom_call.1} parent=1 // pred_check_branch
      %75 = sbr.rel (0) target = $region25
    $region24: #{tpu_custom_call.1} parent=1 // pred_region
      %76 = dma.done [#allocation3], 512
    $region25: #{tpu_custom_call.1} parent=1 // pred_fallthru
      _
    // Predicated region
    $region26: #{tpu_custom_call.1} parent=1 // pred_check
      _
    $region27: #{tpu_custom_call.1} parent=1 // pred_check_branch
      %78 = sbr.rel (0) target = $region29
    $region28: #{tpu_custom_call.1} parent=1 // pred_region
      %79 = dma.done [#allocation6], 256
    $region29: #{tpu_custom_call.1} parent=1 // pred_fallthru
      _
    // Predicated region
    $region30: #{tpu_custom_call.1} parent=1 // pred_check
      _
    $region31: #{tpu_custom_call.1} parent=1 // pred_check_branch
      %81 = sbr.rel (0) target = $region33
    $region32: #{tpu_custom_call.1} parent=1 // pred_region
      %82 = dma.done [#allocation6], 16384
    $region33: #{tpu_custom_call.1} parent=1 // pred_fallthru
      _
    // Predicated region
    $region34: #{tpu_custom_call.1} parent=1 // pred_check
      _
    $region35: #{tpu_custom_call.1} parent=1 // pred_check_branch
      %84 = sbr.rel (0) target = $region37
    $region36: #{tpu_custom_call.1} parent=1 // pred_region
      %85 = dma.done [#allocation9], 8704
    $region37: #{tpu_custom_call.1} parent=1 // pred_fallthru
      _
    // Predicated region
    $region38: #{tpu_custom_call.1} parent=1 // pred_check
      _
    $region39: #{tpu_custom_call.1} parent=1 // pred_check_branch
      %87 = sbr.rel (0) target = $region41
    $region40: #{tpu_custom_call.1} parent=1 // pred_region
      %88 = dma.done [#allocation9], 8192
    $region41: #{tpu_custom_call.1} parent=1 // pred_fallthru
      _
    %v89 = vld [vmem:[#allocation2] sm:$0xff]
    %v90 = vld [vmem:[#allocation2 + $0x8] sm:$0xff]
    %v91 = vld [vmem:[#allocation2 + $0x10] sm:$0xff]
    %v92 = vld [vmem:[#allocation2 + $0x18] sm:$0xff]
    %v93 = vld [vmem:[#allocation5] sm:$0xff]
    %v94 = vld [vmem:[#allocation5 + $0x8] sm:$0xff]
    %v95 = vlaneseq
    %v96 = vshrl.u32 %v95, 7
    %v97 = vadd.s32 %v96, 8
    %v98 = vadd.s32 %v96, 16
    %v99 = vadd.s32 %v96, 24
    %v100 = vlaneseq
    %v101 = vand.u32 %v100, 127
    %v102 = vshra.s32 %v96, 4
    %v103 = vshra.s32 %v97, 4
    %v104 = vshra.s32 %v98, 4
    %v105 = vshra.s32 %v99, 4
    %v106 = vshra.s32 %v101, 4
    %vm107 = vcmp.eq.s32.totalorder %v102, %v106
    %vm108 = vcmp.eq.s32.totalorder %v103, %v106
    %vm109 = vcmp.eq.s32.totalorder %v104, %v106
    %vm110 = vcmp.eq.s32.totalorder %v105, %v106
    %v111 = vand.u32 %v96, 15
    %v112 = vand.u32 %v97, 15
    %v113 = vand.u32 %v98, 15
    %v114 = vand.u32 %v99, 15
    %v115 = vand.u32 %v101, 15
    %vm116 = vcmp.ge.s32.totalorder %v111, %v115
    %vm117 = vcmp.ge.s32.totalorder %v112, %v115
    %vm118 = vcmp.ge.s32.totalorder %v113, %v115
    %vm119 = vcmp.ge.s32.totalorder %v114, %v115
    %vm120 = vmand %vm107, %vm116
    %vm121 = vmand %vm108, %vm117
    %vm122 = vmand %vm109, %vm118
    %vm123 = vmand %vm110, %vm119
    %v124 = vcvt.s32.f32 %v111
    %v125 = vcvt.s32.f32 %v112
    %v126 = vcvt.s32.f32 %v113
    %v127 = vcvt.s32.f32 %v114
    %v128 = vand.u32 2147483647, %v124
    %vm129 = vcmp.le.f32.partialorder %v128, 0.7853982
    %vm130 = vcmp.lt.s32.totalorder %v124, 0
    %v131 = vand.u32 %v124, 2139095040
    %v132 = vshrl.u32 %v131, 23
    %v133 = vsub.s32 %v132, 127
    %v134 = vand.u32 2147483647, %v124
    %v135 = vand.u32 %v134, 8388607
    %v136 = vor.u32 %v135, 8388608
    %v137 = vsub.s32 0, %v136
    %v138 = vadd.s32 %v133, 1
    %vm139 = vcmp.gt.s32.totalorder %v138, 0
    %v140 = vsel %vm139, %v138, 0
    %v141 = vshrl.u32 %v140, 5
    %v142 = vand.u32 %v140, 31
    %v143 = vsub.s32 32, %v142
    %v144 = vshrl.u32 683565275, %v143
    %v145 = vshll.u32 683565275, %v142
    %v146 = vshrl.u32 2475754826, %v143
    %v147 = vor.u32 %v145, %v146
    %v148 = vshll.u32 2475754826, %v142
    %v149 = vshrl.u32 2131351028, %v143
    %v150 = vor.u32 %v148, %v149
    %v151 = vshll.u32 2131351028, %v142
    %v152 = vshrl.u32 2102212464, %v143
    %v153 = vor.u32 %v151, %v152
    %v154 = vshll.u32 2102212464, %v142
    %v155 = vshrl.u32 920167782, %v143
    %v156 = vor.u32 %v154, %v155
    %v157 = vshll.u32 920167782, %v142
    %v158 = vshrl.u32 1326507024, %v143
    %v159 = vor.u32 %v157, %v158
    %vm160 = vcmp.lt.s32.totalorder %v141, 1
    %vm161 = vcmp.lt.s32.totalorder %v141, 2
    %vm162 = vcmp.lt.s32.totalorder %v141, 3
    %vm163 = vcmp.lt.s32.totalorder %v141, 4
    %v164 = vsel %vm160, %v144, %v147
    %v165 = vsel %vm163, %v153, 2102212464
    %v166 = vsel %vm162, %v150, %v165
    %v167 = vsel %vm161, %v164, %v166
    %v168 = vsel %vm160, %v147, %v150
    %v169 = vsel %vm163, %v156, 920167782
    %v170 = vsel %vm162, %v153, %v169
    %v171 = vsel %vm161, %v168, %v170
    %v172 = vsel %vm160, %v150, %v153
    %v173 = vsel %vm163, %v159, 1326507024
    %v174 = vsel %vm162, %v156, %v173
    %v175 = vsel %vm161, %v172, %v174
    %v176 = vshll.u32 %v136, 8
    %v177 = vmul.u32.u64.compose %v176, %v175
    %v178 = vextract.low.u32 %v177
    %v179 = vextract.high.u32 %v177
    %v180 = vmul.u32.u64.compose %v176, %v171
    %v181 = vextract.low.u32 %v180
    %v182 = vextract.high.u32 %v180
    %v183 = vmul.u32 %v176, %v167
    %v184 = vadd.s32 %v179, %v181
    %vm185 = vc.u32 %v179, %v181
    %v186 = vadd.s32 %v182, 1
    %v187 = vsel %vm185, %v186, %v182
    %v188 = vadd.s32 %v183, %v187
    %v189 = vadd.s32 %v188, 536870912
    %v190 = vshrl.u32 %v189, 30
    %v191 = vshll.u32 %v190, 30
    %v192 = vsub.s32 %v188, %v191
    %vm193 = vcmp.lt.s32.totalorder %v192, 0
    %v194 = vsub.s32 0, %v192
    %v195 = vsel %vm193, %v194, %v192
    %v196 = vclz %v195
    %v197 = vsub.s32 %v196, 2
    %vm198 = vcmp.gt.s32.totalorder 0, %v197
    %v199 = vsel %vm198, 0, %v197
    %v200 = vsub.s32 32, %v199
    %v201 = vshll.u32 %v192, %v199
    %v202 = vshrl.u32 %v184, %v200
    %v203 = vor.u32 %v201, %v202
    %v204 = vsub.s32 4294967266, %v199
    %v205 = vadd.s32 %v204, 127
    %v206 = vshll.u32 %v205, 23
    %v207 = vor.u32 4788187, %v206
    %v208 = vand.u32 2147483647, %v207
    %v210 = vcvt.s32.f32 %v203
    %v211 = vmul.f32 %v210, %v208
    %v212 = vxor.u32 %v211, 2147483648
    %v213 = vsel %vm130, %v212, %v211
    %v214 = vsub.s32 4, %v190
    %v215 = vsel %vm130, %v214, %v190
    %v216 = vsel %vm129, %v124, %v213
    %v217 = vsel %vm129, 0, %v215
    %v218 = vcosq.f32.pop %v216
    %v219 = vsinq.f32.pop %v216
    %vm220 = vweird.f32 %v124
    %v221 = vand.u32 %v217, 3
    %vm222 = vcmp.lt.s32.totalorder %v221, 2
    %vm223 = vcmp.eq.s32.totalorder %v221, 0
    %v224 = vxor.u32 %v219, 2147483648
    %v225 = vsel %vm223, %v218, %v224
    %vm226 = vcmp.eq.s32.totalorder %v221, 2
    %v227 = vxor.u32 %v218, 2147483648
    %v228 = vsel %vm226, %v227, %v219
    %v229 = vsel %vm222, %v225, %v228
    %v230 = vsel %vm220, nan, %v229
    %v231 = vand.u32 2147483647, %v125
    %vm232 = vcmp.le.f32.partialorder %v231, 0.7853982
    %vm233 = vcmp.lt.s32.totalorder %v125, 0
    %v234 = vand.u32 %v125, 2139095040
    %v235 = vshrl.u32 %v234, 23
    %v236 = vsub.s32 %v235, 127
    %v237 = vand.u32 2147483647, %v125
    %v238 = vand.u32 %v237, 8388607
    %v239 = vor.u32 %v238, 8388608
    %v240 = vsub.s32 0, %v239
    %v241 = vadd.s32 %v236, 1
    %vm242 = vcmp.gt.s32.totalorder %v241, 0
    %v243 = vsel %vm242, %v241, 0
    %v244 = vshrl.u32 %v243, 5
    %v245 = vand.u32 %v243, 31
    %v246 = vsub.s32 32, %v245
    %v247 = vshrl.u32 683565275, %v246
    %v248 = vshll.u32 683565275, %v245
    %v249 = vshrl.u32 2475754826, %v246
    %v250 = vor.u32 %v248, %v249
    %v251 = vshll.u32 2475754826, %v245
    %v252 = vshrl.u32 2131351028, %v246
    %v253 = vor.u32 %v251, %v252
    %v254 = vshll.u32 2131351028, %v245
    %v255 = vshrl.u32 2102212464, %v246
    %v256 = vor.u32 %v254, %v255
    %v257 = vshll.u32 2102212464, %v245
    %v258 = vshrl.u32 920167782, %v246
    %v259 = vor.u32 %v257, %v258
    %v260 = vshll.u32 920167782, %v245
    %v261 = vshrl.u32 1326507024, %v246
    %v262 = vor.u32 %v260, %v261
    %vm263 = vcmp.lt.s32.totalorder %v244, 1
    %vm264 = vcmp.lt.s32.totalorder %v244, 2
    %vm265 = vcmp.lt.s32.totalorder %v244, 3
    %vm266 = vcmp.lt.s32.totalorder %v244, 4
    %v267 = vsel %vm263, %v247, %v250
    %v268 = vsel %vm266, %v256, 2102212464
    %v269 = vsel %vm265, %v253, %v268
    %v270 = vsel %vm264, %v267, %v269
    %v271 = vsel %vm263, %v250, %v253
    %v272 = vsel %vm266, %v259, 920167782
    %v273 = vsel %vm265, %v256, %v272
    %v274 = vsel %vm264, %v271, %v273
    %v275 = vsel %vm263, %v253, %v256
    %v276 = vsel %vm266, %v262, 1326507024
    %v277 = vsel %vm265, %v259, %v276
    %v278 = vsel %vm264, %v275, %v277
    %v279 = vshll.u32 %v239, 8
    %v280 = vmul.u32.u64.compose %v279, %v278
    %v281 = vextract.low.u32 %v280
    %v282 = vextract.high.u32 %v280
    %v283 = vmul.u32.u64.compose %v279, %v274
    %v284 = vextract.low.u32 %v283
    %v285 = vextract.high.u32 %v283
    %v286 = vmul.u32 %v279, %v270
    %v287 = vadd.s32 %v282, %v284
    %vm288 = vc.u32 %v282, %v284
    %v289 = vadd.s32 %v285, 1
    %v290 = vsel %vm288, %v289, %v285
    %v291 = vadd.s32 %v286, %v290
    %v292 = vadd.s32 %v291, 536870912
    %v293 = vshrl.u32 %v292, 30
    %v294 = vshll.u32 %v293, 30
    %v295 = vsub.s32 %v291, %v294
    %vm296 = vcmp.lt.s32.totalorder %v295, 0
    %v297 = vsub.s32 0, %v295
    %v298 = vsel %vm296, %v297, %v295
    %v299 = vclz %v298
    %v300 = vsub.s32 %v299, 2
    %vm301 = vcmp.gt.s32.totalorder 0, %v300
    %v302 = vsel %vm301, 0, %v300
    %v303 = vsub.s32 32, %v302
    %v304 = vshll.u32 %v295, %v302
    %v305 = vshrl.u32 %v287, %v303
    %v306 = vor.u32 %v304, %v305
    %v307 = vsub.s32 4294967266, %v302
    %v308 = vadd.s32 %v307, 127
    %v309 = vshll.u32 %v308, 23
    %v310 = vor.u32 4788187, %v309
    %v311 = vand.u32 2147483647, %v310
    %v313 = vcvt.s32.f32 %v306
    %v314 = vmul.f32 %v313, %v311
    %v315 = vxor.u32 %v314, 2147483648
    %v316 = vsel %vm233, %v315, %v314
    %v317 = vsub.s32 4, %v293
    %v318 = vsel %vm233, %v317, %v293
    %v319 = vsel %vm232, %v125, %v316
    %v320 = vsel %vm232, 0, %v318
    %v321 = vcosq.f32.pop %v319
    %v322 = vsinq.f32.pop %v319
    %vm323 = vweird.f32 %v125
    %v324 = vand.u32 %v320, 3
    %vm325 = vcmp.lt.s32.totalorder %v324, 2
    %vm326 = vcmp.eq.s32.totalorder %v324, 0
    %v327 = vxor.u32 %v322, 2147483648
    %v328 = vsel %vm326, %v321, %v327
    %vm329 = vcmp.eq.s32.totalorder %v324, 2
    %v330 = vxor.u32 %v321, 2147483648
    %v331 = vsel %vm329, %v330, %v322
    %v332 = vsel %vm325, %v328, %v331
    %v333 = vsel %vm323, nan, %v332
    %v334 = vand.u32 2147483647, %v126
    %vm335 = vcmp.le.f32.partialorder %v334, 0.7853982
    %vm336 = vcmp.lt.s32.totalorder %v126, 0
    %v337 = vand.u32 %v126, 2139095040
    %v338 = vshrl.u32 %v337, 23
    %v339 = vsub.s32 %v338, 127
    %v340 = vand.u32 2147483647, %v126
    %v341 = vand.u32 %v340, 8388607
    %v342 = vor.u32 %v341, 8388608
    %v343 = vsub.s32 0, %v342
    %v344 = vadd.s32 %v339, 1
    %vm345 = vcmp.gt.s32.totalorder %v344, 0
    %v346 = vsel %vm345, %v344, 0
    %v347 = vshrl.u32 %v346, 5
    %v348 = vand.u32 %v346, 31
    %v349 = vsub.s32 32, %v348
    %v350 = vshrl.u32 683565275, %v349
    %v351 = vshll.u32 683565275, %v348
    %v352 = vshrl.u32 2475754826, %v349
    %v353 = vor.u32 %v351, %v352
    %v354 = vshll.u32 2475754826, %v348
    %v355 = vshrl.u32 2131351028, %v349
    %v356 = vor.u32 %v354, %v355
    %v357 = vshll.u32 2131351028, %v348
    %v358 = vshrl.u32 2102212464, %v349
    %v359 = vor.u32 %v357, %v358
    %v360 = vshll.u32 2102212464, %v348
    %v361 = vshrl.u32 920167782, %v349
    %v362 = vor.u32 %v360, %v361
    %v363 = vshll.u32 920167782, %v348
    %v364 = vshrl.u32 1326507024, %v349
    %v365 = vor.u32 %v363, %v364
    %vm366 = vcmp.lt.s32.totalorder %v347, 1
    %vm367 = vcmp.lt.s32.totalorder %v347, 2
    %vm368 = vcmp.lt.s32.totalorder %v347, 3
    %vm369 = vcmp.lt.s32.totalorder %v347, 4
    %v370 = vsel %vm366, %v350, %v353
    %v371 = vsel %vm369, %v359, 2102212464
    %v372 = vsel %vm368, %v356, %v371
    %v373 = vsel %vm367, %v370, %v372
    %v374 = vsel %vm366, %v353, %v356
    %v375 = vsel %vm369, %v362, 920167782
    %v376 = vsel %vm368, %v359, %v375
    %v377 = vsel %vm367, %v374, %v376
    %v378 = vsel %vm366, %v356, %v359
    %v379 = vsel %vm369, %v365, 1326507024
    %v380 = vsel %vm368, %v362, %v379
    %v381 = vsel %vm367, %v378, %v380
    %v382 = vshll.u32 %v342, 8
    %v383 = vmul.u32.u64.compose %v382, %v381
    %v384 = vextract.low.u32 %v383
    %v385 = vextract.high.u32 %v383
    %v386 = vmul.u32.u64.compose %v382, %v377
    %v387 = vextract.low.u32 %v386
    %v388 = vextract.high.u32 %v386
    %v389 = vmul.u32 %v382, %v373
    %v390 = vadd.s32 %v385, %v387
    %vm391 = vc.u32 %v385, %v387
    %v392 = vadd.s32 %v388, 1
    %v393 = vsel %vm391, %v392, %v388
    %v394 = vadd.s32 %v389, %v393
    %v395 = vadd.s32 %v394, 536870912
    %v396 = vshrl.u32 %v395, 30
    %v397 = vshll.u32 %v396, 30
    %v398 = vsub.s32 %v394, %v397
    %vm399 = vcmp.lt.s32.totalorder %v398, 0
    %v400 = vsub.s32 0, %v398
    %v401 = vsel %vm399, %v400, %v398
    %v402 = vclz %v401
    %v403 = vsub.s32 %v402, 2
    %vm404 = vcmp.gt.s32.totalorder 0, %v403
    %v405 = vsel %vm404, 0, %v403
    %v406 = vsub.s32 32, %v405
    %v407 = vshll.u32 %v398, %v405
    %v408 = vshrl.u32 %v390, %v406
    %v409 = vor.u32 %v407, %v408
    %v410 = vsub.s32 4294967266, %v405
    %v411 = vadd.s32 %v410, 127
    %v412 = vshll.u32 %v411, 23
    %v413 = vor.u32 4788187, %v412
    %v414 = vand.u32 2147483647, %v413
    %v416 = vcvt.s32.f32 %v409
    %v417 = vmul.f32 %v416, %v414
    %v418 = vxor.u32 %v417, 2147483648
    %v419 = vsel %vm336, %v418, %v417
    %v420 = vsub.s32 4, %v396
    %v421 = vsel %vm336, %v420, %v396
    %v422 = vsel %vm335, %v126, %v419
    %v423 = vsel %vm335, 0, %v421
    %v424 = vcosq.f32.pop %v422
    %v425 = vsinq.f32.pop %v422
    %vm426 = vweird.f32 %v126
    %v427 = vand.u32 %v423, 3
    %vm428 = vcmp.lt.s32.totalorder %v427, 2
    %vm429 = vcmp.eq.s32.totalorder %v427, 0
    %v430 = vxor.u32 %v425, 2147483648
    %v431 = vsel %vm429, %v424, %v430
    %vm432 = vcmp.eq.s32.totalorder %v427, 2
    %v433 = vxor.u32 %v424, 2147483648
    %v434 = vsel %vm432, %v433, %v425
    %v435 = vsel %vm428, %v431, %v434
    %v436 = vsel %vm426, nan, %v435
    %v437 = vand.u32 2147483647, %v127
    %vm438 = vcmp.le.f32.partialorder %v437, 0.7853982
    %vm439 = vcmp.lt.s32.totalorder %v127, 0
    %v440 = vand.u32 %v127, 2139095040
    %v441 = vshrl.u32 %v440, 23
    %v442 = vsub.s32 %v441, 127
    %v443 = vand.u32 2147483647, %v127
    %v444 = vand.u32 %v443, 8388607
    %v445 = vor.u32 %v444, 8388608
    %v446 = vsub.s32 0, %v445
    %v447 = vadd.s32 %v442, 1
    %vm448 = vcmp.gt.s32.totalorder %v447, 0
    %v449 = vsel %vm448, %v447, 0
    %v450 = vshrl.u32 %v449, 5
    %v451 = vand.u32 %v449, 31
    %v452 = vsub.s32 32, %v451
    %v453 = vshrl.u32 683565275, %v452
    %v454 = vshll.u32 683565275, %v451
    %v455 = vshrl.u32 2475754826, %v452
    %v456 = vor.u32 %v454, %v455
    %v457 = vshll.u32 2475754826, %v451
    %v458 = vshrl.u32 2131351028, %v452
    %v459 = vor.u32 %v457, %v458
    %v460 = vshll.u32 2131351028, %v451
    %v461 = vshrl.u32 2102212464, %v452
    %v462 = vor.u32 %v460, %v461
    %v463 = vshll.u32 2102212464, %v451
    %v464 = vshrl.u32 920167782, %v452
    %v465 = vor.u32 %v463, %v464
    %v466 = vshll.u32 920167782, %v451
    %v467 = vshrl.u32 1326507024, %v452
    %v468 = vor.u32 %v466, %v467
    %vm469 = vcmp.lt.s32.totalorder %v450, 1
    %vm470 = vcmp.lt.s32.totalorder %v450, 2
    %vm471 = vcmp.lt.s32.totalorder %v450, 3
    %vm472 = vcmp.lt.s32.totalorder %v450, 4
    %v473 = vsel %vm469, %v453, %v456
    %v474 = vsel %vm472, %v462, 2102212464
    %v475 = vsel %vm471, %v459, %v474
    %v476 = vsel %vm470, %v473, %v475
    %v477 = vsel %vm469, %v456, %v459
    %v478 = vsel %vm472, %v465, 920167782
    %v479 = vsel %vm471, %v462, %v478
    %v480 = vsel %vm470, %v477, %v479
    %v481 = vsel %vm469, %v459, %v462
    %v482 = vsel %vm472, %v468, 1326507024
    %v483 = vsel %vm471, %v465, %v482
    %v484 = vsel %vm470, %v481, %v483
    %v485 = vshll.u32 %v445, 8
    %v486 = vmul.u32.u64.compose %v485, %v484
    %v487 = vextract.low.u32 %v486
    %v488 = vextract.high.u32 %v486
    %v489 = vmul.u32.u64.compose %v485, %v480
    %v490 = vextract.low.u32 %v489
    %v491 = vextract.high.u32 %v489
    %v492 = vmul.u32 %v485, %v476
    %v493 = vadd.s32 %v488, %v490
    %vm494 = vc.u32 %v488, %v490
    %v495 = vadd.s32 %v491, 1
    %v496 = vsel %vm494, %v495, %v491
    %v497 = vadd.s32 %v492, %v496
    %v498 = vadd.s32 %v497, 536870912
    %v499 = vshrl.u32 %v498, 30
    %v500 = vshll.u32 %v499, 30
    %v501 = vsub.s32 %v497, %v500
    %vm502 = vcmp.lt.s32.totalorder %v501, 0
    %v503 = vsub.s32 0, %v501
    %v504 = vsel %vm502, %v503, %v501
    %v505 = vclz %v504
    %v506 = vsub.s32 %v505, 2
    %vm507 = vcmp.gt.s32.totalorder 0, %v506
    %v508 = vsel %vm507, 0, %v506
    %v509 = vsub.s32 32, %v508
    %v510 = vshll.u32 %v501, %v508
    %v511 = vshrl.u32 %v493, %v509
    %v512 = vor.u32 %v510, %v511
    %v513 = vsub.s32 4294967266, %v508
    %v514 = vadd.s32 %v513, 127
    %v515 = vshll.u32 %v514, 23
    %v516 = vor.u32 4788187, %v515
    %v517 = vand.u32 2147483647, %v516
    %v519 = vcvt.s32.f32 %v512
    %v520 = vmul.f32 %v519, %v517
    %v521 = vxor.u32 %v520, 2147483648
    %v522 = vsel %vm439, %v521, %v520
    %v523 = vsub.s32 4, %v499
    %v524 = vsel %vm439, %v523, %v499
    %v525 = vsel %vm438, %v127, %v522
    %v526 = vsel %vm438, 0, %v524
    %v527 = vcosq.f32.pop %v525
    %v528 = vsinq.f32.pop %v525
    %vm529 = vweird.f32 %v127
    %v530 = vand.u32 %v526, 3
    %vm531 = vcmp.lt.s32.totalorder %v530, 2
    %vm532 = vcmp.eq.s32.totalorder %v530, 0
    %v533 = vxor.u32 %v528, 2147483648
    %v534 = vsel %vm532, %v527, %v533
    %vm535 = vcmp.eq.s32.totalorder %v530, 2
    %v536 = vxor.u32 %v527, 2147483648
    %v537 = vsel %vm535, %v536, %v528
    %v538 = vsel %vm531, %v534, %v537
    %v539 = vsel %vm529, nan, %v538
    %v540 = vand.u32 2147483647, %v124
    %vm541 = vcmp.le.f32.partialorder %v540, 0.7853982
    %vm542 = vcmp.lt.s32.totalorder %v124, 0
    %v543 = vand.u32 %v124, 2139095040
    %v544 = vshrl.u32 %v543, 23
    %v545 = vsub.s32 %v544, 127
    %v546 = vand.u32 2147483647, %v124
    %v547 = vand.u32 %v546, 8388607
    %v548 = vor.u32 %v547, 8388608
    %v549 = vsub.s32 0, %v548
    %v550 = vadd.s32 %v545, 1
    %vm551 = vcmp.gt.s32.totalorder %v550, 0
    %v552 = vsel %vm551, %v550, 0
    %v553 = vshrl.u32 %v552, 5
    %v554 = vand.u32 %v552, 31
    %v555 = vsub.s32 32, %v554
    %v556 = vshrl.u32 683565275, %v555
    %v557 = vshll.u32 683565275, %v554
    %v558 = vshrl.u32 2475754826, %v555
    %v559 = vor.u32 %v557, %v558
    %v560 = vshll.u32 2475754826, %v554
    %v561 = vshrl.u32 2131351028, %v555
    %v562 = vor.u32 %v560, %v561
    %v563 = vshll.u32 2131351028, %v554
    %v564 = vshrl.u32 2102212464, %v555
    %v565 = vor.u32 %v563, %v564
    %v566 = vshll.u32 2102212464, %v554
    %v567 = vshrl.u32 920167782, %v555
    %v568 = vor.u32 %v566, %v567
    %v569 = vshll.u32 920167782, %v554
    %v570 = vshrl.u32 1326507024, %v555
    %v571 = vor.u32 %v569, %v570
    %vm572 = vcmp.lt.s32.totalorder %v553, 1
    %vm573 = vcmp.lt.s32.totalorder %v553, 2
    %vm574 = vcmp.lt.s32.totalorder %v553, 3
    %vm575 = vcmp.lt.s32.totalorder %v553, 4
    %v576 = vsel %vm572, %v556, %v559
    %v577 = vsel %vm575, %v565, 2102212464
    %v578 = vsel %vm574, %v562, %v577
    %v579 = vsel %vm573, %v576, %v578
    %v580 = vsel %vm572, %v559, %v562
    %v581 = vsel %vm575, %v568, 920167782
    %v582 = vsel %vm574, %v565, %v581
    %v583 = vsel %vm573, %v580, %v582
    %v584 = vsel %vm572, %v562, %v565
    %v585 = vsel %vm575, %v571, 1326507024
    %v586 = vsel %vm574, %v568, %v585
    %v587 = vsel %vm573, %v584, %v586
    %v588 = vshll.u32 %v548, 8
    %v589 = vmul.u32.u64.compose %v588, %v587
    %v590 = vextract.low.u32 %v589
    %v591 = vextract.high.u32 %v589
    %v592 = vmul.u32.u64.compose %v588, %v583
    %v593 = vextract.low.u32 %v592
    %v594 = vextract.high.u32 %v592
    %v595 = vmul.u32 %v588, %v579
    %v596 = vadd.s32 %v591, %v593
    %vm597 = vc.u32 %v591, %v593
    %v598 = vadd.s32 %v594, 1
    %v599 = vsel %vm597, %v598, %v594
    %v600 = vadd.s32 %v595, %v599
    %v601 = vadd.s32 %v600, 536870912
    %v602 = vshrl.u32 %v601, 30
    %v603 = vshll.u32 %v602, 30
    %v604 = vsub.s32 %v600, %v603
    %vm605 = vcmp.lt.s32.totalorder %v604, 0
    %v606 = vsub.s32 0, %v604
    %v607 = vsel %vm605, %v606, %v604
    %v608 = vclz %v607
    %v609 = vsub.s32 %v608, 2
    %vm610 = vcmp.gt.s32.totalorder 0, %v609
    %v611 = vsel %vm610, 0, %v609
    %v612 = vsub.s32 32, %v611
    %v613 = vshll.u32 %v604, %v611
    %v614 = vshrl.u32 %v596, %v612
    %v615 = vor.u32 %v613, %v614
    %v616 = vsub.s32 4294967266, %v611
    %v617 = vadd.s32 %v616, 127
    %v618 = vshll.u32 %v617, 23
    %v619 = vor.u32 4788187, %v618
    %v620 = vand.u32 2147483647, %v619
    %v622 = vcvt.s32.f32 %v615
    %v623 = vmul.f32 %v622, %v620
    %v624 = vxor.u32 %v623, 2147483648
    %v625 = vsel %vm542, %v624, %v623
    %v626 = vsub.s32 4, %v602
    %v627 = vsel %vm542, %v626, %v602
    %v628 = vsel %vm541, %v124, %v625
    %v629 = vsel %vm541, 0, %v627
    %v630 = vcosq.f32.pop %v628
    %v631 = vsinq.f32.pop %v628
    %vm632 = vweird.f32 %v124
    %v633 = vadd.s32 %v629, 3
    %v634 = vand.u32 %v633, 3
    %vm635 = vcmp.lt.s32.totalorder %v634, 2
    %vm636 = vcmp.eq.s32.totalorder %v634, 0
    %v637 = vxor.u32 %v631, 2147483648
    %v638 = vsel %vm636, %v630, %v637
    %vm639 = vcmp.eq.s32.totalorder %v634, 2
    %v640 = vxor.u32 %v630, 2147483648
    %v641 = vsel %vm639, %v640, %v631
    %v642 = vsel %vm635, %v638, %v641
    %v643 = vsel %vm632, nan, %v642
    %v644 = vand.u32 2147483647, %v125
    %vm645 = vcmp.le.f32.partialorder %v644, 0.7853982
    %vm646 = vcmp.lt.s32.totalorder %v125, 0
    %v647 = vand.u32 %v125, 2139095040
    %v648 = vshrl.u32 %v647, 23
    %v649 = vsub.s32 %v648, 127
    %v650 = vand.u32 2147483647, %v125
    %v651 = vand.u32 %v650, 8388607
    %v652 = vor.u32 %v651, 8388608
    %v653 = vsub.s32 0, %v652
    %v654 = vadd.s32 %v649, 1
    %vm655 = vcmp.gt.s32.totalorder %v654, 0
    %v656 = vsel %vm655, %v654, 0
    %v657 = vshrl.u32 %v656, 5
    %v658 = vand.u32 %v656, 31
    %v659 = vsub.s32 32, %v658
    %v660 = vshrl.u32 683565275, %v659
    %v661 = vshll.u32 683565275, %v658
    %v662 = vshrl.u32 2475754826, %v659
    %v663 = vor.u32 %v661, %v662
    %v664 = vshll.u32 2475754826, %v658
    %v665 = vshrl.u32 2131351028, %v659
    %v666 = vor.u32 %v664, %v665
    %v667 = vshll.u32 2131351028, %v658
    %v668 = vshrl.u32 2102212464, %v659
    %v669 = vor.u32 %v667, %v668
    %v670 = vshll.u32 2102212464, %v658
    %v671 = vshrl.u32 920167782, %v659
    %v672 = vor.u32 %v670, %v671
    %v673 = vshll.u32 920167782, %v658
    %v674 = vshrl.u32 1326507024, %v659
    %v675 = vor.u32 %v673, %v674
    %vm676 = vcmp.lt.s32.totalorder %v657, 1
    %vm677 = vcmp.lt.s32.totalorder %v657, 2
    %vm678 = vcmp.lt.s32.totalorder %v657, 3
    %vm679 = vcmp.lt.s32.totalorder %v657, 4
    %v680 = vsel %vm676, %v660, %v663
    %v681 = vsel %vm679, %v669, 2102212464
    %v682 = vsel %vm678, %v666, %v681
    %v683 = vsel %vm677, %v680, %v682
    %v684 = vsel %vm676, %v663, %v666
    %v685 = vsel %vm679, %v672, 920167782
    %v686 = vsel %vm678, %v669, %v685
    %v687 = vsel %vm677, %v684, %v686
    %v688 = vsel %vm676, %v666, %v669
    %v689 = vsel %vm679, %v675, 1326507024
    %v690 = vsel %vm678, %v672, %v689
    %v691 = vsel %vm677, %v688, %v690
    %v692 = vshll.u32 %v652, 8
    %v693 = vmul.u32.u64.compose %v692, %v691
    %v694 = vextract.low.u32 %v693
    %v695 = vextract.high.u32 %v693
    %v696 = vmul.u32.u64.compose %v692, %v687
    %v697 = vextract.low.u32 %v696
    %v698 = vextract.high.u32 %v696
    %v699 = vmul.u32 %v692, %v683
    %v700 = vadd.s32 %v695, %v697
    %vm701 = vc.u32 %v695, %v697
    %v702 = vadd.s32 %v698, 1
    %v703 = vsel %vm701, %v702, %v698
    %v704 = vadd.s32 %v699, %v703
    %v705 = vadd.s32 %v704, 536870912
    %v706 = vshrl.u32 %v705, 30
    %v707 = vshll.u32 %v706, 30
    %v708 = vsub.s32 %v704, %v707
    %vm709 = vcmp.lt.s32.totalorder %v708, 0
    %v710 = vsub.s32 0, %v708
    %v711 = vsel %vm709, %v710, %v708
    %v712 = vclz %v711
    %v713 = vsub.s32 %v712, 2
    %vm714 = vcmp.gt.s32.totalorder 0, %v713
    %v715 = vsel %vm714, 0, %v713
    %v716 = vsub.s32 32, %v715
    %v717 = vshll.u32 %v708, %v715
    %v718 = vshrl.u32 %v700, %v716
    %v719 = vor.u32 %v717, %v718
    %v720 = vsub.s32 4294967266, %v715
    %v721 = vadd.s32 %v720, 127
    %v722 = vshll.u32 %v721, 23
    %v723 = vor.u32 4788187, %v722
    %v724 = vand.u32 2147483647, %v723
    %v726 = vcvt.s32.f32 %v719
    %v727 = vmul.f32 %v726, %v724
    %v728 = vxor.u32 %v727, 2147483648
    %v729 = vsel %vm646, %v728, %v727
    %v730 = vsub.s32 4, %v706
    %v731 = vsel %vm646, %v730, %v706
    %v732 = vsel %vm645, %v125, %v729
    %v733 = vsel %vm645, 0, %v731
    %v734 = vcosq.f32.pop %v732
    %v735 = vsinq.f32.pop %v732
    %vm736 = vweird.f32 %v125
    %v737 = vadd.s32 %v733, 3
    %v738 = vand.u32 %v737, 3
    %vm739 = vcmp.lt.s32.totalorder %v738, 2
    %vm740 = vcmp.eq.s32.totalorder %v738, 0
    %v741 = vxor.u32 %v735, 2147483648
    %v742 = vsel %vm740, %v734, %v741
    %vm743 = vcmp.eq.s32.totalorder %v738, 2
    %v744 = vxor.u32 %v734, 2147483648
    %v745 = vsel %vm743, %v744, %v735
    %v746 = vsel %vm739, %v742, %v745
    %v747 = vsel %vm736, nan, %v746
    %v748 = vand.u32 2147483647, %v126
    %vm749 = vcmp.le.f32.partialorder %v748, 0.7853982
    %vm750 = vcmp.lt.s32.totalorder %v126, 0
    %v751 = vand.u32 %v126, 2139095040
    %v752 = vshrl.u32 %v751, 23
    %v753 = vsub.s32 %v752, 127
    %v754 = vand.u32 2147483647, %v126
    %v755 = vand.u32 %v754, 8388607
    %v756 = vor.u32 %v755, 8388608
    %v757 = vsub.s32 0, %v756
    %v758 = vadd.s32 %v753, 1
    %vm759 = vcmp.gt.s32.totalorder %v758, 0
    %v760 = vsel %vm759, %v758, 0
    %v761 = vshrl.u32 %v760, 5
    %v762 = vand.u32 %v760, 31
    %v763 = vsub.s32 32, %v762
    %v764 = vshrl.u32 683565275, %v763
    %v765 = vshll.u32 683565275, %v762
    %v766 = vshrl.u32 2475754826, %v763
    %v767 = vor.u32 %v765, %v766
    %v768 = vshll.u32 2475754826, %v762
    %v769 = vshrl.u32 2131351028, %v763
    %v770 = vor.u32 %v768, %v769
    %v771 = vshll.u32 2131351028, %v762
    %v772 = vshrl.u32 2102212464, %v763
    %v773 = vor.u32 %v771, %v772
    %v774 = vshll.u32 2102212464, %v762
    %v775 = vshrl.u32 920167782, %v763
    %v776 = vor.u32 %v774, %v775
    %v777 = vshll.u32 920167782, %v762
    %v778 = vshrl.u32 1326507024, %v763
    %v779 = vor.u32 %v777, %v778
    %vm780 = vcmp.lt.s32.totalorder %v761, 1
    %vm781 = vcmp.lt.s32.totalorder %v761, 2
    %vm782 = vcmp.lt.s32.totalorder %v761, 3
    %vm783 = vcmp.lt.s32.totalorder %v761, 4
    %v784 = vsel %vm780, %v764, %v767
    %v785 = vsel %vm783, %v773, 2102212464
    %v786 = vsel %vm782, %v770, %v785
    %v787 = vsel %vm781, %v784, %v786
    %v788 = vsel %vm780, %v767, %v770
    %v789 = vsel %vm783, %v776, 920167782
    %v790 = vsel %vm782, %v773, %v789
    %v791 = vsel %vm781, %v788, %v790
    %v792 = vsel %vm780, %v770, %v773
    %v793 = vsel %vm783, %v779, 1326507024
    %v794 = vsel %vm782, %v776, %v793
    %v795 = vsel %vm781, %v792, %v794
    %v796 = vshll.u32 %v756, 8
    %v797 = vmul.u32.u64.compose %v796, %v795
    %v798 = vextract.low.u32 %v797
    %v799 = vextract.high.u32 %v797
    %v800 = vmul.u32.u64.compose %v796, %v791
    %v801 = vextract.low.u32 %v800
    %v802 = vextract.high.u32 %v800
    %v803 = vmul.u32 %v796, %v787
    %v804 = vadd.s32 %v799, %v801
    %vm805 = vc.u32 %v799, %v801
    %v806 = vadd.s32 %v802, 1
    %v807 = vsel %vm805, %v806, %v802
    %v808 = vadd.s32 %v803, %v807
    %v809 = vadd.s32 %v808, 536870912
    %v810 = vshrl.u32 %v809, 30
    %v811 = vshll.u32 %v810, 30
    %v812 = vsub.s32 %v808, %v811
    %vm813 = vcmp.lt.s32.totalorder %v812, 0
    %v814 = vsub.s32 0, %v812
    %v815 = vsel %vm813, %v814, %v812
    %v816 = vclz %v815
    %v817 = vsub.s32 %v816, 2
    %vm818 = vcmp.gt.s32.totalorder 0, %v817
    %v819 = vsel %vm818, 0, %v817
    %v820 = vsub.s32 32, %v819
    %v821 = vshll.u32 %v812, %v819
    %v822 = vshrl.u32 %v804, %v820
    %v823 = vor.u32 %v821, %v822
    %v824 = vsub.s32 4294967266, %v819
    %v825 = vadd.s32 %v824, 127
    %v826 = vshll.u32 %v825, 23
    %v827 = vor.u32 4788187, %v826
    %v828 = vand.u32 2147483647, %v827
    %v830 = vcvt.s32.f32 %v823
    %v831 = vmul.f32 %v830, %v828
    %v832 = vxor.u32 %v831, 2147483648
    %v833 = vsel %vm750, %v832, %v831
    %v834 = vsub.s32 4, %v810
    %v835 = vsel %vm750, %v834, %v810
    %v836 = vsel %vm749, %v126, %v833
    %v837 = vsel %vm749, 0, %v835
    %v838 = vcosq.f32.pop %v836
    %v839 = vsinq.f32.pop %v836
    %vm840 = vweird.f32 %v126
    %v841 = vadd.s32 %v837, 3
    %v842 = vand.u32 %v841, 3
    %vm843 = vcmp.lt.s32.totalorder %v842, 2
    %vm844 = vcmp.eq.s32.totalorder %v842, 0
    %v845 = vxor.u32 %v839, 2147483648
    %v846 = vsel %vm844, %v838, %v845
    %vm847 = vcmp.eq.s32.totalorder %v842, 2
    %v848 = vxor.u32 %v838, 2147483648
    %v849 = vsel %vm847, %v848, %v839
    %v850 = vsel %vm843, %v846, %v849
    %v851 = vsel %vm840, nan, %v850
    %v852 = vand.u32 2147483647, %v127
    %vm853 = vcmp.le.f32.partialorder %v852, 0.7853982
    %vm854 = vcmp.lt.s32.totalorder %v127, 0
    %v855 = vand.u32 %v127, 2139095040
    %v856 = vshrl.u32 %v855, 23
    %v857 = vsub.s32 %v856, 127
    %v858 = vand.u32 2147483647, %v127
    %v859 = vand.u32 %v858, 8388607
    %v860 = vor.u32 %v859, 8388608
    %v861 = vsub.s32 0, %v860
    %v862 = vadd.s32 %v857, 1
    %vm863 = vcmp.gt.s32.totalorder %v862, 0
    %v864 = vsel %vm863, %v862, 0
    %v865 = vshrl.u32 %v864, 5
    %v866 = vand.u32 %v864, 31
    %v867 = vsub.s32 32, %v866
    %v868 = vshrl.u32 683565275, %v867
    %v869 = vshll.u32 683565275, %v866
    %v870 = vshrl.u32 2475754826, %v867
    %v871 = vor.u32 %v869, %v870
    %v872 = vshll.u32 2475754826, %v866
    %v873 = vshrl.u32 2131351028, %v867
    %v874 = vor.u32 %v872, %v873
    %v875 = vshll.u32 2131351028, %v866
    %v876 = vshrl.u32 2102212464, %v867
    %v877 = vor.u32 %v875, %v876
    %v878 = vshll.u32 2102212464, %v866
    %v879 = vshrl.u32 920167782, %v867
    %v880 = vor.u32 %v878, %v879
    %v881 = vshll.u32 920167782, %v866
    %v882 = vshrl.u32 1326507024, %v867
    %v883 = vor.u32 %v881, %v882
    %vm884 = vcmp.lt.s32.totalorder %v865, 1
    %vm885 = vcmp.lt.s32.totalorder %v865, 2
    %vm886 = vcmp.lt.s32.totalorder %v865, 3
    %vm887 = vcmp.lt.s32.totalorder %v865, 4
    %v888 = vsel %vm884, %v868, %v871
    %v889 = vsel %vm887, %v877, 2102212464
    %v890 = vsel %vm886, %v874, %v889
    %v891 = vsel %vm885, %v888, %v890
    %v892 = vsel %vm884, %v871, %v874
    %v893 = vsel %vm887, %v880, 920167782
    %v894 = vsel %vm886, %v877, %v893
    %v895 = vsel %vm885, %v892, %v894
    %v896 = vsel %vm884, %v874, %v877
    %v897 = vsel %vm887, %v883, 1326507024
    %v898 = vsel %vm886, %v880, %v897
    %v899 = vsel %vm885, %v896, %v898
    %v900 = vshll.u32 %v860, 8
    %v901 = vmul.u32.u64.compose %v900, %v899
    %v902 = vextract.low.u32 %v901
    %v903 = vextract.high.u32 %v901
    %v904 = vmul.u32.u64.compose %v900, %v895
    %v905 = vextract.low.u32 %v904
    %v906 = vextract.high.u32 %v904
    %v907 = vmul.u32 %v900, %v891
    %v908 = vadd.s32 %v903, %v905
    %vm909 = vc.u32 %v903, %v905
    %v910 = vadd.s32 %v906, 1
    %v911 = vsel %vm909, %v910, %v906
    %v912 = vadd.s32 %v907, %v911
    %v913 = vadd.s32 %v912, 536870912
    %v914 = vshrl.u32 %v913, 30
    %v915 = vshll.u32 %v914, 30
    %v916 = vsub.s32 %v912, %v915
    %vm917 = vcmp.lt.s32.totalorder %v916, 0
    %v918 = vsub.s32 0, %v916
    %v919 = vsel %vm917, %v918, %v916
    %v920 = vclz %v919
    %v921 = vsub.s32 %v920, 2
    %vm922 = vcmp.gt.s32.totalorder 0, %v921
    %v923 = vsel %vm922, 0, %v921
    %v924 = vsub.s32 32, %v923
    %v925 = vshll.u32 %v916, %v923
    %v926 = vshrl.u32 %v908, %v924
    %v927 = vor.u32 %v925, %v926
    %v928 = vsub.s32 4294967266, %v923
    %v929 = vadd.s32 %v928, 127
    %v930 = vshll.u32 %v929, 23
    %v931 = vor.u32 4788187, %v930
    %v932 = vand.u32 2147483647, %v931
    %v934 = vcvt.s32.f32 %v927
    %v935 = vmul.f32 %v934, %v932
    %v936 = vxor.u32 %v935, 2147483648
    %v937 = vsel %vm854, %v936, %v935
    %v938 = vsub.s32 4, %v914
    %v939 = vsel %vm854, %v938, %v914
    %v940 = vsel %vm853, %v127, %v937
    %v941 = vsel %vm853, 0, %v939
    %v942 = vcosq.f32.pop %v940
    %v943 = vsinq.f32.pop %v940
    %vm944 = vweird.f32 %v127
    %v945 = vadd.s32 %v941, 3
    %v946 = vand.u32 %v945, 3
    %vm947 = vcmp.lt.s32.totalorder %v946, 2
    %vm948 = vcmp.eq.s32.totalorder %v946, 0
    %v949 = vxor.u32 %v943, 2147483648
    %v950 = vsel %vm948, %v942, %v949
    %vm951 = vcmp.eq.s32.totalorder %v946, 2
    %v952 = vxor.u32 %v942, 2147483648
    %v953 = vsel %vm951, %v952, %v943
    %v954 = vsel %vm947, %v950, %v953
    %v955 = vsel %vm944, nan, %v954
    %v956 = vadd.s32 %v96, 32
    %v957 = vadd.s32 %v96, 40
    %v958 = vadd.s32 %v96, 48
    %v959 = vadd.s32 %v96, 56
    %v960 = vadd.s32 %v96, 64
    %v961 = vadd.s32 %v96, 72
    %v962 = vadd.s32 %v96, 80
    %v963 = vadd.s32 %v96, 88
    %v964 = vadd.s32 %v96, 96
    %v965 = vadd.s32 %v96, 104
    %v966 = vadd.s32 %v96, 112
    %v967 = vadd.s32 %v96, 120
    %v968 = vand.u32 %v96, 1
    %v969 = vand.u32 %v97, 1
    %v970 = vand.u32 %v98, 1
    %v971 = vand.u32 %v99, 1
    %v972 = vand.u32 %v956, 1
    %v973 = vand.u32 %v957, 1
    %v974 = vand.u32 %v958, 1
    %v975 = vand.u32 %v959, 1
    %v976 = vand.u32 %v960, 1
    %v977 = vand.u32 %v961, 1
    %v978 = vand.u32 %v962, 1
    %v979 = vand.u32 %v963, 1
    %v980 = vand.u32 %v964, 1
    %v981 = vand.u32 %v965, 1
    %v982 = vand.u32 %v966, 1
    %v983 = vand.u32 %v967, 1
    %vm984 = vcmp.eq.s32.totalorder %v968, 0
    %vm985 = vcmp.eq.s32.totalorder %v969, 0
    %vm986 = vcmp.eq.s32.totalorder %v970, 0
    %vm987 = vcmp.eq.s32.totalorder %v971, 0
    %vm988 = vcmp.eq.s32.totalorder %v972, 0
    %vm989 = vcmp.eq.s32.totalorder %v973, 0
    %vm990 = vcmp.eq.s32.totalorder %v974, 0
    %vm991 = vcmp.eq.s32.totalorder %v975, 0
    %vm992 = vcmp.eq.s32.totalorder %v976, 0
    %vm993 = vcmp.eq.s32.totalorder %v977, 0
    %vm994 = vcmp.eq.s32.totalorder %v978, 0
    %vm995 = vcmp.eq.s32.totalorder %v979, 0
    %vm996 = vcmp.eq.s32.totalorder %v980, 0
    %vm997 = vcmp.eq.s32.totalorder %v981, 0
    %vm998 = vcmp.eq.s32.totalorder %v982, 0
    %vm999 = vcmp.eq.s32.totalorder %v983, 0
    %v1000 = vadd.s32 %v96, 1
    %v1001 = vadd.s32 %v97, 1
    %v1002 = vadd.s32 %v98, 1
    %v1003 = vadd.s32 %v99, 1
    %v1004 = vadd.s32 %v956, 1
    %v1005 = vadd.s32 %v957, 1
    %v1006 = vadd.s32 %v958, 1
    %v1007 = vadd.s32 %v959, 1
    %v1008 = vadd.s32 %v960, 1
    %v1009 = vadd.s32 %v961, 1
    %v1010 = vadd.s32 %v962, 1
    %v1011 = vadd.s32 %v963, 1
    %v1012 = vadd.s32 %v964, 1
    %v1013 = vadd.s32 %v965, 1
    %v1014 = vadd.s32 %v966, 1
    %v1015 = vadd.s32 %v967, 1
    %vm1016 = vcmp.eq.s32.totalorder %v101, %v1000
    %vm1017 = vcmp.eq.s32.totalorder %v101, %v1001
    %vm1018 = vcmp.eq.s32.totalorder %v101, %v1002
    %vm1019 = vcmp.eq.s32.totalorder %v101, %v1003
    %vm1020 = vcmp.eq.s32.totalorder %v101, %v1004
    %vm1021 = vcmp.eq.s32.totalorder %v101, %v1005
    %vm1022 = vcmp.eq.s32.totalorder %v101, %v1006
    %vm1023 = vcmp.eq.s32.totalorder %v101, %v1007
    %vm1024 = vcmp.eq.s32.totalorder %v101, %v1008
    %vm1025 = vcmp.eq.s32.totalorder %v101, %v1009
    %vm1026 = vcmp.eq.s32.totalorder %v101, %v1010
    %vm1027 = vcmp.eq.s32.totalorder %v101, %v1011
    %vm1028 = vcmp.eq.s32.totalorder %v101, %v1012
    %vm1029 = vcmp.eq.s32.totalorder %v101, %v1013
    %vm1030 = vcmp.eq.s32.totalorder %v101, %v1014
    %vm1031 = vcmp.eq.s32.totalorder %v101, %v1015
    %vm1032 = vmand %vm1016, %vm984
    %vm1033 = vmand %vm1017, %vm985
    %vm1034 = vmand %vm1018, %vm986
    %vm1035 = vmand %vm1019, %vm987
    %vm1036 = vmand %vm1020, %vm988
    %vm1037 = vmand %vm1021, %vm989
    %vm1038 = vmand %vm1022, %vm990
    %vm1039 = vmand %vm1023, %vm991
    %vm1040 = vmand %vm1024, %vm992
    %vm1041 = vmand %vm1025, %vm993
    %vm1042 = vmand %vm1026, %vm994
    %vm1043 = vmand %vm1027, %vm995
    %vm1044 = vmand %vm1028, %vm996
    %vm1045 = vmand %vm1029, %vm997
    %vm1046 = vmand %vm1030, %vm998
    %vm1047 = vmand %vm1031, %vm999
    %v1048 = vsub.s32 %v96, 1
    %v1049 = vsub.s32 %v97, 1
    %v1050 = vsub.s32 %v98, 1
    %v1051 = vsub.s32 %v99, 1
    %v1052 = vsub.s32 %v956, 1
    %v1053 = vsub.s32 %v957, 1
    %v1054 = vsub.s32 %v958, 1
    %v1055 = vsub.s32 %v959, 1
    %v1056 = vsub.s32 %v960, 1
    %v1057 = vsub.s32 %v961, 1
    %v1058 = vsub.s32 %v962, 1
    %v1059 = vsub.s32 %v963, 1
    %v1060 = vsub.s32 %v964, 1
    %v1061 = vsub.s32 %v965, 1
    %v1062 = vsub.s32 %v966, 1
    %v1063 = vsub.s32 %v967, 1
    %vm1064 = vcmp.eq.s32.totalorder %v101, %v1048
    %vm1065 = vcmp.eq.s32.totalorder %v101, %v1049
    %vm1066 = vcmp.eq.s32.totalorder %v101, %v1050
    %vm1067 = vcmp.eq.s32.totalorder %v101, %v1051
    %vm1068 = vcmp.eq.s32.totalorder %v101, %v1052
    %vm1069 = vcmp.eq.s32.totalorder %v101, %v1053
    %vm1070 = vcmp.eq.s32.totalorder %v101, %v1054
    %vm1071 = vcmp.eq.s32.totalorder %v101, %v1055
    %vm1072 = vcmp.eq.s32.totalorder %v101, %v1056
    %vm1073 = vcmp.eq.s32.totalorder %v101, %v1057
    %vm1074 = vcmp.eq.s32.totalorder %v101, %v1058
    %vm1075 = vcmp.eq.s32.totalorder %v101, %v1059
    %vm1076 = vcmp.eq.s32.totalorder %v101, %v1060
    %vm1077 = vcmp.eq.s32.totalorder %v101, %v1061
    %vm1078 = vcmp.eq.s32.totalorder %v101, %v1062
    %vm1079 = vcmp.eq.s32.totalorder %v101, %v1063
    %vm1080 = vmxor %vm984, 1
    %vm1081 = vmxor %vm985, 1
    %vm1082 = vmxor %vm986, 1
    %vm1083 = vmxor %vm987, 1
    %vm1084 = vmxor %vm988, 1
    %vm1085 = vmxor %vm989, 1
    %vm1086 = vmxor %vm990, 1
    %vm1087 = vmxor %vm991, 1
    %vm1088 = vmxor %vm992, 1
    %vm1089 = vmxor %vm993, 1
    %vm1090 = vmxor %vm994, 1
    %vm1091 = vmxor %vm995, 1
    %vm1092 = vmxor %vm996, 1
    %vm1093 = vmxor %vm997, 1
    %vm1094 = vmxor %vm998, 1
    %vm1095 = vmxor %vm999, 1
    %vm1096 = vmand %vm1064, %vm1080
    %vm1097 = vmand %vm1065, %vm1081
    %vm1098 = vmand %vm1066, %vm1082
    %vm1099 = vmand %vm1067, %vm1083
    %vm1100 = vmand %vm1068, %vm1084
    %vm1101 = vmand %vm1069, %vm1085
    %vm1102 = vmand %vm1070, %vm1086
    %vm1103 = vmand %vm1071, %vm1087
    %vm1104 = vmand %vm1072, %vm1088
    %vm1105 = vmand %vm1073, %vm1089
    %vm1106 = vmand %vm1074, %vm1090
    %vm1107 = vmand %vm1075, %vm1091
    %vm1108 = vmand %vm1076, %vm1092
    %vm1109 = vmand %vm1077, %vm1093
    %vm1110 = vmand %vm1078, %vm1094
    %vm1111 = vmand %vm1079, %vm1095
    %v1112 = vsel %vm1096, -1.0, 0.0
    %v1113 = vsel %vm1097, -1.0, 0.0
    %v1114 = vsel %vm1098, -1.0, 0.0
    %v1115 = vsel %vm1099, -1.0, 0.0
    %v1116 = vsel %vm1100, -1.0, 0.0
    %v1117 = vsel %vm1101, -1.0, 0.0
    %v1118 = vsel %vm1102, -1.0, 0.0
    %v1119 = vsel %vm1103, -1.0, 0.0
    %v1120 = vsel %vm1104, -1.0, 0.0
    %v1121 = vsel %vm1105, -1.0, 0.0
    %v1122 = vsel %vm1106, -1.0, 0.0
    %v1123 = vsel %vm1107, -1.0, 0.0
    %v1124 = vsel %vm1108, -1.0, 0.0
    %v1125 = vsel %vm1109, -1.0, 0.0
    %v1126 = vsel %vm1110, -1.0, 0.0
    %v1127 = vsel %vm1111, -1.0, 0.0
    %v1128 = vsel %vm1032, 1.0, %v1112
    %v1129 = vsel %vm1033, 1.0, %v1113
    %v1130 = vsel %vm1034, 1.0, %v1114
    %v1131 = vsel %vm1035, 1.0, %v1115
    %v1132 = vsel %vm1036, 1.0, %v1116
    %v1133 = vsel %vm1037, 1.0, %v1117
    %v1134 = vsel %vm1038, 1.0, %v1118
    %v1135 = vsel %vm1039, 1.0, %v1119
    %v1136 = vsel %vm1040, 1.0, %v1120
    %v1137 = vsel %vm1041, 1.0, %v1121
    %v1138 = vsel %vm1042, 1.0, %v1122
    %v1139 = vsel %vm1043, 1.0, %v1123
    %v1140 = vsel %vm1044, 1.0, %v1124
    %v1141 = vsel %vm1045, 1.0, %v1125
    %v1142 = vsel %vm1046, 1.0, %v1126
    %v1143 = vsel %vm1047, 1.0, %v1127
    %v1144 = vld [vmem:[#allocation7] sm:$0xff]
    %v1145 = vld [vmem:[#allocation7 + $0x8] sm:$0xff]
    %v1146 = vld [vmem:[#allocation7 + $0x10] sm:$0xff]
    %v1147 = vld [vmem:[#allocation7 + $0x18] sm:$0xff]
    %v1148 = vld [vmem:[#allocation7 + $0x20] sm:$0xff]
    %v1149 = vld [vmem:[#allocation7 + $0x28] sm:$0xff]
    %v1150 = vld [vmem:[#allocation7 + $0x30] sm:$0xff]
    %v1151 = vld [vmem:[#allocation7 + $0x38] sm:$0xff]
    %v1152 = vld [vmem:[#allocation7 + $0x40] sm:$0xff]
    %v1153 = vld [vmem:[#allocation7 + $0x48] sm:$0xff]
    %v1154 = vld [vmem:[#allocation7 + $0x50] sm:$0xff]
    %v1155 = vld [vmem:[#allocation7 + $0x58] sm:$0xff]
    %v1156 = vld [vmem:[#allocation7 + $0x60] sm:$0xff]
    %v1157 = vld [vmem:[#allocation7 + $0x68] sm:$0xff]
    %v1158 = vld [vmem:[#allocation7 + $0x70] sm:$0xff]
    %v1159 = vld [vmem:[#allocation7 + $0x78] sm:$0xff]
    %s1160 = scalar_lea.vmem [#allocation7], 128
    %v1161 = vld [vmem:[%s1160] sm:$0xff]
    %v1162 = vld [vmem:[%s1160 + $0x8] sm:$0xff]
    %v1163 = vld [vmem:[%s1160 + $0x10] sm:$0xff]
    %v1164 = vld [vmem:[%s1160 + $0x18] sm:$0xff]
    %v1165 = vld [vmem:[%s1160 + $0x20] sm:$0xff]
    %v1166 = vld [vmem:[%s1160 + $0x28] sm:$0xff]
    %v1167 = vld [vmem:[%s1160 + $0x30] sm:$0xff]
    %v1168 = vld [vmem:[%s1160 + $0x38] sm:$0xff]
    %v1169 = vld [vmem:[%s1160 + $0x40] sm:$0xff]
    %v1170 = vld [vmem:[%s1160 + $0x48] sm:$0xff]
    %v1171 = vld [vmem:[%s1160 + $0x50] sm:$0xff]
    %v1172 = vld [vmem:[%s1160 + $0x58] sm:$0xff]
    %v1173 = vld [vmem:[%s1160 + $0x60] sm:$0xff]
    %v1174 = vld [vmem:[%s1160 + $0x68] sm:$0xff]
    %v1175 = vld [vmem:[%s1160 + $0x70] sm:$0xff]
    %v1176 = vld [vmem:[%s1160 + $0x78] sm:$0xff]
    %s1177 = scalar_lea.vmem [#allocation7], 256
    %v1178 = vld [vmem:[%s1177] sm:$0xff]
    %v1179 = vld [vmem:[%s1177 + $0x8] sm:$0xff]
    %v1180 = vld [vmem:[%s1177 + $0x10] sm:$0xff]
    %v1181 = vld [vmem:[%s1177 + $0x18] sm:$0xff]
    %v1182 = vld [vmem:[%s1177 + $0x20] sm:$0xff]
    %v1183 = vld [vmem:[%s1177 + $0x28] sm:$0xff]
    %v1184 = vld [vmem:[%s1177 + $0x30] sm:$0xff]
    %v1185 = vld [vmem:[%s1177 + $0x38] sm:$0xff]
    %v1186 = vld [vmem:[%s1177 + $0x40] sm:$0xff]
    %v1187 = vld [vmem:[%s1177 + $0x48] sm:$0xff]
    %v1188 = vld [vmem:[%s1177 + $0x50] sm:$0xff]
    %v1189 = vld [vmem:[%s1177 + $0x58] sm:$0xff]
    %v1190 = vld [vmem:[%s1177 + $0x60] sm:$0xff]
    %v1191 = vld [vmem:[%s1177 + $0x68] sm:$0xff]
    %v1192 = vld [vmem:[%s1177 + $0x70] sm:$0xff]
    %v1193 = vld [vmem:[%s1177 + $0x78] sm:$0xff]
    %s1194 = scalar_lea.vmem [#allocation7], 384
    %v1195 = vld [vmem:[%s1194] sm:$0xff]
    %v1196 = vld [vmem:[%s1194 + $0x8] sm:$0xff]
    %v1197 = vld [vmem:[%s1194 + $0x10] sm:$0xff]
    %v1198 = vld [vmem:[%s1194 + $0x18] sm:$0xff]
    %v1199 = vld [vmem:[%s1194 + $0x20] sm:$0xff]
    %v1200 = vld [vmem:[%s1194 + $0x28] sm:$0xff]
    %v1201 = vld [vmem:[%s1194 + $0x30] sm:$0xff]
    %v1202 = vld [vmem:[%s1194 + $0x38] sm:$0xff]
    %v1203 = vld [vmem:[%s1194 + $0x40] sm:$0xff]
    %v1204 = vld [vmem:[%s1194 + $0x48] sm:$0xff]
    %v1205 = vld [vmem:[%s1194 + $0x50] sm:$0xff]
    %v1206 = vld [vmem:[%s1194 + $0x58] sm:$0xff]
    %v1207 = vld [vmem:[%s1194 + $0x60] sm:$0xff]
    %v1208 = vld [vmem:[%s1194 + $0x68] sm:$0xff]
    %v1209 = vld [vmem:[%s1194 + $0x70] sm:$0xff]
    %v1210 = vld [vmem:[%s1194 + $0x78] sm:$0xff]
    %v1211 = vlaneseq
    %v1212 = vshrl.u32 %v1211, 7
    %v1213 = vsub.s32 0, %v1212
    %v1214 = vrot.slane %v93, %v1213
    %1215 = vmatprep.subr.mxu0 0.0
    %1216 = vmatpush1.msra.mxu0 %v1144
    %1217 = vmatprep.subr.mxu0 0.0
    %1218 = vmatpush1.msra.mxu0 %v1145
    %1219 = vmatprep.subr.mxu0 0.0
    %1220 = vmatpush1.msra.mxu0 %v1146
    %1221 = vmatprep.subr.mxu0 0.0
    %1222 = vmatpush1.msra.mxu0 %v1147
    %1223 = vmatprep.subr.mxu0 0.0
    %1224 = vmatpush1.msra.mxu0 %v1148
    %1225 = vmatprep.subr.mxu0 0.0
    %1226 = vmatpush1.msra.mxu0 %v1149
    %1227 = vmatprep.subr.mxu0 0.0
    %1228 = vmatpush1.msra.mxu0 %v1150
    %1229 = vmatprep.subr.mxu0 0.0
    %1230 = vmatpush1.msra.mxu0 %v1151
    %1231 = vmatprep.subr.mxu0 0.0
    %1232 = vmatpush1.msra.mxu0 %v1152
    %1233 = vmatprep.subr.mxu0 0.0
    %1234 = vmatpush1.msra.mxu0 %v1153
    %1235 = vmatprep.subr.mxu0 0.0
    %1236 = vmatpush1.msra.mxu0 %v1154
    %1237 = vmatprep.subr.mxu0 0.0
    %1238 = vmatpush1.msra.mxu0 %v1155
    %1239 = vmatprep.subr.mxu0 0.0
    %1240 = vmatpush1.msra.mxu0 %v1156
    %1241 = vmatprep.subr.mxu0 0.0
    %1242 = vmatpush1.msra.mxu0 %v1157
    %1243 = vmatprep.subr.mxu0 0.0
    %1244 = vmatpush1.msra.mxu0 %v1158
    %1245 = vmatprep.subr.mxu0 0.0
    %1246 = vmatpush1.msra.mxu0 %v1159
    %1247 = vmatprep.subr.mxu0 0.0
    %1248 = vmatpush1.msra.mxu0 0.0
    %1249 = vmatprep.subr.mxu0 0.0
    %1250 = vmatpush1.msra.mxu0 0.0
    %1251 = vmatprep.subr.mxu0 0.0
    %1252 = vmatpush1.msra.mxu0 0.0
    %1253 = vmatprep.subr.mxu0 0.0
    %1254 = vmatpush1.msra.mxu0 0.0
    %1255 = vmatprep.subr.mxu0 0.0
    %1256 = vmatpush1.msra.mxu0 0.0
    %1257 = vmatprep.subr.mxu0 0.0
    %1258 = vmatpush1.msra.mxu0 0.0
    %1259 = vmatprep.subr.mxu0 0.0
    %1260 = vmatpush1.msra.mxu0 0.0
    %1261 = vmatprep.subr.mxu0 0.0
    %1262 = vmatpush1.msra.mxu0 0.0
    %1263 = vmatprep.subr.mxu0 0.0
    %1264 = vmatpush1.msra.mxu0 0.0
    %1265 = vmatprep.subr.mxu0 0.0
    %1266 = vmatpush1.msra.mxu0 0.0
    %1267 = vmatprep.subr.mxu0 0.0
    %1268 = vmatpush1.msra.mxu0 0.0
    %1269 = vmatprep.subr.mxu0 0.0
    %1270 = vmatpush1.msra.mxu0 0.0
    %1271 = vmatprep.subr.mxu0 0.0
    %1272 = vmatpush1.msra.mxu0 0.0
    %1273 = vmatprep.subr.mxu0 0.0
    %1274 = vmatpush1.msra.mxu0 0.0
    %1275 = vmatprep.subr.mxu0 0.0
    %1276 = vmatpush1.msra.mxu0 0.0
    %1277 = vmatprep.subr.mxu0 0.0
    %1278 = vmatpush1.msra.mxu0 0.0
    %1279 = vmatprep.mubr.f32.mxu0 0.0
    %1280 = vmatmul.mubr.f32.gmra.mrb[0].mxu0 %v89
    %v1281 = vpop.f32.mrb[0].mxu0
    %v1282 = vadd.f32 %v1214, %v1281
    %v1283 = vpop.f32.mrb[0].mxu0
    %1284 = vmatprep.mubr.f32.mxu0 0.0
    %1285 = vmatmul.mubr.f32.gmra.mrb[0].mxu0 %v90
    %v1286 = vpop.f32.mrb[0].mxu0
    %v1287 = vadd.f32 %v1214, %v1286
    %v1288 = vpop.f32.mrb[0].mxu0
    %1289 = vmatprep.mubr.f32.mxu0 0.0
    %1290 = vmatmul.mubr.f32.gmra.mrb[0].mxu0 %v91
    %v1291 = vpop.f32.mrb[0].mxu0
    %v1292 = vadd.f32 %v1214, %v1291
    %v1293 = vpop.f32.mrb[0].mxu0
    %1294 = vmatprep.mubr.f32.mxu0 0.0
    %1295 = vmatmul.mubr.f32.gmra.mrb[0].mxu0 %v92
    %v1296 = vpop.f32.mrb[0].mxu0
    %v1297 = vadd.f32 %v1214, %v1296
    %v1298 = vpop.f32.mrb[0].mxu0
    %1299 = vdwg.mxu0
    %1300 = vmatprep.subr.mxu0 0.0
    %1301 = vmatpush1.msra.mxu0 %v1128
    %1302 = vmatprep.subr.mxu0 0.0
    %1303 = vmatpush1.msra.mxu0 %v1129
    %1304 = vmatprep.subr.mxu0 0.0
    %1305 = vmatpush1.msra.mxu0 %v1130
    %1306 = vmatprep.subr.mxu0 0.0
    %1307 = vmatpush1.msra.mxu0 %v1131
    %1308 = vmatprep.subr.mxu0 0.0
    %1309 = vmatpush1.msra.mxu0 %v1132
    %1310 = vmatprep.subr.mxu0 0.0
    %1311 = vmatpush1.msra.mxu0 %v1133
    %1312 = vmatprep.subr.mxu0 0.0
    %1313 = vmatpush1.msra.mxu0 %v1134
    %1314 = vmatprep.subr.mxu0 0.0
    %1315 = vmatpush1.msra.mxu0 %v1135
    %1316 = vmatprep.subr.mxu0 0.0
    %1317 = vmatpush1.msra.mxu0 %v1136
    %1318 = vmatprep.subr.mxu0 0.0
    %1319 = vmatpush1.msra.mxu0 %v1137
    %1320 = vmatprep.subr.mxu0 0.0
    %1321 = vmatpush1.msra.mxu0 %v1138
    %1322 = vmatprep.subr.mxu0 0.0
    %1323 = vmatpush1.msra.mxu0 %v1139
    %1324 = vmatprep.subr.mxu0 0.0
    %1325 = vmatpush1.msra.mxu0 %v1140
    %1326 = vmatprep.subr.mxu0 0.0
    %1327 = vmatpush1.msra.mxu0 %v1141
    %1328 = vmatprep.subr.mxu0 0.0
    %1329 = vmatpush1.msra.mxu0 %v1142
    %1330 = vmatprep.subr.mxu0 0.0
    %1331 = vmatpush1.msra.mxu0 %v1143
    %1332 = vmatprep.subr.mxu0 0.0
    %1333 = vmatpush1.msra.mxu0 0.0
    %1334 = vmatprep.subr.mxu0 0.0
    %1335 = vmatpush1.msra.mxu0 0.0
    %1336 = vmatprep.subr.mxu0 0.0
    %1337 = vmatpush1.msra.mxu0 0.0
    %1338 = vmatprep.subr.mxu0 0.0
    %1339 = vmatpush1.msra.mxu0 0.0
    %1340 = vmatprep.subr.mxu0 0.0
    %1341 = vmatpush1.msra.mxu0 0.0
    %1342 = vmatprep.subr.mxu0 0.0
    %1343 = vmatpush1.msra.mxu0 0.0
    %1344 = vmatprep.subr.mxu0 0.0
    %1345 = vmatpush1.msra.mxu0 0.0
    %1346 = vmatprep.subr.mxu0 0.0
    %1347 = vmatpush1.msra.mxu0 0.0
    %1348 = vmatprep.subr.mxu0 0.0
    %1349 = vmatpush1.msra.mxu0 0.0
    %1350 = vmatprep.subr.mxu0 0.0
    %1351 = vmatpush1.msra.mxu0 0.0
    %1352 = vmatprep.subr.mxu0 0.0
    %1353 = vmatpush1.msra.mxu0 0.0
    %1354 = vmatprep.subr.mxu0 0.0
    %1355 = vmatpush1.msra.mxu0 0.0
    %1356 = vmatprep.subr.mxu0 0.0
    %1357 = vmatpush1.msra.mxu0 0.0
    %1358 = vmatprep.subr.mxu0 0.0
    %1359 = vmatpush1.msra.mxu0 0.0
    %1360 = vmatprep.subr.mxu0 0.0
    %1361 = vmatpush1.msra.mxu0 0.0
    %1362 = vmatprep.subr.mxu0 0.0
    %1363 = vmatpush1.msra.mxu0 0.0
    %1364 = vmatprep.mubr.f32.mxu0 0.0
    %1365 = vmatmul.mubr.f32.gmra.mrb[0].mxu0 %v1282
    %v1366 = vpop.f32.mrb[0].mxu0
    %v1367 = vadd.f32 0.0, %v1366
    %v1368 = vpop.f32.mrb[0].mxu0
    %1369 = vmatprep.mubr.f32.mxu0 0.0
    %1370 = vmatmul.mubr.f32.gmra.mrb[0].mxu0 %v1287
    %v1371 = vpop.f32.mrb[0].mxu0
    %v1372 = vadd.f32 0.0, %v1371
    %v1373 = vpop.f32.mrb[0].mxu0
    %1374 = vmatprep.mubr.f32.mxu0 0.0
    %1375 = vmatmul.mubr.f32.gmra.mrb[0].mxu0 %v1292
    %v1376 = vpop.f32.mrb[0].mxu0
    %v1377 = vadd.f32 0.0, %v1376
    %v1378 = vpop.f32.mrb[0].mxu0
    %1379 = vmatprep.mubr.f32.mxu0 0.0
    %1380 = vmatmul.mubr.f32.gmra.mrb[0].mxu0 %v1297
    %v1381 = vpop.f32.mrb[0].mxu0
    %v1382 = vadd.f32 0.0, %v1381
    %v1383 = vpop.f32.mrb[0].mxu0
    %1384 = vdwg.mxu0
    %v1385 = vmul.f32 %v1282, %v230
    %v1386 = vmul.f32 %v1287, %v333
    %v1387 = vmul.f32 %v1292, %v436
    %v1388 = vmul.f32 %v1297, %v539
    %v1389 = vmul.f32 %v1367, %v643
    %v1390 = vmul.f32 %v1372, %v747
    %v1391 = vmul.f32 %v1377, %v851
    %v1392 = vmul.f32 %v1382, %v955
    %v1393 = vadd.f32 %v1385, %v1389
    %v1394 = vadd.f32 %v1386, %v1390
    %v1395 = vadd.f32 %v1387, %v1391
    %v1396 = vadd.f32 %v1388, %v1392
    %v1397 = vlaneseq
    %v1398 = vshrl.u32 %v1397, 7
    %v1399 = vsub.s32 1, %v1398
    %v1400 = vrot.slane %v93, %v1399
    %1401 = vmatprep.subr.mxu0 0.0
    %1402 = vmatpush1.msra.mxu0 %v1161
    %1403 = vmatprep.subr.mxu0 0.0
    %1404 = vmatpush1.msra.mxu0 %v1162
    %1405 = vmatprep.subr.mxu0 0.0
    %1406 = vmatpush1.msra.mxu0 %v1163
    %1407 = vmatprep.subr.mxu0 0.0
    %1408 = vmatpush1.msra.mxu0 %v1164
    %1409 = vmatprep.subr.mxu0 0.0
    %1410 = vmatpush1.msra.mxu0 %v1165
    %1411 = vmatprep.subr.mxu0 0.0
    %1412 = vmatpush1.msra.mxu0 %v1166
    %1413 = vmatprep.subr.mxu0 0.0
    %1414 = vmatpush1.msra.mxu0 %v1167
    %1415 = vmatprep.subr.mxu0 0.0
    %1416 = vmatpush1.msra.mxu0 %v1168
    %1417 = vmatprep.subr.mxu0 0.0
    %1418 = vmatpush1.msra.mxu0 %v1169
    %1419 = vmatprep.subr.mxu0 0.0
    %1420 = vmatpush1.msra.mxu0 %v1170
    %1421 = vmatprep.subr.mxu0 0.0
    %1422 = vmatpush1.msra.mxu0 %v1171
    %1423 = vmatprep.subr.mxu0 0.0
    %1424 = vmatpush1.msra.mxu0 %v1172
    %1425 = vmatprep.subr.mxu0 0.0
    %1426 = vmatpush1.msra.mxu0 %v1173
    %1427 = vmatprep.subr.mxu0 0.0
    %1428 = vmatpush1.msra.mxu0 %v1174
    %1429 = vmatprep.subr.mxu0 0.0
    %1430 = vmatpush1.msra.mxu0 %v1175
    %1431 = vmatprep.subr.mxu0 0.0
    %1432 = vmatpush1.msra.mxu0 %v1176
    %1433 = vmatprep.subr.mxu0 0.0
    %1434 = vmatpush1.msra.mxu0 0.0
    %1435 = vmatprep.subr.mxu0 0.0
    %1436 = vmatpush1.msra.mxu0 0.0
    %1437 = vmatprep.subr.mxu0 0.0
    %1438 = vmatpush1.msra.mxu0 0.0
    %1439 = vmatprep.subr.mxu0 0.0
    %1440 = vmatpush1.msra.mxu0 0.0
    %1441 = vmatprep.subr.mxu0 0.0
    %1442 = vmatpush1.msra.mxu0 0.0
    %1443 = vmatprep.subr.mxu0 0.0
    %1444 = vmatpush1.msra.mxu0 0.0
    %1445 = vmatprep.subr.mxu0 0.0
    %1446 = vmatpush1.msra.mxu0 0.0
    %1447 = vmatprep.subr.mxu0 0.0
    %1448 = vmatpush1.msra.mxu0 0.0
    %1449 = vmatprep.subr.mxu0 0.0
    %1450 = vmatpush1.msra.mxu0 0.0
    %1451 = vmatprep.subr.mxu0 0.0
    %1452 = vmatpush1.msra.mxu0 0.0
    %1453 = vmatprep.subr.mxu0 0.0
    %1454 = vmatpush1.msra.mxu0 0.0
    %1455 = vmatprep.subr.mxu0 0.0
    %1456 = vmatpush1.msra.mxu0 0.0
    %1457 = vmatprep.subr.mxu0 0.0
    %1458 = vmatpush1.msra.mxu0 0.0
    %1459 = vmatprep.subr.mxu0 0.0
    %1460 = vmatpush1.msra.mxu0 0.0
    %1461 = vmatprep.subr.mxu0 0.0
    %1462 = vmatpush1.msra.mxu0 0.0
    %1463 = vmatprep.subr.mxu0 0.0
    %1464 = vmatpush1.msra.mxu0 0.0
    %1465 = vmatprep.mubr.f32.mxu0 0.0
    %1466 = vmatmul.mubr.f32.gmra.mrb[0].mxu0 %v89
    %v1467 = vpop.f32.mrb[0].mxu0
    %v1468 = vadd.f32 %v1400, %v1467
    %v1469 = vpop.f32.mrb[0].mxu0
    %1470 = vmatprep.mubr.f32.mxu0 0.0
    %1471 = vmatmul.mubr.f32.gmra.mrb[0].mxu0 %v90
    %v1472 = vpop.f32.mrb[0].mxu0
    %v1473 = vadd.f32 %v1400, %v1472
    %v1474 = vpop.f32.mrb[0].mxu0
    %1475 = vmatprep.mubr.f32.mxu0 0.0
    %1476 = vmatmul.mubr.f32.gmra.mrb[0].mxu0 %v91
    %v1477 = vpop.f32.mrb[0].mxu0
    %v1478 = vadd.f32 %v1400, %v1477
    %v1479 = vpop.f32.mrb[0].mxu0
    %1480 = vmatprep.mubr.f32.mxu0 0.0
    %1481 = vmatmul.mubr.f32.gmra.mrb[0].mxu0 %v92
    %v1482 = vpop.f32.mrb[0].mxu0
    %v1483 = vadd.f32 %v1400, %v1482
    %v1484 = vpop.f32.mrb[0].mxu0
    %1485 = vdwg.mxu0
    %1486 = vmatprep.subr.mxu0 0.0
    %1487 = vmatpush1.msra.mxu0 %v1128
    %1488 = vmatprep.subr.mxu0 0.0
    %1489 = vmatpush1.msra.mxu0 %v1129
    %1490 = vmatprep.subr.mxu0 0.0
    %1491 = vmatpush1.msra.mxu0 %v1130
    %1492 = vmatprep.subr.mxu0 0.0
    %1493 = vmatpush1.msra.mxu0 %v1131
    %1494 = vmatprep.subr.mxu0 0.0
    %1495 = vmatpush1.msra.mxu0 %v1132
    %1496 = vmatprep.subr.mxu0 0.0
    %1497 = vmatpush1.msra.mxu0 %v1133
    %1498 = vmatprep.subr.mxu0 0.0
    %1499 = vmatpush1.msra.mxu0 %v1134
    %1500 = vmatprep.subr.mxu0 0.0
    %1501 = vmatpush1.msra.mxu0 %v1135
    %1502 = vmatprep.subr.mxu0 0.0
    %1503 = vmatpush1.msra.mxu0 %v1136
    %1504 = vmatprep.subr.mxu0 0.0
    %1505 = vmatpush1.msra.mxu0 %v1137
    %1506 = vmatprep.subr.mxu0 0.0
    %1507 = vmatpush1.msra.mxu0 %v1138
    %1508 = vmatprep.subr.mxu0 0.0
    %1509 = vmatpush1.msra.mxu0 %v1139
    %1510 = vmatprep.subr.mxu0 0.0
    %1511 = vmatpush1.msra.mxu0 %v1140
    %1512 = vmatprep.subr.mxu0 0.0
    %1513 = vmatpush1.msra.mxu0 %v1141
    %1514 = vmatprep.subr.mxu0 0.0
    %1515 = vmatpush1.msra.mxu0 %v1142
    %1516 = vmatprep.subr.mxu0 0.0
    %1517 = vmatpush1.msra.mxu0 %v1143
    %1518 = vmatprep.subr.mxu0 0.0
    %1519 = vmatpush1.msra.mxu0 0.0
    %1520 = vmatprep.subr.mxu0 0.0
    %1521 = vmatpush1.msra.mxu0 0.0
    %1522 = vmatprep.subr.mxu0 0.0
    %1523 = vmatpush1.msra.mxu0 0.0
    %1524 = vmatprep.subr.mxu0 0.0
    %1525 = vmatpush1.msra.mxu0 0.0
    %1526 = vmatprep.subr.mxu0 0.0
    %1527 = vmatpush1.msra.mxu0 0.0
    %1528 = vmatprep.subr.mxu0 0.0
    %1529 = vmatpush1.msra.mxu0 0.0
    %1530 = vmatprep.subr.mxu0 0.0
    %1531 = vmatpush1.msra.mxu0 0.0
    %1532 = vmatprep.subr.mxu0 0.0
    %1533 = vmatpush1.msra.mxu0 0.0
    %1534 = vmatprep.subr.mxu0 0.0
    %1535 = vmatpush1.msra.mxu0 0.0
    %1536 = vmatprep.subr.mxu0 0.0
    %1537 = vmatpush1.msra.mxu0 0.0
    %1538 = vmatprep.subr.mxu0 0.0
    %1539 = vmatpush1.msra.mxu0 0.0
    %1540 = vmatprep.subr.mxu0 0.0
    %1541 = vmatpush1.msra.mxu0 0.0
    %1542 = vmatprep.subr.mxu0 0.0
    %1543 = vmatpush1.msra.mxu0 0.0
    %1544 = vmatprep.subr.mxu0 0.0
    %1545 = vmatpush1.msra.mxu0 0.0
    %1546 = vmatprep.subr.mxu0 0.0
    %1547 = vmatpush1.msra.mxu0 0.0
    %1548 = vmatprep.subr.mxu0 0.0
    %1549 = vmatpush1.msra.mxu0 0.0
    %1550 = vmatprep.mubr.f32.mxu0 0.0
    %1551 = vmatmul.mubr.f32.gmra.mrb[0].mxu0 %v1468
    %v1552 = vpop.f32.mrb[0].mxu0
    %v1553 = vadd.f32 0.0, %v1552
    %v1554 = vpop.f32.mrb[0].mxu0
    %1555 = vmatprep.mubr.f32.mxu0 0.0
    %1556 = vmatmul.mubr.f32.gmra.mrb[0].mxu0 %v1473
    %v1557 = vpop.f32.mrb[0].mxu0
    %v1558 = vadd.f32 0.0, %v1557
    %v1559 = vpop.f32.mrb[0].mxu0
    %1560 = vmatprep.mubr.f32.mxu0 0.0
    %1561 = vmatmul.mubr.f32.gmra.mrb[0].mxu0 %v1478
    %v1562 = vpop.f32.mrb[0].mxu0
    %v1563 = vadd.f32 0.0, %v1562
    %v1564 = vpop.f32.mrb[0].mxu0
    %1565 = vmatprep.mubr.f32.mxu0 0.0
    %1566 = vmatmul.mubr.f32.gmra.mrb[0].mxu0 %v1483
    %v1567 = vpop.f32.mrb[0].mxu0
    %v1568 = vadd.f32 0.0, %v1567
    %v1569 = vpop.f32.mrb[0].mxu0
    %1570 = vdwg.mxu0
    %v1571 = vmul.f32 %v1468, %v230
    %v1572 = vmul.f32 %v1473, %v333
    %v1573 = vmul.f32 %v1478, %v436
    %v1574 = vmul.f32 %v1483, %v539
    %v1575 = vmul.f32 %v1553, %v643
    %v1576 = vmul.f32 %v1558, %v747
    %v1577 = vmul.f32 %v1563, %v851
    %v1578 = vmul.f32 %v1568, %v955
    %v1579 = vadd.f32 %v1571, %v1575
    %v1580 = vadd.f32 %v1572, %v1576
    %v1581 = vadd.f32 %v1573, %v1577
    %v1582 = vadd.f32 %v1574, %v1578
    %v1583 = vlaneseq
    %v1584 = vshrl.u32 %v1583, 7
    %v1585 = vsub.s32 2, %v1584
    %v1586 = vrot.slane %v93, %v1585
    %1587 = vmatprep.subr.mxu0 0.0
    %1588 = vmatpush1.msra.mxu0 %v1178
    %1589 = vmatprep.subr.mxu0 0.0
    %1590 = vmatpush1.msra.mxu0 %v1179
    %1591 = vmatprep.subr.mxu0 0.0
    %1592 = vmatpush1.msra.mxu0 %v1180
    %1593 = vmatprep.subr.mxu0 0.0
    %1594 = vmatpush1.msra.mxu0 %v1181
    %1595 = vmatprep.subr.mxu0 0.0
    %1596 = vmatpush1.msra.mxu0 %v1182
    %1597 = vmatprep.subr.mxu0 0.0
    %1598 = vmatpush1.msra.mxu0 %v1183
    %1599 = vmatprep.subr.mxu0 0.0
    %1600 = vmatpush1.msra.mxu0 %v1184
    %1601 = vmatprep.subr.mxu0 0.0
    %1602 = vmatpush1.msra.mxu0 %v1185
    %1603 = vmatprep.subr.mxu0 0.0
    %1604 = vmatpush1.msra.mxu0 %v1186
    %1605 = vmatprep.subr.mxu0 0.0
    %1606 = vmatpush1.msra.mxu0 %v1187
    %1607 = vmatprep.subr.mxu0 0.0
    %1608 = vmatpush1.msra.mxu0 %v1188
    %1609 = vmatprep.subr.mxu0 0.0
    %1610 = vmatpush1.msra.mxu0 %v1189
    %1611 = vmatprep.subr.mxu0 0.0
    %1612 = vmatpush1.msra.mxu0 %v1190
    %1613 = vmatprep.subr.mxu0 0.0
    %1614 = vmatpush1.msra.mxu0 %v1191
    %1615 = vmatprep.subr.mxu0 0.0
    %1616 = vmatpush1.msra.mxu0 %v1192
    %1617 = vmatprep.subr.mxu0 0.0
    %1618 = vmatpush1.msra.mxu0 %v1193
    %1619 = vmatprep.subr.mxu0 0.0
    %1620 = vmatpush1.msra.mxu0 0.0
    %1621 = vmatprep.subr.mxu0 0.0
    %1622 = vmatpush1.msra.mxu0 0.0
    %1623 = vmatprep.subr.mxu0 0.0
    %1624 = vmatpush1.msra.mxu0 0.0
    %1625 = vmatprep.subr.mxu0 0.0
    %1626 = vmatpush1.msra.mxu0 0.0
    %1627 = vmatprep.subr.mxu0 0.0
    %1628 = vmatpush1.msra.mxu0 0.0
    %1629 = vmatprep.subr.mxu0 0.0
    %1630 = vmatpush1.msra.mxu0 0.0
    %1631 = vmatprep.subr.mxu0 0.0
    %1632 = vmatpush1.msra.mxu0 0.0
    %1633 = vmatprep.subr.mxu0 0.0
    %1634 = vmatpush1.msra.mxu0 0.0
    %1635 = vmatprep.subr.mxu0 0.0
    %1636 = vmatpush1.msra.mxu0 0.0
    %1637 = vmatprep.subr.mxu0 0.0
    %1638 = vmatpush1.msra.mxu0 0.0
    %1639 = vmatprep.subr.mxu0 0.0
    %1640 = vmatpush1.msra.mxu0 0.0
    %1641 = vmatprep.subr.mxu0 0.0
    %1642 = vmatpush1.msra.mxu0 0.0
    %1643 = vmatprep.subr.mxu0 0.0
    %1644 = vmatpush1.msra.mxu0 0.0
    %1645 = vmatprep.subr.mxu0 0.0
    %1646 = vmatpush1.msra.mxu0 0.0
    %1647 = vmatprep.subr.mxu0 0.0
    %1648 = vmatpush1.msra.mxu0 0.0
    %1649 = vmatprep.subr.mxu0 0.0
    %1650 = vmatpush1.msra.mxu0 0.0
    %1651 = vmatprep.mubr.f32.mxu0 0.0
    %1652 = vmatmul.mubr.f32.gmra.mrb[0].mxu0 %v89
    %v1653 = vpop.f32.mrb[0].mxu0
    %v1654 = vadd.f32 %v1586, %v1653
    %v1655 = vpop.f32.mrb[0].mxu0
    %1656 = vmatprep.mubr.f32.mxu0 0.0
    %1657 = vmatmul.mubr.f32.gmra.mrb[0].mxu0 %v90
    %v1658 = vpop.f32.mrb[0].mxu0
    %v1659 = vadd.f32 %v1586, %v1658
    %v1660 = vpop.f32.mrb[0].mxu0
    %1661 = vmatprep.mubr.f32.mxu0 0.0
    %1662 = vmatmul.mubr.f32.gmra.mrb[0].mxu0 %v91
    %v1663 = vpop.f32.mrb[0].mxu0
    %v1664 = vadd.f32 %v1586, %v1663
    %v1665 = vpop.f32.mrb[0].mxu0
    %1666 = vmatprep.mubr.f32.mxu0 0.0
    %1667 = vmatmul.mubr.f32.gmra.mrb[0].mxu0 %v92
    %v1668 = vpop.f32.mrb[0].mxu0
    %v1669 = vadd.f32 %v1586, %v1668
    %v1670 = vpop.f32.mrb[0].mxu0
    %1671 = vdwg.mxu0
    %vm1672 = vcmask 261120
    %v1674 = vsel %vm1672, %v1393, 0
    %v1677 = vsel %vm1672, %v1394, 0
    %v1680 = vsel %vm1672, %v1395, 0
    %v1683 = vsel %vm1672, %v1396, 0
    %v1686 = vsel %vm1672, %v1579, 0
    %v1689 = vsel %vm1672, %v1580, 0
    %v1692 = vsel %vm1672, %v1581, 0
    %v1695 = vsel %vm1672, %v1582, 0
    %1697 = vmatprep.subr.mxu0 0.0
    %1698 = vmatpush1.xpose.msra.mxu0 %v1686
    %1699 = vmatprep.subr.mxu0 0.0
    %1700 = vmatpush1.xpose.msra.mxu0 %v1689
    %1701 = vmatprep.subr.mxu0 0.0
    %1702 = vmatpush1.xpose.msra.mxu0 %v1692
    %1703 = vmatprep.subr.mxu0 0.0
    %1704 = vmatpush1.xpose.msra.mxu0 %v1695
    %1705 = vmatprep.subr.mxu0 0.0
    %1706 = vmatpush1.xpose.msra.mxu0 0.0
    %1707 = vmatprep.subr.mxu0 0.0
    %1708 = vmatpush1.xpose.msra.mxu0 0.0
    %1709 = vmatprep.subr.mxu0 0.0
    %1710 = vmatpush1.xpose.msra.mxu0 0.0
    %1711 = vmatprep.subr.mxu0 0.0
    %1712 = vmatpush1.xpose.msra.mxu0 0.0
    %1713 = vmatprep.subr.mxu0 0.0
    %1714 = vmatpush1.xpose.msra.mxu0 0.0
    %1715 = vmatprep.subr.mxu0 0.0
    %1716 = vmatpush1.xpose.msra.mxu0 0.0
    %1717 = vmatprep.subr.mxu0 0.0
    %1718 = vmatpush1.xpose.msra.mxu0 0.0
    %1719 = vmatprep.subr.mxu0 0.0
    %1720 = vmatpush1.xpose.msra.mxu0 0.0
    %1721 = vmatprep.subr.mxu0 0.0
    %1722 = vmatpush1.xpose.msra.mxu0 0.0
    %1723 = vmatprep.subr.mxu0 0.0
    %1724 = vmatpush1.xpose.msra.mxu0 0.0
    %1725 = vmatprep.subr.mxu0 0.0
    %1726 = vmatpush1.xpose.msra.mxu0 0.0
    %1727 = vmatprep.subr.mxu0 0.0
    %1728 = vmatpush1.xpose.msra.mxu0 0.0
    %1729 = vmatprep.subr.mxu0 0.0
    %1730 = vmatpush1.xpose.msra.mxu0 0.0
    %1731 = vmatprep.subr.mxu0 0.0
    %1732 = vmatpush1.xpose.msra.mxu0 0.0
    %1733 = vmatprep.subr.mxu0 0.0
    %1734 = vmatpush1.xpose.msra.mxu0 0.0
    %1735 = vmatprep.subr.mxu0 0.0
    %1736 = vmatpush1.xpose.msra.mxu0 0.0
    %1737 = vmatprep.subr.mxu0 0.0
    %1738 = vmatpush1.xpose.msra.mxu0 0.0
    %1739 = vmatprep.subr.mxu0 0.0
    %1740 = vmatpush1.xpose.msra.mxu0 0.0
    %1741 = vmatprep.subr.mxu0 0.0
    %1742 = vmatpush1.xpose.msra.mxu0 0.0
    %1743 = vmatprep.subr.mxu0 0.0
    %1744 = vmatpush1.xpose.msra.mxu0 0.0
    %1745 = vmatprep.subr.mxu0 0.0
    %1746 = vmatpush1.xpose.msra.mxu0 0.0
    %1747 = vmatprep.subr.mxu0 0.0
    %1748 = vmatpush1.xpose.msra.mxu0 0.0
    %1749 = vmatprep.subr.mxu0 0.0
    %1750 = vmatpush1.xpose.msra.mxu0 0.0
    %1751 = vmatprep.subr.mxu0 0.0
    %1752 = vmatpush1.xpose.msra.mxu0 0.0
    %1753 = vmatprep.subr.mxu0 0.0
    %1754 = vmatpush1.xpose.msra.mxu0 0.0
    %1755 = vmatprep.subr.mxu0 0.0
    %1756 = vmatpush1.xpose.msra.mxu0 0.0
    %1757 = vmatprep.subr.mxu0 0.0
    %1758 = vmatpush1.xpose.msra.mxu0 0.0
    %1759 = vmatprep.subr.mxu0 0.0
    %1760 = vmatpush1.xpose.msra.mxu0 0.0
    %1761 = vmatprep.mubr.f32.mxu0 0.0
    %1762 = vmatmul.mubr.f32.gmra.mrb[0].mxu0 %v1674
    %v1763 = vpop.f32.mrb[0].mxu0
    %v1764 = vadd.f32 0.0, %v1763
    %v1765 = vpop.f32.mrb[0].mxu0
    %1766 = vmatprep.mubr.f32.mxu0 0.0
    %1767 = vmatmul.mubr.f32.gmra.mrb[0].mxu0 %v1677
    %v1768 = vpop.f32.mrb[0].mxu0
    %v1769 = vadd.f32 0.0, %v1768
    %v1770 = vpop.f32.mrb[0].mxu0
    %1771 = vmatprep.mubr.f32.mxu0 0.0
    %1772 = vmatmul.mubr.f32.gmra.mrb[0].mxu0 %v1680
    %v1773 = vpop.f32.mrb[0].mxu0
    %v1774 = vadd.f32 0.0, %v1773
    %v1775 = vpop.f32.mrb[0].mxu0
    %1776 = vmatprep.mubr.f32.mxu0 0.0
    %1777 = vmatmul.mubr.f32.gmra.mrb[0].mxu0 %v1683
    %v1778 = vpop.f32.mrb[0].mxu0
    %v1779 = vadd.f32 0.0, %v1778
    %v1780 = vpop.f32.mrb[0].mxu0
    %1781 = vdwg.mxu0
    %v1782 = vmul.f32 %v1764, 0.088388346
    %v1783 = vmul.f32 %v1769, 0.088388346
    %v1784 = vmul.f32 %v1774, 0.088388346
    %v1785 = vmul.f32 %v1779, 0.088388346
    %v1786 = vsel %vm120, %v1782, -1e+30
    %v1787 = vsel %vm121, %v1783, -1e+30
    %v1788 = vsel %vm122, %v1784, -1e+30
    %v1789 = vsel %vm123, %v1785, -1e+30
    %v1790 = vsel %vm1672, %v1786, -inf
    %1791 = vmax.xlane.f32.xlu0 %v1790
    %v1792 = vpop.xlane.xlu0 %1791
    %v1793 = vsel %vm1672, %v1787, -inf
    %1794 = vmax.xlane.f32.xlu0 %v1793
    %v1795 = vpop.xlane.xlu0 %1794
    %v1796 = vsel %vm1672, %v1788, -inf
    %1797 = vmax.xlane.f32.xlu0 %v1796
    %v1798 = vpop.xlane.xlu0 %1797
    %v1799 = vsel %vm1672, %v1789, -inf
    %1800 = vmax.xlane.f32.xlu0 %v1799
    %v1801 = vpop.xlane.xlu0 %1800
    %v1802 = vsub.f32 %v1786, %v1792
    %v1803 = vsub.f32 %v1787, %v1795
    %v1804 = vsub.f32 %v1788, %v1798
    %v1805 = vsub.f32 %v1789, %v1801
    %v1806 = vmul.f32 %v1802, 1.442695
    %v1807 = vpow.pop %v1806
    %v1808 = vmul.f32 %v1803, 1.442695
    %v1809 = vpow.pop %v1808
    %v1810 = vmul.f32 %v1804, 1.442695
    %v1811 = vpow.pop %v1810
    %v1812 = vmul.f32 %v1805, 1.442695
    %v1813 = vpow.pop %v1812
    %v1814 = vsel %vm1672, %v1807, 0.0
    %1815 = vadd.xlane.f32.xlu0 %v1814
    %v1816 = vpop.xlane.xlu0 %1815
    %v1817 = vsel %vm1672, %v1809, 0.0
    %1818 = vadd.xlane.f32.xlu0 %v1817
    %v1819 = vpop.xlane.xlu0 %1818
    %v1820 = vsel %vm1672, %v1811, 0.0
    %1821 = vadd.xlane.f32.xlu0 %v1820
    %v1822 = vpop.xlane.xlu0 %1821
    %v1823 = vsel %vm1672, %v1813, 0.0
    %1824 = vadd.xlane.f32.xlu0 %v1823
    %v1825 = vpop.xlane.xlu0 %1824
    %v1826 = vrcp.pop %v1816
    %v1827 = vrcp.pop %v1819
    %v1828 = vrcp.pop %v1822
    %v1829 = vrcp.pop %v1825
    %v1830 = vmul.f32 %v1807, %v1826
    %v1831 = vmul.f32 %v1809, %v1827
    %v1832 = vmul.f32 %v1811, %v1828
    %v1833 = vmul.f32 %v1813, %v1829
    %v1835 = vsel %vm1672, %v1830, 0
    %v1838 = vsel %vm1672, %v1831, 0
    %v1841 = vsel %vm1672, %v1832, 0
    %v1844 = vsel %vm1672, %v1833, 0
    %1846 = vmatprep.subr.mxu0 0.0
    %1847 = vmatpush1.msra.mxu0 %v1654
    %1848 = vmatprep.subr.mxu0 0.0
    %1849 = vmatpush1.msra.mxu0 %v1659
    %1850 = vmatprep.subr.mxu0 0.0
    %1851 = vmatpush1.msra.mxu0 %v1664
    %1852 = vmatprep.subr.mxu0 0.0
    %1853 = vmatpush1.msra.mxu0 %v1669
    %1854 = vmatprep.subr.mxu0 0.0
    %1855 = vmatpush1.msra.mxu0 0.0
    %1856 = vmatprep.subr.mxu0 0.0
    %1857 = vmatpush1.msra.mxu0 0.0
    %1858 = vmatprep.subr.mxu0 0.0
    %1859 = vmatpush1.msra.mxu0 0.0
    %1860 = vmatprep.subr.mxu0 0.0
    %1861 = vmatpush1.msra.mxu0 0.0
    %1862 = vmatprep.subr.mxu0 0.0
    %1863 = vmatpush1.msra.mxu0 0.0
    %1864 = vmatprep.subr.mxu0 0.0
    %1865 = vmatpush1.msra.mxu0 0.0
    %1866 = vmatprep.subr.mxu0 0.0
    %1867 = vmatpush1.msra.mxu0 0.0
    %1868 = vmatprep.subr.mxu0 0.0
    %1869 = vmatpush1.msra.mxu0 0.0
    %1870 = vmatprep.subr.mxu0 0.0
    %1871 = vmatpush1.msra.mxu0 0.0
    %1872 = vmatprep.subr.mxu0 0.0
    %1873 = vmatpush1.msra.mxu0 0.0
    %1874 = vmatprep.subr.mxu0 0.0
    %1875 = vmatpush1.msra.mxu0 0.0
    %1876 = vmatprep.subr.mxu0 0.0
    %1877 = vmatpush1.msra.mxu0 0.0
    %1878 = vmatprep.subr.mxu0 0.0
    %1879 = vmatpush1.msra.mxu0 0.0
    %1880 = vmatprep.subr.mxu0 0.0
    %1881 = vmatpush1.msra.mxu0 0.0
    %1882 = vmatprep.subr.mxu0 0.0
    %1883 = vmatpush1.msra.mxu0 0.0
    %1884 = vmatprep.subr.mxu0 0.0
    %1885 = vmatpush1.msra.mxu0 0.0
    %1886 = vmatprep.subr.mxu0 0.0
    %1887 = vmatpush1.msra.mxu0 0.0
    %1888 = vmatprep.subr.mxu0 0.0
    %1889 = vmatpush1.msra.mxu0 0.0
    %1890 = vmatprep.subr.mxu0 0.0
    %1891 = vmatpush1.msra.mxu0 0.0
    %1892 = vmatprep.subr.mxu0 0.0
    %1893 = vmatpush1.msra.mxu0 0.0
    %1894 = vmatprep.subr.mxu0 0.0
    %1895 = vmatpush1.msra.mxu0 0.0
    %1896 = vmatprep.subr.mxu0 0.0
    %1897 = vmatpush1.msra.mxu0 0.0
    %1898 = vmatprep.subr.mxu0 0.0
    %1899 = vmatpush1.msra.mxu0 0.0
    %1900 = vmatprep.subr.mxu0 0.0
    %1901 = vmatpush1.msra.mxu0 0.0
    %1902 = vmatprep.subr.mxu0 0.0
    %1903 = vmatpush1.msra.mxu0 0.0
    %1904 = vmatprep.subr.mxu0 0.0
    %1905 = vmatpush1.msra.mxu0 0.0
    %1906 = vmatprep.subr.mxu0 0.0
    %1907 = vmatpush1.msra.mxu0 0.0
    %1908 = vmatprep.subr.mxu0 0.0
    %1909 = vmatpush1.msra.mxu0 0.0
    %1910 = vmatprep.mubr.f32.mxu0 0.0
    %1911 = vmatmul.mubr.f32.gmra.mrb[0].mxu0 %v1835
    %v1912 = vpop.f32.mrb[0].mxu0
    %v1913 = vadd.f32 0.0, %v1912
    %v1914 = vpop.f32.mrb[0].mxu0
    %1915 = vmatprep.mubr.f32.mxu0 0.0
    %1916 = vmatmul.mubr.f32.gmra.mrb[0].mxu0 %v1838
    %v1917 = vpop.f32.mrb[0].mxu0
    %v1918 = vadd.f32 0.0, %v1917
    %v1919 = vpop.f32.mrb[0].mxu0
    %1920 = vmatprep.mubr.f32.mxu0 0.0
    %1921 = vmatmul.mubr.f32.gmra.mrb[0].mxu0 %v1841
    %v1922 = vpop.f32.mrb[0].mxu0
    %v1923 = vadd.f32 0.0, %v1922
    %v1924 = vpop.f32.mrb[0].mxu0
    %1925 = vmatprep.mubr.f32.mxu0 0.0
    %1926 = vmatmul.mubr.f32.gmra.mrb[0].mxu0 %v1844
    %v1927 = vpop.f32.mrb[0].mxu0
    %v1928 = vadd.f32 0.0, %v1927
    %v1929 = vpop.f32.mrb[0].mxu0
    %1930 = vdwg.mxu0
    %1931 = vrot.lane.b32.xlu0 %v1393, 96
    %v1932 = vpop.permute.xlu0 %1931
    %1933 = vrot.lane.b32.xlu0 %v1394, 96
    %v1934 = vpop.permute.xlu0 %1933
    %1935 = vrot.lane.b32.xlu0 %v1395, 96
    %v1936 = vpop.permute.xlu0 %1935
    %1937 = vrot.lane.b32.xlu0 %v1396, 96
    %v1938 = vpop.permute.xlu0 %1937
    %1939 = vrot.lane.b32.xlu0 %v1579, 96
    %v1940 = vpop.permute.xlu0 %1939
    %1941 = vrot.lane.b32.xlu0 %v1580, 96
    %v1942 = vpop.permute.xlu0 %1941
    %1943 = vrot.lane.b32.xlu0 %v1581, 96
    %v1944 = vpop.permute.xlu0 %1943
    %1945 = vrot.lane.b32.xlu0 %v1582, 96
    %v1946 = vpop.permute.xlu0 %1945
    %v1947 = vsel %vm1672, %v1932, 0
    %v1949 = vsel %vm1672, %v1934, 0
    %v1951 = vsel %vm1672, %v1936, 0
    %v1953 = vsel %vm1672, %v1938, 0
    %v1955 = vsel %vm1672, %v1940, 0
    %v1957 = vsel %vm1672, %v1942, 0
    %v1959 = vsel %vm1672, %v1944, 0
    %v1961 = vsel %vm1672, %v1946, 0
    %1963 = vmatprep.subr.mxu0 0.0
    %1964 = vmatpush1.xpose.msra.mxu0 %v1955
    %1965 = vmatprep.subr.mxu0 0.0
    %1966 = vmatpush1.xpose.msra.mxu0 %v1957
    %1967 = vmatprep.subr.mxu0 0.0
    %1968 = vmatpush1.xpose.msra.mxu0 %v1959
    %1969 = vmatprep.subr.mxu0 0.0
    %1970 = vmatpush1.xpose.msra.mxu0 %v1961
    %1971 = vmatprep.subr.mxu0 0.0
    %1972 = vmatpush1.xpose.msra.mxu0 0.0
    %1973 = vmatprep.subr.mxu0 0.0
    %1974 = vmatpush1.xpose.msra.mxu0 0.0
    %1975 = vmatprep.subr.mxu0 0.0
    %1976 = vmatpush1.xpose.msra.mxu0 0.0
    %1977 = vmatprep.subr.mxu0 0.0
    %1978 = vmatpush1.xpose.msra.mxu0 0.0
    %1979 = vmatprep.subr.mxu0 0.0
    %1980 = vmatpush1.xpose.msra.mxu0 0.0
    %1981 = vmatprep.subr.mxu0 0.0
    %1982 = vmatpush1.xpose.msra.mxu0 0.0
    %1983 = vmatprep.subr.mxu0 0.0
    %1984 = vmatpush1.xpose.msra.mxu0 0.0
    %1985 = vmatprep.subr.mxu0 0.0
    %1986 = vmatpush1.xpose.msra.mxu0 0.0
    %1987 = vmatprep.subr.mxu0 0.0
    %1988 = vmatpush1.xpose.msra.mxu0 0.0
    %1989 = vmatprep.subr.mxu0 0.0
    %1990 = vmatpush1.xpose.msra.mxu0 0.0
    %1991 = vmatprep.subr.mxu0 0.0
    %1992 = vmatpush1.xpose.msra.mxu0 0.0
    %1993 = vmatprep.subr.mxu0 0.0
    %1994 = vmatpush1.xpose.msra.mxu0 0.0
    %1995 = vmatprep.subr.mxu0 0.0
    %1996 = vmatpush1.xpose.msra.mxu0 0.0
    %1997 = vmatprep.subr.mxu0 0.0
    %1998 = vmatpush1.xpose.msra.mxu0 0.0
    %1999 = vmatprep.subr.mxu0 0.0
    %2000 = vmatpush1.xpose.msra.mxu0 0.0
    %2001 = vmatprep.subr.mxu0 0.0
    %2002 = vmatpush1.xpose.msra.mxu0 0.0
    %2003 = vmatprep.subr.mxu0 0.0
    %2004 = vmatpush1.xpose.msra.mxu0 0.0
    %2005 = vmatprep.subr.mxu0 0.0
    %2006 = vmatpush1.xpose.msra.mxu0 0.0
    %2007 = vmatprep.subr.mxu0 0.0
    %2008 = vmatpush1.xpose.msra.mxu0 0.0
    %2009 = vmatprep.subr.mxu0 0.0
    %2010 = vmatpush1.xpose.msra.mxu0 0.0
    %2011 = vmatprep.subr.mxu0 0.0
    %2012 = vmatpush1.xpose.msra.mxu0 0.0
    %2013 = vmatprep.subr.mxu0 0.0
    %2014 = vmatpush1.xpose.msra.mxu0 0.0
    %2015 = vmatprep.subr.mxu0 0.0
    %2016 = vmatpush1.xpose.msra.mxu0 0.0
    %2017 = vmatprep.subr.mxu0 0.0
    %2018 = vmatpush1.xpose.msra.mxu0 0.0
    %2019 = vmatprep.subr.mxu0 0.0
    %2020 = vmatpush1.xpose.msra.mxu0 0.0
    %2021 = vmatprep.subr.mxu0 0.0
    %2022 = vmatpush1.xpose.msra.mxu0 0.0
    %2023 = vmatprep.subr.mxu0 0.0
    %2024 = vmatpush1.xpose.msra.mxu0 0.0
    %2025 = vmatprep.subr.mxu0 0.0
    %2026 = vmatpush1.xpose.msra.mxu0 0.0
    %2027 = vmatprep.mubr.f32.mxu0 0.0
    %2028 = vmatmul.mubr.f32.gmra.mrb[0].mxu0 %v1947
    %v2029 = vpop.f32.mrb[0].mxu0
    %v2030 = vadd.f32 0.0, %v2029
    %v2031 = vpop.f32.mrb[0].mxu0
    %2032 = vmatprep.mubr.f32.mxu0 0.0
    %2033 = vmatmul.mubr.f32.gmra.mrb[0].mxu0 %v1949
    %v2034 = vpop.f32.mrb[0].mxu0
    %v2035 = vadd.f32 0.0, %v2034
    %v2036 = vpop.f32.mrb[0].mxu0
    %2037 = vmatprep.mubr.f32.mxu0 0.0
    %2038 = vmatmul.mubr.f32.gmra.mrb[0].mxu0 %v1951
    %v2039 = vpop.f32.mrb[0].mxu0
    %v2040 = vadd.f32 0.0, %v2039
    %v2041 = vpop.f32.mrb[0].mxu0
    %2042 = vmatprep.mubr.f32.mxu0 0.0
    %2043 = vmatmul.mubr.f32.gmra.mrb[0].mxu0 %v1953
    %v2044 = vpop.f32.mrb[0].mxu0
    %v2045 = vadd.f32 0.0, %v2044
    %v2046 = vpop.f32.mrb[0].mxu0
    %2047 = vdwg.mxu0
    %v2048 = vmul.f32 %v2030, 0.088388346
    %v2049 = vmul.f32 %v2035, 0.088388346
    %v2050 = vmul.f32 %v2040, 0.088388346
    %v2051 = vmul.f32 %v2045, 0.088388346
    %v2052 = vsel %vm120, %v2048, -1e+30
    %v2053 = vsel %vm121, %v2049, -1e+30
    %v2054 = vsel %vm122, %v2050, -1e+30
    %v2055 = vsel %vm123, %v2051, -1e+30
    %v2056 = vsel %vm1672, %v2052, -inf
    %2057 = vmax.xlane.f32.xlu0 %v2056
    %v2058 = vpop.xlane.xlu0 %2057
    %v2059 = vsel %vm1672, %v2053, -inf
    %2060 = vmax.xlane.f32.xlu0 %v2059
    %v2061 = vpop.xlane.xlu0 %2060
    %v2062 = vsel %vm1672, %v2054, -inf
    %2063 = vmax.xlane.f32.xlu0 %v2062
    %v2064 = vpop.xlane.xlu0 %2063
    %v2065 = vsel %vm1672, %v2055, -inf
    %2066 = vmax.xlane.f32.xlu0 %v2065
    %v2067 = vpop.xlane.xlu0 %2066
    %v2068 = vsub.f32 %v2052, %v2058
    %v2069 = vsub.f32 %v2053, %v2061
    %v2070 = vsub.f32 %v2054, %v2064
    %v2071 = vsub.f32 %v2055, %v2067
    %v2072 = vmul.f32 %v2068, 1.442695
    %v2073 = vpow.pop %v2072
    %v2074 = vmul.f32 %v2069, 1.442695
    %v2075 = vpow.pop %v2074
    %v2076 = vmul.f32 %v2070, 1.442695
    %v2077 = vpow.pop %v2076
    %v2078 = vmul.f32 %v2071, 1.442695
    %v2079 = vpow.pop %v2078
    %v2080 = vsel %vm1672, %v2073, 0.0
    %2081 = vadd.xlane.f32.xlu0 %v2080
    %v2082 = vpop.xlane.xlu0 %2081
    %v2083 = vsel %vm1672, %v2075, 0.0
    %2084 = vadd.xlane.f32.xlu0 %v2083
    %v2085 = vpop.xlane.xlu0 %2084
    %v2086 = vsel %vm1672, %v2077, 0.0
    %2087 = vadd.xlane.f32.xlu0 %v2086
    %v2088 = vpop.xlane.xlu0 %2087
    %v2089 = vsel %vm1672, %v2079, 0.0
    %2090 = vadd.xlane.f32.xlu0 %v2089
    %v2091 = vpop.xlane.xlu0 %2090
    %v2092 = vrcp.pop %v2082
    %v2093 = vrcp.pop %v2085
    %v2094 = vrcp.pop %v2088
    %v2095 = vrcp.pop %v2091
    %v2096 = vmul.f32 %v2073, %v2092
    %v2097 = vmul.f32 %v2075, %v2093
    %v2098 = vmul.f32 %v2077, %v2094
    %v2099 = vmul.f32 %v2079, %v2095
    %2104 = vrot.lane.b32.xlu0 %v1654, 96
    %v2105 = vpop.permute.xlu0 %2104
    %2106 = vrot.lane.b32.xlu0 %v1659, 96
    %v2107 = vpop.permute.xlu0 %2106
    %2108 = vrot.lane.b32.xlu0 %v1664, 96
    %v2109 = vpop.permute.xlu0 %2108
    %2110 = vrot.lane.b32.xlu0 %v1669, 96
    %v2111 = vpop.permute.xlu0 %2110
    %v2117 = vsel %vm1672, %v2096, 0
    %v2120 = vsel %vm1672, %v2097, 0
    %v2123 = vsel %vm1672, %v2098, 0
    %v2126 = vsel %vm1672, %v2099, 0
    %2128 = vmatprep.subr.mxu0 0.0
    %2129 = vmatpush1.msra.mxu0 %v2105
    %2130 = vmatprep.subr.mxu0 0.0
    %2131 = vmatpush1.msra.mxu0 %v2107
    %2132 = vmatprep.subr.mxu0 0.0
    %2133 = vmatpush1.msra.mxu0 %v2109
    %2134 = vmatprep.subr.mxu0 0.0
    %2135 = vmatpush1.msra.mxu0 %v2111
    %2136 = vmatprep.subr.mxu0 0.0
    %2137 = vmatpush1.msra.mxu0 0.0
    %2138 = vmatprep.subr.mxu0 0.0
    %2139 = vmatpush1.msra.mxu0 0.0
    %2140 = vmatprep.subr.mxu0 0.0
    %2141 = vmatpush1.msra.mxu0 0.0
    %2142 = vmatprep.subr.mxu0 0.0
    %2143 = vmatpush1.msra.mxu0 0.0
    %2144 = vmatprep.subr.mxu0 0.0
    %2145 = vmatpush1.msra.mxu0 0.0
    %2146 = vmatprep.subr.mxu0 0.0
    %2147 = vmatpush1.msra.mxu0 0.0
    %2148 = vmatprep.subr.mxu0 0.0
    %2149 = vmatpush1.msra.mxu0 0.0
    %2150 = vmatprep.subr.mxu0 0.0
    %2151 = vmatpush1.msra.mxu0 0.0
    %2152 = vmatprep.subr.mxu0 0.0
    %2153 = vmatpush1.msra.mxu0 0.0
    %2154 = vmatprep.subr.mxu0 0.0
    %2155 = vmatpush1.msra.mxu0 0.0
    %2156 = vmatprep.subr.mxu0 0.0
    %2157 = vmatpush1.msra.mxu0 0.0
    %2158 = vmatprep.subr.mxu0 0.0
    %2159 = vmatpush1.msra.mxu0 0.0
    %2160 = vmatprep.subr.mxu0 0.0
    %2161 = vmatpush1.msra.mxu0 0.0
    %2162 = vmatprep.subr.mxu0 0.0
    %2163 = vmatpush1.msra.mxu0 0.0
    %2164 = vmatprep.subr.mxu0 0.0
    %2165 = vmatpush1.msra.mxu0 0.0
    %2166 = vmatprep.subr.mxu0 0.0
    %2167 = vmatpush1.msra.mxu0 0.0
    %2168 = vmatprep.subr.mxu0 0.0
    %2169 = vmatpush1.msra.mxu0 0.0
    %2170 = vmatprep.subr.mxu0 0.0
    %2171 = vmatpush1.msra.mxu0 0.0
    %2172 = vmatprep.subr.mxu0 0.0
    %2173 = vmatpush1.msra.mxu0 0.0
    %2174 = vmatprep.subr.mxu0 0.0
    %2175 = vmatpush1.msra.mxu0 0.0
    %2176 = vmatprep.subr.mxu0 0.0
    %2177 = vmatpush1.msra.mxu0 0.0
    %2178 = vmatprep.subr.mxu0 0.0
    %2179 = vmatpush1.msra.mxu0 0.0
    %2180 = vmatprep.subr.mxu0 0.0
    %2181 = vmatpush1.msra.mxu0 0.0
    %2182 = vmatprep.subr.mxu0 0.0
    %2183 = vmatpush1.msra.mxu0 0.0
    %2184 = vmatprep.subr.mxu0 0.0
    %2185 = vmatpush1.msra.mxu0 0.0
    %2186 = vmatprep.subr.mxu0 0.0
    %2187 = vmatpush1.msra.mxu0 0.0
    %2188 = vmatprep.subr.mxu0 0.0
    %2189 = vmatpush1.msra.mxu0 0.0
    %2190 = vmatprep.subr.mxu0 0.0
    %2191 = vmatpush1.msra.mxu0 0.0
    %2192 = vmatprep.mubr.f32.mxu0 0.0
    %2193 = vmatmul.mubr.f32.gmra.mrb[0].mxu0 %v2117
    %v2194 = vpop.f32.mrb[0].mxu0
    %v2195 = vadd.f32 0.0, %v2194
    %v2196 = vpop.f32.mrb[0].mxu0
    %2197 = vmatprep.mubr.f32.mxu0 0.0
    %2198 = vmatmul.mubr.f32.gmra.mrb[0].mxu0 %v2120
    %v2199 = vpop.f32.mrb[0].mxu0
    %v2200 = vadd.f32 0.0, %v2199
    %v2201 = vpop.f32.mrb[0].mxu0
    %2202 = vmatprep.mubr.f32.mxu0 0.0
    %2203 = vmatmul.mubr.f32.gmra.mrb[0].mxu0 %v2123
    %v2204 = vpop.f32.mrb[0].mxu0
    %v2205 = vadd.f32 0.0, %v2204
    %v2206 = vpop.f32.mrb[0].mxu0
    %2207 = vmatprep.mubr.f32.mxu0 0.0
    %2208 = vmatmul.mubr.f32.gmra.mrb[0].mxu0 %v2126
    %v2209 = vpop.f32.mrb[0].mxu0
    %v2210 = vadd.f32 0.0, %v2209
    %v2211 = vpop.f32.mrb[0].mxu0
    %2212 = vdwg.mxu0
    %2213 = vrot.lane.b32.xlu0 %v1393, 64
    %v2214 = vpop.permute.xlu0 %2213
    %2215 = vrot.lane.b32.xlu0 %v1394, 64
    %v2216 = vpop.permute.xlu0 %2215
    %2217 = vrot.lane.b32.xlu0 %v1395, 64
    %v2218 = vpop.permute.xlu0 %2217
    %2219 = vrot.lane.b32.xlu0 %v1396, 64
    %v2220 = vpop.permute.xlu0 %2219
    %2221 = vrot.lane.b32.xlu0 %v1579, 64
    %v2222 = vpop.permute.xlu0 %2221
    %2223 = vrot.lane.b32.xlu0 %v1580, 64
    %v2224 = vpop.permute.xlu0 %2223
    %2225 = vrot.lane.b32.xlu0 %v1581, 64
    %v2226 = vpop.permute.xlu0 %2225
    %2227 = vrot.lane.b32.xlu0 %v1582, 64
    %v2228 = vpop.permute.xlu0 %2227
    %v2229 = vsel %vm1672, %v2214, 0
    %v2231 = vsel %vm1672, %v2216, 0
    %v2233 = vsel %vm1672, %v2218, 0
    %v2235 = vsel %vm1672, %v2220, 0
    %v2237 = vsel %vm1672, %v2222, 0
    %v2239 = vsel %vm1672, %v2224, 0
    %v2241 = vsel %vm1672, %v2226, 0
    %v2243 = vsel %vm1672, %v2228, 0
    %2245 = vmatprep.subr.mxu0 0.0
    %2246 = vmatpush1.xpose.msra.mxu0 %v2237
    %2247 = vmatprep.subr.mxu0 0.0
    %2248 = vmatpush1.xpose.msra.mxu0 %v2239
    %2249 = vmatprep.subr.mxu0 0.0
    %2250 = vmatpush1.xpose.msra.mxu0 %v2241
    %2251 = vmatprep.subr.mxu0 0.0
    %2252 = vmatpush1.xpose.msra.mxu0 %v2243
    %2253 = vmatprep.subr.mxu0 0.0
    %2254 = vmatpush1.xpose.msra.mxu0 0.0
    %2255 = vmatprep.subr.mxu0 0.0
    %2256 = vmatpush1.xpose.msra.mxu0 0.0
    %2257 = vmatprep.subr.mxu0 0.0
    %2258 = vmatpush1.xpose.msra.mxu0 0.0
    %2259 = vmatprep.subr.mxu0 0.0
    %2260 = vmatpush1.xpose.msra.mxu0 0.0
    %2261 = vmatprep.subr.mxu0 0.0
    %2262 = vmatpush1.xpose.msra.mxu0 0.0
    %2263 = vmatprep.subr.mxu0 0.0
    %2264 = vmatpush1.xpose.msra.mxu0 0.0
    %2265 = vmatprep.subr.mxu0 0.0
    %2266 = vmatpush1.xpose.msra.mxu0 0.0
    %2267 = vmatprep.subr.mxu0 0.0
    %2268 = vmatpush1.xpose.msra.mxu0 0.0
    %2269 = vmatprep.subr.mxu0 0.0
    %2270 = vmatpush1.xpose.msra.mxu0 0.0
    %2271 = vmatprep.subr.mxu0 0.0
    %2272 = vmatpush1.xpose.msra.mxu0 0.0
    %2273 = vmatprep.subr.mxu0 0.0
    %2274 = vmatpush1.xpose.msra.mxu0 0.0
    %2275 = vmatprep.subr.mxu0 0.0
    %2276 = vmatpush1.xpose.msra.mxu0 0.0
    %2277 = vmatprep.subr.mxu0 0.0
    %2278 = vmatpush1.xpose.msra.mxu0 0.0
    %2279 = vmatprep.subr.mxu0 0.0
    %2280 = vmatpush1.xpose.msra.mxu0 0.0
    %2281 = vmatprep.subr.mxu0 0.0
    %2282 = vmatpush1.xpose.msra.mxu0 0.0
    %2283 = vmatprep.subr.mxu0 0.0
    %2284 = vmatpush1.xpose.msra.mxu0 0.0
    %2285 = vmatprep.subr.mxu0 0.0
    %2286 = vmatpush1.xpose.msra.mxu0 0.0
    %2287 = vmatprep.subr.mxu0 0.0
    %2288 = vmatpush1.xpose.msra.mxu0 0.0
    %2289 = vmatprep.subr.mxu0 0.0
    %2290 = vmatpush1.xpose.msra.mxu0 0.0
    %2291 = vmatprep.subr.mxu0 0.0
    %2292 = vmatpush1.xpose.msra.mxu0 0.0
    %2293 = vmatprep.subr.mxu0 0.0
    %2294 = vmatpush1.xpose.msra.mxu0 0.0
    %2295 = vmatprep.subr.mxu0 0.0
    %2296 = vmatpush1.xpose.msra.mxu0 0.0
    %2297 = vmatprep.subr.mxu0 0.0
    %2298 = vmatpush1.xpose.msra.mxu0 0.0
    %2299 = vmatprep.subr.mxu0 0.0
    %2300 = vmatpush1.xpose.msra.mxu0 0.0
    %2301 = vmatprep.subr.mxu0 0.0
    %2302 = vmatpush1.xpose.msra.mxu0 0.0
    %2303 = vmatprep.subr.mxu0 0.0
    %2304 = vmatpush1.xpose.msra.mxu0 0.0
    %2305 = vmatprep.subr.mxu0 0.0
    %2306 = vmatpush1.xpose.msra.mxu0 0.0
    %2307 = vmatprep.subr.mxu0 0.0
    %2308 = vmatpush1.xpose.msra.mxu0 0.0
    %2309 = vmatprep.mubr.f32.mxu0 0.0
    %2310 = vmatmul.mubr.f32.gmra.mrb[0].mxu0 %v2229
    %v2311 = vpop.f32.mrb[0].mxu0
    %v2312 = vadd.f32 0.0, %v2311
    %v2313 = vpop.f32.mrb[0].mxu0
    %2314 = vmatprep.mubr.f32.mxu0 0.0
    %2315 = vmatmul.mubr.f32.gmra.mrb[0].mxu0 %v2231
    %v2316 = vpop.f32.mrb[0].mxu0
    %v2317 = vadd.f32 0.0, %v2316
    %v2318 = vpop.f32.mrb[0].mxu0
    %2319 = vmatprep.mubr.f32.mxu0 0.0
    %2320 = vmatmul.mubr.f32.gmra.mrb[0].mxu0 %v2233
    %v2321 = vpop.f32.mrb[0].mxu0
    %v2322 = vadd.f32 0.0, %v2321
    %v2323 = vpop.f32.mrb[0].mxu0
    %2324 = vmatprep.mubr.f32.mxu0 0.0
    %2325 = vmatmul.mubr.f32.gmra.mrb[0].mxu0 %v2235
    %v2326 = vpop.f32.mrb[0].mxu0
    %v2327 = vadd.f32 0.0, %v2326
    %v2328 = vpop.f32.mrb[0].mxu0
    %2329 = vdwg.mxu0
    %v2330 = vmul.f32 %v2312, 0.088388346
    %v2331 = vmul.f32 %v2317, 0.088388346
    %v2332 = vmul.f32 %v2322, 0.088388346
    %v2333 = vmul.f32 %v2327, 0.088388346
    %v2334 = vsel %vm120, %v2330, -1e+30
    %v2335 = vsel %vm121, %v2331, -1e+30
    %v2336 = vsel %vm122, %v2332, -1e+30
    %v2337 = vsel %vm123, %v2333, -1e+30
    %v2338 = vsel %vm1672, %v2334, -inf
    %2339 = vmax.xlane.f32.xlu0 %v2338
    %v2340 = vpop.xlane.xlu0 %2339
    %v2341 = vsel %vm1672, %v2335, -inf
    %2342 = vmax.xlane.f32.xlu0 %v2341
    %v2343 = vpop.xlane.xlu0 %2342
    %v2344 = vsel %vm1672, %v2336, -inf
    %2345 = vmax.xlane.f32.xlu0 %v2344
    %v2346 = vpop.xlane.xlu0 %2345
    %v2347 = vsel %vm1672, %v2337, -inf
    %2348 = vmax.xlane.f32.xlu0 %v2347
    %v2349 = vpop.xlane.xlu0 %2348
    %v2350 = vsub.f32 %v2334, %v2340
    %v2351 = vsub.f32 %v2335, %v2343
    %v2352 = vsub.f32 %v2336, %v2346
    %v2353 = vsub.f32 %v2337, %v2349
    %v2354 = vmul.f32 %v2350, 1.442695
    %v2355 = vpow.pop %v2354
    %v2356 = vmul.f32 %v2351, 1.442695
    %v2357 = vpow.pop %v2356
    %v2358 = vmul.f32 %v2352, 1.442695
    %v2359 = vpow.pop %v2358
    %v2360 = vmul.f32 %v2353, 1.442695
    %v2361 = vpow.pop %v2360
    %v2362 = vsel %vm1672, %v2355, 0.0
    %2363 = vadd.xlane.f32.xlu0 %v2362
    %v2364 = vpop.xlane.xlu0 %2363
    %v2365 = vsel %vm1672, %v2357, 0.0
    %2366 = vadd.xlane.f32.xlu0 %v2365
    %v2367 = vpop.xlane.xlu0 %2366
    %v2368 = vsel %vm1672, %v2359, 0.0
    %2369 = vadd.xlane.f32.xlu0 %v2368
    %v2370 = vpop.xlane.xlu0 %2369
    %v2371 = vsel %vm1672, %v2361, 0.0
    %2372 = vadd.xlane.f32.xlu0 %v2371
    %v2373 = vpop.xlane.xlu0 %2372
    %v2374 = vrcp.pop %v2364
    %v2375 = vrcp.pop %v2367
    %v2376 = vrcp.pop %v2370
    %v2377 = vrcp.pop %v2373
    %v2378 = vmul.f32 %v2355, %v2374
    %v2379 = vmul.f32 %v2357, %v2375
    %v2380 = vmul.f32 %v2359, %v2376
    %v2381 = vmul.f32 %v2361, %v2377
    %2382 = vrot.lane.b32.xlu0 %v1654, 64
    %v2383 = vpop.permute.xlu0 %2382
    %2384 = vrot.lane.b32.xlu0 %v1659, 64
    %v2385 = vpop.permute.xlu0 %2384
    %2386 = vrot.lane.b32.xlu0 %v1664, 64
    %v2387 = vpop.permute.xlu0 %2386
    %2388 = vrot.lane.b32.xlu0 %v1669, 64
    %v2389 = vpop.permute.xlu0 %2388
    %v2395 = vsel %vm1672, %v2378, 0
    %v2398 = vsel %vm1672, %v2379, 0
    %v2401 = vsel %vm1672, %v2380, 0
    %v2404 = vsel %vm1672, %v2381, 0
    %2406 = vmatprep.subr.mxu0 0.0
    %2407 = vmatpush1.msra.mxu0 %v2383
    %2408 = vmatprep.subr.mxu0 0.0
    %2409 = vmatpush1.msra.mxu0 %v2385
    %2410 = vmatprep.subr.mxu0 0.0
    %2411 = vmatpush1.msra.mxu0 %v2387
    %2412 = vmatprep.subr.mxu0 0.0
    %2413 = vmatpush1.msra.mxu0 %v2389
    %2414 = vmatprep.subr.mxu0 0.0
    %2415 = vmatpush1.msra.mxu0 0.0
    %2416 = vmatprep.subr.mxu0 0.0
    %2417 = vmatpush1.msra.mxu0 0.0
    %2418 = vmatprep.subr.mxu0 0.0
    %2419 = vmatpush1.msra.mxu0 0.0
    %2420 = vmatprep.subr.mxu0 0.0
    %2421 = vmatpush1.msra.mxu0 0.0
    %2422 = vmatprep.subr.mxu0 0.0
    %2423 = vmatpush1.msra.mxu0 0.0
    %2424 = vmatprep.subr.mxu0 0.0
    %2425 = vmatpush1.msra.mxu0 0.0
    %2426 = vmatprep.subr.mxu0 0.0
    %2427 = vmatpush1.msra.mxu0 0.0
    %2428 = vmatprep.subr.mxu0 0.0
    %2429 = vmatpush1.msra.mxu0 0.0
    %2430 = vmatprep.subr.mxu0 0.0
    %2431 = vmatpush1.msra.mxu0 0.0
    %2432 = vmatprep.subr.mxu0 0.0
    %2433 = vmatpush1.msra.mxu0 0.0
    %2434 = vmatprep.subr.mxu0 0.0
    %2435 = vmatpush1.msra.mxu0 0.0
    %2436 = vmatprep.subr.mxu0 0.0
    %2437 = vmatpush1.msra.mxu0 0.0
    %2438 = vmatprep.subr.mxu0 0.0
    %2439 = vmatpush1.msra.mxu0 0.0
    %2440 = vmatprep.subr.mxu0 0.0
    %2441 = vmatpush1.msra.mxu0 0.0
    %2442 = vmatprep.subr.mxu0 0.0
    %2443 = vmatpush1.msra.mxu0 0.0
    %2444 = vmatprep.subr.mxu0 0.0
    %2445 = vmatpush1.msra.mxu0 0.0
    %2446 = vmatprep.subr.mxu0 0.0
    %2447 = vmatpush1.msra.mxu0 0.0
    %2448 = vmatprep.subr.mxu0 0.0
    %2449 = vmatpush1.msra.mxu0 0.0
    %2450 = vmatprep.subr.mxu0 0.0
    %2451 = vmatpush1.msra.mxu0 0.0
    %2452 = vmatprep.subr.mxu0 0.0
    %2453 = vmatpush1.msra.mxu0 0.0
    %2454 = vmatprep.subr.mxu0 0.0
    %2455 = vmatpush1.msra.mxu0 0.0
    %2456 = vmatprep.subr.mxu0 0.0
    %2457 = vmatpush1.msra.mxu0 0.0
    %2458 = vmatprep.subr.mxu0 0.0
    %2459 = vmatpush1.msra.mxu0 0.0
    %2460 = vmatprep.subr.mxu0 0.0
    %2461 = vmatpush1.msra.mxu0 0.0
    %2462 = vmatprep.subr.mxu0 0.0
    %2463 = vmatpush1.msra.mxu0 0.0
    %2464 = vmatprep.subr.mxu0 0.0
    %2465 = vmatpush1.msra.mxu0 0.0
    %2466 = vmatprep.subr.mxu0 0.0
    %2467 = vmatpush1.msra.mxu0 0.0
    %2468 = vmatprep.subr.mxu0 0.0
    %2469 = vmatpush1.msra.mxu0 0.0
    %2470 = vmatprep.mubr.f32.mxu0 0.0
    %2471 = vmatmul.mubr.f32.gmra.mrb[0].mxu0 %v2395
    %v2472 = vpop.f32.mrb[0].mxu0
    %v2473 = vadd.f32 0.0, %v2472
    %v2474 = vpop.f32.mrb[0].mxu0
    %2475 = vmatprep.mubr.f32.mxu0 0.0
    %2476 = vmatmul.mubr.f32.gmra.mrb[0].mxu0 %v2398
    %v2477 = vpop.f32.mrb[0].mxu0
    %v2478 = vadd.f32 0.0, %v2477
    %v2479 = vpop.f32.mrb[0].mxu0
    %2480 = vmatprep.mubr.f32.mxu0 0.0
    %2481 = vmatmul.mubr.f32.gmra.mrb[0].mxu0 %v2401
    %v2482 = vpop.f32.mrb[0].mxu0
    %v2483 = vadd.f32 0.0, %v2482
    %v2484 = vpop.f32.mrb[0].mxu0
    %2485 = vmatprep.mubr.f32.mxu0 0.0
    %2486 = vmatmul.mubr.f32.gmra.mrb[0].mxu0 %v2404
    %v2487 = vpop.f32.mrb[0].mxu0
    %v2488 = vadd.f32 0.0, %v2487
    %v2489 = vpop.f32.mrb[0].mxu0
    %2490 = vdwg.mxu0
    %2491 = vrot.lane.b32.xlu0 %v1393, 32
    %v2492 = vpop.permute.xlu0 %2491
    %2493 = vrot.lane.b32.xlu0 %v1394, 32
    %v2494 = vpop.permute.xlu0 %2493
    %2495 = vrot.lane.b32.xlu0 %v1395, 32
    %v2496 = vpop.permute.xlu0 %2495
    %2497 = vrot.lane.b32.xlu0 %v1396, 32
    %v2498 = vpop.permute.xlu0 %2497
    %2499 = vrot.lane.b32.xlu0 %v1579, 32
    %v2500 = vpop.permute.xlu0 %2499
    %2501 = vrot.lane.b32.xlu0 %v1580, 32
    %v2502 = vpop.permute.xlu0 %2501
    %2503 = vrot.lane.b32.xlu0 %v1581, 32
    %v2504 = vpop.permute.xlu0 %2503
    %2505 = vrot.lane.b32.xlu0 %v1582, 32
    %v2506 = vpop.permute.xlu0 %2505
    %v2507 = vsel %vm1672, %v2492, 0
    %v2509 = vsel %vm1672, %v2494, 0
    %v2511 = vsel %vm1672, %v2496, 0
    %v2513 = vsel %vm1672, %v2498, 0
    %v2515 = vsel %vm1672, %v2500, 0
    %v2517 = vsel %vm1672, %v2502, 0
    %v2519 = vsel %vm1672, %v2504, 0
    %v2521 = vsel %vm1672, %v2506, 0
    %2523 = vmatprep.subr.mxu0 0.0
    %2524 = vmatpush1.xpose.msra.mxu0 %v2515
    %2525 = vmatprep.subr.mxu0 0.0
    %2526 = vmatpush1.xpose.msra.mxu0 %v2517
    %2527 = vmatprep.subr.mxu0 0.0
    %2528 = vmatpush1.xpose.msra.mxu0 %v2519
    %2529 = vmatprep.subr.mxu0 0.0
    %2530 = vmatpush1.xpose.msra.mxu0 %v2521
    %2531 = vmatprep.subr.mxu0 0.0
    %2532 = vmatpush1.xpose.msra.mxu0 0.0
    %2533 = vmatprep.subr.mxu0 0.0
    %2534 = vmatpush1.xpose.msra.mxu0 0.0
    %2535 = vmatprep.subr.mxu0 0.0
    %2536 = vmatpush1.xpose.msra.mxu0 0.0
    %2537 = vmatprep.subr.mxu0 0.0
    %2538 = vmatpush1.xpose.msra.mxu0 0.0
    %2539 = vmatprep.subr.mxu0 0.0
    %2540 = vmatpush1.xpose.msra.mxu0 0.0
    %2541 = vmatprep.subr.mxu0 0.0
    %2542 = vmatpush1.xpose.msra.mxu0 0.0
    %2543 = vmatprep.subr.mxu0 0.0
    %2544 = vmatpush1.xpose.msra.mxu0 0.0
    %2545 = vmatprep.subr.mxu0 0.0
    %2546 = vmatpush1.xpose.msra.mxu0 0.0
    %2547 = vmatprep.subr.mxu0 0.0
    %2548 = vmatpush1.xpose.msra.mxu0 0.0
    %2549 = vmatprep.subr.mxu0 0.0
    %2550 = vmatpush1.xpose.msra.mxu0 0.0
    %2551 = vmatprep.subr.mxu0 0.0
    %2552 = vmatpush1.xpose.msra.mxu0 0.0
    %2553 = vmatprep.subr.mxu0 0.0
    %2554 = vmatpush1.xpose.msra.mxu0 0.0
    %2555 = vmatprep.subr.mxu0 0.0
    %2556 = vmatpush1.xpose.msra.mxu0 0.0
    %2557 = vmatprep.subr.mxu0 0.0
    %2558 = vmatpush1.xpose.msra.mxu0 0.0
    %2559 = vmatprep.subr.mxu0 0.0
    %2560 = vmatpush1.xpose.msra.mxu0 0.0
    %2561 = vmatprep.subr.mxu0 0.0
    %2562 = vmatpush1.xpose.msra.mxu0 0.0
    %2563 = vmatprep.subr.mxu0 0.0
    %2564 = vmatpush1.xpose.msra.mxu0 0.0
    %2565 = vmatprep.subr.mxu0 0.0
    %2566 = vmatpush1.xpose.msra.mxu0 0.0
    %2567 = vmatprep.subr.mxu0 0.0
    %2568 = vmatpush1.xpose.msra.mxu0 0.0
    %2569 = vmatprep.subr.mxu0 0.0
    %2570 = vmatpush1.xpose.msra.mxu0 0.0
    %2571 = vmatprep.subr.mxu0 0.0
    %2572 = vmatpush1.xpose.msra.mxu0 0.0
    %2573 = vmatprep.subr.mxu0 0.0
    %2574 = vmatpush1.xpose.msra.mxu0 0.0
    %2575 = vmatprep.subr.mxu0 0.0
    %2576 = vmatpush1.xpose.msra.mxu0 0.0
    %2577 = vmatprep.subr.mxu0 0.0
    %2578 = vmatpush1.xpose.msra.mxu0 0.0
    %2579 = vmatprep.subr.mxu0 0.0
    %2580 = vmatpush1.xpose.msra.mxu0 0.0
    %2581 = vmatprep.subr.mxu0 0.0
    %2582 = vmatpush1.xpose.msra.mxu0 0.0
    %2583 = vmatprep.subr.mxu0 0.0
    %2584 = vmatpush1.xpose.msra.mxu0 0.0
    %2585 = vmatprep.subr.mxu0 0.0
    %2586 = vmatpush1.xpose.msra.mxu0 0.0
    %2587 = vmatprep.mubr.f32.mxu0 0.0
    %2588 = vmatmul.mubr.f32.gmra.mrb[0].mxu0 %v2507
    %v2589 = vpop.f32.mrb[0].mxu0
    %v2590 = vadd.f32 0.0, %v2589
    %v2591 = vpop.f32.mrb[0].mxu0
    %2592 = vmatprep.mubr.f32.mxu0 0.0
    %2593 = vmatmul.mubr.f32.gmra.mrb[0].mxu0 %v2509
    %v2594 = vpop.f32.mrb[0].mxu0
    %v2595 = vadd.f32 0.0, %v2594
    %v2596 = vpop.f32.mrb[0].mxu0
    %2597 = vmatprep.mubr.f32.mxu0 0.0
    %2598 = vmatmul.mubr.f32.gmra.mrb[0].mxu0 %v2511
    %v2599 = vpop.f32.mrb[0].mxu0
    %v2600 = vadd.f32 0.0, %v2599
    %v2601 = vpop.f32.mrb[0].mxu0
    %2602 = vmatprep.mubr.f32.mxu0 0.0
    %2603 = vmatmul.mubr.f32.gmra.mrb[0].mxu0 %v2513
    %v2604 = vpop.f32.mrb[0].mxu0
    %v2605 = vadd.f32 0.0, %v2604
    %v2606 = vpop.f32.mrb[0].mxu0
    %2607 = vdwg.mxu0
    %v2608 = vmul.f32 %v2590, 0.088388346
    %v2609 = vmul.f32 %v2595, 0.088388346
    %v2610 = vmul.f32 %v2600, 0.088388346
    %v2611 = vmul.f32 %v2605, 0.088388346
    %v2612 = vsel %vm120, %v2608, -1e+30
    %v2613 = vsel %vm121, %v2609, -1e+30
    %v2614 = vsel %vm122, %v2610, -1e+30
    %v2615 = vsel %vm123, %v2611, -1e+30
    %v2616 = vsel %vm1672, %v2612, -inf
    %2617 = vmax.xlane.f32.xlu0 %v2616
    %v2618 = vpop.xlane.xlu0 %2617
    %v2619 = vsel %vm1672, %v2613, -inf
    %2620 = vmax.xlane.f32.xlu0 %v2619
    %v2621 = vpop.xlane.xlu0 %2620
    %v2622 = vsel %vm1672, %v2614, -inf
    %2623 = vmax.xlane.f32.xlu0 %v2622
    %v2624 = vpop.xlane.xlu0 %2623
    %v2625 = vsel %vm1672, %v2615, -inf
    %2626 = vmax.xlane.f32.xlu0 %v2625
    %v2627 = vpop.xlane.xlu0 %2626
    %v2628 = vsub.f32 %v2612, %v2618
    %v2629 = vsub.f32 %v2613, %v2621
    %v2630 = vsub.f32 %v2614, %v2624
    %v2631 = vsub.f32 %v2615, %v2627
    %v2632 = vmul.f32 %v2628, 1.442695
    %v2633 = vpow.pop %v2632
    %v2634 = vmul.f32 %v2629, 1.442695
    %v2635 = vpow.pop %v2634
    %v2636 = vmul.f32 %v2630, 1.442695
    %v2637 = vpow.pop %v2636
    %v2638 = vmul.f32 %v2631, 1.442695
    %v2639 = vpow.pop %v2638
    %v2640 = vsel %vm1672, %v2633, 0.0
    %2641 = vadd.xlane.f32.xlu0 %v2640
    %v2642 = vpop.xlane.xlu0 %2641
    %v2643 = vsel %vm1672, %v2635, 0.0
    %2644 = vadd.xlane.f32.xlu0 %v2643
    %v2645 = vpop.xlane.xlu0 %2644
    %v2646 = vsel %vm1672, %v2637, 0.0
    %2647 = vadd.xlane.f32.xlu0 %v2646
    %v2648 = vpop.xlane.xlu0 %2647
    %v2649 = vsel %vm1672, %v2639, 0.0
    %2650 = vadd.xlane.f32.xlu0 %v2649
    %v2651 = vpop.xlane.xlu0 %2650
    %v2652 = vrcp.pop %v2642
    %v2653 = vrcp.pop %v2645
    %v2654 = vrcp.pop %v2648
    %v2655 = vrcp.pop %v2651
    %v2656 = vmul.f32 %v2633, %v2652
    %v2657 = vmul.f32 %v2635, %v2653
    %v2658 = vmul.f32 %v2637, %v2654
    %v2659 = vmul.f32 %v2639, %v2655
    %2660 = vrot.lane.b32.xlu0 %v1654, 32
    %v2661 = vpop.permute.xlu0 %2660
    %2662 = vrot.lane.b32.xlu0 %v1659, 32
    %v2663 = vpop.permute.xlu0 %2662
    %2664 = vrot.lane.b32.xlu0 %v1664, 32
    %v2665 = vpop.permute.xlu0 %2664
    %2666 = vrot.lane.b32.xlu0 %v1669, 32
    %v2667 = vpop.permute.xlu0 %2666
    %v2673 = vsel %vm1672, %v2656, 0
    %v2676 = vsel %vm1672, %v2657, 0
    %v2679 = vsel %vm1672, %v2658, 0
    %v2682 = vsel %vm1672, %v2659, 0
    %2684 = vmatprep.subr.mxu0 0.0
    %2685 = vmatpush1.msra.mxu0 %v2661
    %2686 = vmatprep.subr.mxu0 0.0
    %2687 = vmatpush1.msra.mxu0 %v2663
    %2688 = vmatprep.subr.mxu0 0.0
    %2689 = vmatpush1.msra.mxu0 %v2665
    %2690 = vmatprep.subr.mxu0 0.0
    %2691 = vmatpush1.msra.mxu0 %v2667
    %2692 = vmatprep.subr.mxu0 0.0
    %2693 = vmatpush1.msra.mxu0 0.0
    %2694 = vmatprep.subr.mxu0 0.0
    %2695 = vmatpush1.msra.mxu0 0.0
    %2696 = vmatprep.subr.mxu0 0.0
    %2697 = vmatpush1.msra.mxu0 0.0
    %2698 = vmatprep.subr.mxu0 0.0
    %2699 = vmatpush1.msra.mxu0 0.0
    %2700 = vmatprep.subr.mxu0 0.0
    %2701 = vmatpush1.msra.mxu0 0.0
    %2702 = vmatprep.subr.mxu0 0.0
    %2703 = vmatpush1.msra.mxu0 0.0
    %2704 = vmatprep.subr.mxu0 0.0
    %2705 = vmatpush1.msra.mxu0 0.0
    %2706 = vmatprep.subr.mxu0 0.0
    %2707 = vmatpush1.msra.mxu0 0.0
    %2708 = vmatprep.subr.mxu0 0.0
    %2709 = vmatpush1.msra.mxu0 0.0
    %2710 = vmatprep.subr.mxu0 0.0
    %2711 = vmatpush1.msra.mxu0 0.0
    %2712 = vmatprep.subr.mxu0 0.0
    %2713 = vmatpush1.msra.mxu0 0.0
    %2714 = vmatprep.subr.mxu0 0.0
    %2715 = vmatpush1.msra.mxu0 0.0
    %2716 = vmatprep.subr.mxu0 0.0
    %2717 = vmatpush1.msra.mxu0 0.0
    %2718 = vmatprep.subr.mxu0 0.0
    %2719 = vmatpush1.msra.mxu0 0.0
    %2720 = vmatprep.subr.mxu0 0.0
    %2721 = vmatpush1.msra.mxu0 0.0
    %2722 = vmatprep.subr.mxu0 0.0
    %2723 = vmatpush1.msra.mxu0 0.0
    %2724 = vmatprep.subr.mxu0 0.0
    %2725 = vmatpush1.msra.mxu0 0.0
    %2726 = vmatprep.subr.mxu0 0.0
    %2727 = vmatpush1.msra.mxu0 0.0
    %2728 = vmatprep.subr.mxu0 0.0
    %2729 = vmatpush1.msra.mxu0 0.0
    %2730 = vmatprep.subr.mxu0 0.0
    %2731 = vmatpush1.msra.mxu0 0.0
    %2732 = vmatprep.subr.mxu0 0.0
    %2733 = vmatpush1.msra.mxu0 0.0
    %2734 = vmatprep.subr.mxu0 0.0
    %2735 = vmatpush1.msra.mxu0 0.0
    %2736 = vmatprep.subr.mxu0 0.0
    %2737 = vmatpush1.msra.mxu0 0.0
    %2738 = vmatprep.subr.mxu0 0.0
    %2739 = vmatpush1.msra.mxu0 0.0
    %2740 = vmatprep.subr.mxu0 0.0
    %2741 = vmatpush1.msra.mxu0 0.0
    %2742 = vmatprep.subr.mxu0 0.0
    %2743 = vmatpush1.msra.mxu0 0.0
    %2744 = vmatprep.subr.mxu0 0.0
    %2745 = vmatpush1.msra.mxu0 0.0
    %2746 = vmatprep.subr.mxu0 0.0
    %2747 = vmatpush1.msra.mxu0 0.0
    %2748 = vmatprep.mubr.f32.mxu0 0.0
    %2749 = vmatmul.mubr.f32.gmra.mrb[0].mxu0 %v2673
    %v2750 = vpop.f32.mrb[0].mxu0
    %v2751 = vadd.f32 0.0, %v2750
    %v2752 = vpop.f32.mrb[0].mxu0
    %2753 = vmatprep.mubr.f32.mxu0 0.0
    %2754 = vmatmul.mubr.f32.gmra.mrb[0].mxu0 %v2676
    %v2755 = vpop.f32.mrb[0].mxu0
    %v2756 = vadd.f32 0.0, %v2755
    %v2757 = vpop.f32.mrb[0].mxu0
    %2758 = vmatprep.mubr.f32.mxu0 0.0
    %2759 = vmatmul.mubr.f32.gmra.mrb[0].mxu0 %v2679
    %v2760 = vpop.f32.mrb[0].mxu0
    %v2761 = vadd.f32 0.0, %v2760
    %v2762 = vpop.f32.mrb[0].mxu0
    %2763 = vmatprep.mubr.f32.mxu0 0.0
    %2764 = vmatmul.mubr.f32.gmra.mrb[0].mxu0 %v2682
    %v2765 = vpop.f32.mrb[0].mxu0
    %v2766 = vadd.f32 0.0, %v2765
    %v2767 = vpop.f32.mrb[0].mxu0
    %2768 = vdwg.mxu0
    %2773 = vrot.lane.b32.xlu0 %v2195, 32
    %v2774 = vpop.permute.xlu0 %2773
    %2775 = vrot.lane.b32.xlu0 %v2200, 32
    %v2776 = vpop.permute.xlu0 %2775
    %2777 = vrot.lane.b32.xlu0 %v2205, 32
    %v2778 = vpop.permute.xlu0 %2777
    %2779 = vrot.lane.b32.xlu0 %v2210, 32
    %v2780 = vpop.permute.xlu0 %2779
    %2789 = vrot.lane.b32.xlu0 %v2473, 64
    %v2790 = vpop.permute.xlu0 %2789
    %2791 = vrot.lane.b32.xlu0 %v2478, 64
    %v2792 = vpop.permute.xlu0 %2791
    %2793 = vrot.lane.b32.xlu0 %v2483, 64
    %v2794 = vpop.permute.xlu0 %2793
    %2795 = vrot.lane.b32.xlu0 %v2488, 64
    %v2796 = vpop.permute.xlu0 %2795
    %2805 = vrot.lane.b32.xlu0 %v2751, 96
    %v2806 = vpop.permute.xlu0 %2805
    %2807 = vrot.lane.b32.xlu0 %v2756, 96
    %v2808 = vpop.permute.xlu0 %2807
    %2809 = vrot.lane.b32.xlu0 %v2761, 96
    %v2810 = vpop.permute.xlu0 %2809
    %2811 = vrot.lane.b32.xlu0 %v2766, 96
    %v2812 = vpop.permute.xlu0 %2811
    %v2817 = vsel %vm1672, %v1913, %v2774
    %v2818 = vsel %vm1672, %v1918, %v2776
    %v2819 = vsel %vm1672, %v1923, %v2778
    %v2820 = vsel %vm1672, %v1928, %v2780
    %vm2821 = vcmask 523264
    %v2822 = vsel %vm2821, %v2817, %v2790
    %v2823 = vsel %vm2821, %v2818, %v2792
    %v2824 = vsel %vm2821, %v2819, %v2794
    %v2825 = vsel %vm2821, %v2820, %v2796
    %vm2826 = vcmask 785408
    %v2827 = vsel %vm2826, %v2822, %v2806
    %v2828 = vsel %vm2826, %v2823, %v2808
    %v2829 = vsel %vm2826, %v2824, %v2810
    %v2830 = vsel %vm2826, %v2825, %v2812
    %v2831 = vlaneseq
    %v2832 = vshrl.u32 %v2831, 7
    %v2833 = vsub.s32 3, %v2832
    %v2834 = vrot.slane %v93, %v2833
    %2835 = vmatprep.subr.mxu0 0.0
    %2836 = vmatpush1.msra.mxu0 %v1195
    %2837 = vmatprep.subr.mxu0 0.0
    %2838 = vmatpush1.msra.mxu0 %v1196
    %2839 = vmatprep.subr.mxu0 0.0
    %2840 = vmatpush1.msra.mxu0 %v1197
    %2841 = vmatprep.subr.mxu0 0.0
    %2842 = vmatpush1.msra.mxu0 %v1198
    %2843 = vmatprep.subr.mxu0 0.0
    %2844 = vmatpush1.msra.mxu0 %v1199
    %2845 = vmatprep.subr.mxu0 0.0
    %2846 = vmatpush1.msra.mxu0 %v1200
    %2847 = vmatprep.subr.mxu0 0.0
    %2848 = vmatpush1.msra.mxu0 %v1201
    %2849 = vmatprep.subr.mxu0 0.0
    %2850 = vmatpush1.msra.mxu0 %v1202
    %2851 = vmatprep.subr.mxu0 0.0
    %2852 = vmatpush1.msra.mxu0 %v1203
    %2853 = vmatprep.subr.mxu0 0.0
    %2854 = vmatpush1.msra.mxu0 %v1204
    %2855 = vmatprep.subr.mxu0 0.0
    %2856 = vmatpush1.msra.mxu0 %v1205
    %2857 = vmatprep.subr.mxu0 0.0
    %2858 = vmatpush1.msra.mxu0 %v1206
    %2859 = vmatprep.subr.mxu0 0.0
    %2860 = vmatpush1.msra.mxu0 %v1207
    %2861 = vmatprep.subr.mxu0 0.0
    %2862 = vmatpush1.msra.mxu0 %v1208
    %2863 = vmatprep.subr.mxu0 0.0
    %2864 = vmatpush1.msra.mxu0 %v1209
    %2865 = vmatprep.subr.mxu0 0.0
    %2866 = vmatpush1.msra.mxu0 %v1210
    %2867 = vmatprep.subr.mxu0 0.0
    %2868 = vmatpush1.msra.mxu0 0.0
    %2869 = vmatprep.subr.mxu0 0.0
    %2870 = vmatpush1.msra.mxu0 0.0
    %2871 = vmatprep.subr.mxu0 0.0
    %2872 = vmatpush1.msra.mxu0 0.0
    %2873 = vmatprep.subr.mxu0 0.0
    %2874 = vmatpush1.msra.mxu0 0.0
    %2875 = vmatprep.subr.mxu0 0.0
    %2876 = vmatpush1.msra.mxu0 0.0
    %2877 = vmatprep.subr.mxu0 0.0
    %2878 = vmatpush1.msra.mxu0 0.0
    %2879 = vmatprep.subr.mxu0 0.0
    %2880 = vmatpush1.msra.mxu0 0.0
    %2881 = vmatprep.subr.mxu0 0.0
    %2882 = vmatpush1.msra.mxu0 0.0
    %2883 = vmatprep.subr.mxu0 0.0
    %2884 = vmatpush1.msra.mxu0 0.0
    %2885 = vmatprep.subr.mxu0 0.0
    %2886 = vmatpush1.msra.mxu0 0.0
    %2887 = vmatprep.subr.mxu0 0.0
    %2888 = vmatpush1.msra.mxu0 0.0
    %2889 = vmatprep.subr.mxu0 0.0
    %2890 = vmatpush1.msra.mxu0 0.0
    %2891 = vmatprep.subr.mxu0 0.0
    %2892 = vmatpush1.msra.mxu0 0.0
    %2893 = vmatprep.subr.mxu0 0.0
    %2894 = vmatpush1.msra.mxu0 0.0
    %2895 = vmatprep.subr.mxu0 0.0
    %2896 = vmatpush1.msra.mxu0 0.0
    %2897 = vmatprep.subr.mxu0 0.0
    %2898 = vmatpush1.msra.mxu0 0.0
    %2899 = vmatprep.mubr.f32.mxu0 0.0
    %2900 = vmatmul.mubr.f32.gmra.mrb[0].mxu0 %v2827
    %v2901 = vpop.f32.mrb[0].mxu0
    %v2902 = vadd.f32 %v2834, %v2901
    %v2903 = vpop.f32.mrb[0].mxu0
    %2904 = vmatprep.mubr.f32.mxu0 0.0
    %2905 = vmatmul.mubr.f32.gmra.mrb[0].mxu0 %v2828
    %v2906 = vpop.f32.mrb[0].mxu0
    %v2907 = vadd.f32 %v2834, %v2906
    %v2908 = vpop.f32.mrb[0].mxu0
    %2909 = vmatprep.mubr.f32.mxu0 0.0
    %2910 = vmatmul.mubr.f32.gmra.mrb[0].mxu0 %v2829
    %v2911 = vpop.f32.mrb[0].mxu0
    %v2912 = vadd.f32 %v2834, %v2911
    %v2913 = vpop.f32.mrb[0].mxu0
    %2914 = vmatprep.mubr.f32.mxu0 0.0
    %2915 = vmatmul.mubr.f32.gmra.mrb[0].mxu0 %v2830
    %v2916 = vpop.f32.mrb[0].mxu0
    %v2917 = vadd.f32 %v2834, %v2916
    %v2918 = vpop.f32.mrb[0].mxu0
    %2919 = vdwg.mxu0
    %v2920 = vadd.f32 %v89, %v2902
    %v2921 = vadd.f32 %v90, %v2907
    %v2922 = vadd.f32 %v91, %v2912
    %v2923 = vadd.f32 %v92, %v2917
    %2924 = vadd.xlane.f32.xlu0 %v2920
    %v2925 = vpop.xlane.xlu0 %2924
    %2926 = vadd.xlane.f32.xlu0 %v2921
    %v2927 = vpop.xlane.xlu0 %2926
    %2928 = vadd.xlane.f32.xlu0 %v2922
    %v2929 = vpop.xlane.xlu0 %2928
    %2930 = vadd.xlane.f32.xlu0 %v2923
    %v2931 = vpop.xlane.xlu0 %2930
    %v2932 = vrcp.pop 128.0
    %v2933 = vmul.f32 %v2925, %v2932
    %v2934 = vmul.f32 %v2927, %v2932
    %v2935 = vmul.f32 %v2929, %v2932
    %v2936 = vmul.f32 %v2931, %v2932
    %v2937 = vsub.f32 %v2920, %v2933
    %v2938 = vsub.f32 %v2921, %v2934
    %v2939 = vsub.f32 %v2922, %v2935
    %v2940 = vsub.f32 %v2923, %v2936
    %v2941 = vmul.f32 %v2937, %v2937
    %v2942 = vmul.f32 %v2938, %v2938
    %v2943 = vmul.f32 %v2939, %v2939
    %v2944 = vmul.f32 %v2940, %v2940
    %2945 = vadd.xlane.f32.xlu0 %v2941
    %v2946 = vpop.xlane.xlu0 %2945
    %2947 = vadd.xlane.f32.xlu0 %v2942
    %v2948 = vpop.xlane.xlu0 %2947
    %2949 = vadd.xlane.f32.xlu0 %v2943
    %v2950 = vpop.xlane.xlu0 %2949
    %2951 = vadd.xlane.f32.xlu0 %v2944
    %v2952 = vpop.xlane.xlu0 %2951
    %v2953 = vmul.f32 %v2946, %v2932
    %v2954 = vmul.f32 %v2948, %v2932
    %v2955 = vmul.f32 %v2950, %v2932
    %v2956 = vmul.f32 %v2952, %v2932
    %v2957 = vadd.f32 %v2953, 1e-05
    %v2958 = vadd.f32 %v2954, 1e-05
    %v2959 = vadd.f32 %v2955, 1e-05
    %v2960 = vadd.f32 %v2956, 1e-05
    %v2961 = vrsqrt.pop %v2957
    %v2962 = vrsqrt.pop %v2958
    %v2963 = vrsqrt.pop %v2959
    %v2964 = vrsqrt.pop %v2960
    %v2965 = vmul.f32 %v2937, %v2961
    %v2966 = vmul.f32 %v2938, %v2962
    %v2967 = vmul.f32 %v2939, %v2963
    %v2968 = vmul.f32 %v2940, %v2964
    %v2969 = vlaneseq
    %v2970 = vshrl.u32 %v2969, 7
    %v2971 = vsub.s32 4, %v2970
    %v2972 = vrot.slane %v93, %v2971
    %v2973 = vmul.f32 %v2965, %v2972
    %v2974 = vmul.f32 %v2966, %v2972
    %v2975 = vmul.f32 %v2967, %v2972
    %v2976 = vmul.f32 %v2968, %v2972
    %v2977 = vlaneseq
    %v2978 = vshrl.u32 %v2977, 7
    %v2979 = vsub.s32 5, %v2978
    %v2980 = vrot.slane %v93, %v2979
    %v2981 = vadd.f32 %v2973, %v2980
    %v2982 = vadd.f32 %v2974, %v2980
    %v2983 = vadd.f32 %v2975, %v2980
    %v2984 = vadd.f32 %v2976, %v2980
    %s2985 = scalar_lea.vmem [#allocation7], 512
    %v2986 = vld [vmem:[%s2985] sm:$0xff]
    %v2987 = vld [vmem:[%s2985 + $0x8] sm:$0xff]
    %v2988 = vld [vmem:[%s2985 + $0x10] sm:$0xff]
    %v2989 = vld [vmem:[%s2985 + $0x18] sm:$0xff]
    %v2990 = vld [vmem:[%s2985 + $0x20] sm:$0xff]
    %v2991 = vld [vmem:[%s2985 + $0x28] sm:$0xff]
    %v2992 = vld [vmem:[%s2985 + $0x30] sm:$0xff]
    %v2993 = vld [vmem:[%s2985 + $0x38] sm:$0xff]
    %v2994 = vld [vmem:[%s2985 + $0x40] sm:$0xff]
    %v2995 = vld [vmem:[%s2985 + $0x48] sm:$0xff]
    %v2996 = vld [vmem:[%s2985 + $0x50] sm:$0xff]
    %v2997 = vld [vmem:[%s2985 + $0x58] sm:$0xff]
    %v2998 = vld [vmem:[%s2985 + $0x60] sm:$0xff]
    %v2999 = vld [vmem:[%s2985 + $0x68] sm:$0xff]
    %v3000 = vld [vmem:[%s2985 + $0x70] sm:$0xff]
    %v3001 = vld [vmem:[%s2985 + $0x78] sm:$0xff]
    %s3002 = scalar_lea.vmem [#allocation7], 640
    %v3003 = vld [vmem:[%s3002] sm:$0xff]
    %v3004 = vld [vmem:[%s3002 + $0x8] sm:$0xff]
    %v3005 = vld [vmem:[%s3002 + $0x10] sm:$0xff]
    %v3006 = vld [vmem:[%s3002 + $0x18] sm:$0xff]
    %v3007 = vld [vmem:[%s3002 + $0x20] sm:$0xff]
    %v3008 = vld [vmem:[%s3002 + $0x28] sm:$0xff]
    %v3009 = vld [vmem:[%s3002 + $0x30] sm:$0xff]
    %v3010 = vld [vmem:[%s3002 + $0x38] sm:$0xff]
    %v3011 = vld [vmem:[%s3002 + $0x40] sm:$0xff]
    %v3012 = vld [vmem:[%s3002 + $0x48] sm:$0xff]
    %v3013 = vld [vmem:[%s3002 + $0x50] sm:$0xff]
    %v3014 = vld [vmem:[%s3002 + $0x58] sm:$0xff]
    %v3015 = vld [vmem:[%s3002 + $0x60] sm:$0xff]
    %v3016 = vld [vmem:[%s3002 + $0x68] sm:$0xff]
    %v3017 = vld [vmem:[%s3002 + $0x70] sm:$0xff]
    %v3018 = vld [vmem:[%s3002 + $0x78] sm:$0xff]
    %s3019 = scalar_lea.vmem [#allocation7], 768
    %v3020 = vld [vmem:[%s3019] sm:$0xff]
    %v3021 = vld [vmem:[%s3019 + $0x8] sm:$0xff]
    %v3022 = vld [vmem:[%s3019 + $0x10] sm:$0xff]
    %v3023 = vld [vmem:[%s3019 + $0x18] sm:$0xff]
    %v3024 = vld [vmem:[%s3019 + $0x20] sm:$0xff]
    %v3025 = vld [vmem:[%s3019 + $0x28] sm:$0xff]
    %v3026 = vld [vmem:[%s3019 + $0x30] sm:$0xff]
    %v3027 = vld [vmem:[%s3019 + $0x38] sm:$0xff]
    %v3028 = vld [vmem:[%s3019 + $0x40] sm:$0xff]
    %v3029 = vld [vmem:[%s3019 + $0x48] sm:$0xff]
    %v3030 = vld [vmem:[%s3019 + $0x50] sm:$0xff]
    %v3031 = vld [vmem:[%s3019 + $0x58] sm:$0xff]
    %v3032 = vld [vmem:[%s3019 + $0x60] sm:$0xff]
    %v3033 = vld [vmem:[%s3019 + $0x68] sm:$0xff]
    %v3034 = vld [vmem:[%s3019 + $0x70] sm:$0xff]
    %v3035 = vld [vmem:[%s3019 + $0x78] sm:$0xff]
    %s3036 = scalar_lea.vmem [#allocation7], 896
    %v3037 = vld [vmem:[%s3036] sm:$0xff]
    %v3038 = vld [vmem:[%s3036 + $0x8] sm:$0xff]
    %v3039 = vld [vmem:[%s3036 + $0x10] sm:$0xff]
    %v3040 = vld [vmem:[%s3036 + $0x18] sm:$0xff]
    %v3041 = vld [vmem:[%s3036 + $0x20] sm:$0xff]
    %v3042 = vld [vmem:[%s3036 + $0x28] sm:$0xff]
    %v3043 = vld [vmem:[%s3036 + $0x30] sm:$0xff]
    %v3044 = vld [vmem:[%s3036 + $0x38] sm:$0xff]
    %v3045 = vld [vmem:[%s3036 + $0x40] sm:$0xff]
    %v3046 = vld [vmem:[%s3036 + $0x48] sm:$0xff]
    %v3047 = vld [vmem:[%s3036 + $0x50] sm:$0xff]
    %v3048 = vld [vmem:[%s3036 + $0x58] sm:$0xff]
    %v3049 = vld [vmem:[%s3036 + $0x60] sm:$0xff]
    %v3050 = vld [vmem:[%s3036 + $0x68] sm:$0xff]
    %v3051 = vld [vmem:[%s3036 + $0x70] sm:$0xff]
    %v3052 = vld [vmem:[%s3036 + $0x78] sm:$0xff]
    %v3053 = vlaneseq
    %v3054 = vshrl.u32 %v3053, 7
    %v3055 = vsub.s32 6, %v3054
    %v3056 = vrot.slane %v93, %v3055
    %3057 = vmatprep.subr.mxu0 0.0
    %3058 = vmatpush1.msra.mxu0 %v2986
    %3059 = vmatprep.subr.mxu0 0.0
    %3060 = vmatpush1.msra.mxu0 %v2987
    %3061 = vmatprep.subr.mxu0 0.0
    %3062 = vmatpush1.msra.mxu0 %v2988
    %3063 = vmatprep.subr.mxu0 0.0
    %3064 = vmatpush1.msra.mxu0 %v2989
    %3065 = vmatprep.subr.mxu0 0.0
    %3066 = vmatpush1.msra.mxu0 %v2990
    %3067 = vmatprep.subr.mxu0 0.0
    %3068 = vmatpush1.msra.mxu0 %v2991
    %3069 = vmatprep.subr.mxu0 0.0
    %3070 = vmatpush1.msra.mxu0 %v2992
    %3071 = vmatprep.subr.mxu0 0.0
    %3072 = vmatpush1.msra.mxu0 %v2993
    %3073 = vmatprep.subr.mxu0 0.0
    %3074 = vmatpush1.msra.mxu0 %v2994
    %3075 = vmatprep.subr.mxu0 0.0
    %3076 = vmatpush1.msra.mxu0 %v2995
    %3077 = vmatprep.subr.mxu0 0.0
    %3078 = vmatpush1.msra.mxu0 %v2996
    %3079 = vmatprep.subr.mxu0 0.0
    %3080 = vmatpush1.msra.mxu0 %v2997
    %3081 = vmatprep.subr.mxu0 0.0
    %3082 = vmatpush1.msra.mxu0 %v2998
    %3083 = vmatprep.subr.mxu0 0.0
    %3084 = vmatpush1.msra.mxu0 %v2999
    %3085 = vmatprep.subr.mxu0 0.0
    %3086 = vmatpush1.msra.mxu0 %v3000
    %3087 = vmatprep.subr.mxu0 0.0
    %3088 = vmatpush1.msra.mxu0 %v3001
    %3089 = vmatprep.subr.mxu0 0.0
    %3090 = vmatpush1.msra.mxu0 0.0
    %3091 = vmatprep.subr.mxu0 0.0
    %3092 = vmatpush1.msra.mxu0 0.0
    %3093 = vmatprep.subr.mxu0 0.0
    %3094 = vmatpush1.msra.mxu0 0.0
    %3095 = vmatprep.subr.mxu0 0.0
    %3096 = vmatpush1.msra.mxu0 0.0
    %3097 = vmatprep.subr.mxu0 0.0
    %3098 = vmatpush1.msra.mxu0 0.0
    %3099 = vmatprep.subr.mxu0 0.0
    %3100 = vmatpush1.msra.mxu0 0.0
    %3101 = vmatprep.subr.mxu0 0.0
    %3102 = vmatpush1.msra.mxu0 0.0
    %3103 = vmatprep.subr.mxu0 0.0
    %3104 = vmatpush1.msra.mxu0 0.0
    %3105 = vmatprep.subr.mxu0 0.0
    %3106 = vmatpush1.msra.mxu0 0.0
    %3107 = vmatprep.subr.mxu0 0.0
    %3108 = vmatpush1.msra.mxu0 0.0
    %3109 = vmatprep.subr.mxu0 0.0
    %3110 = vmatpush1.msra.mxu0 0.0
    %3111 = vmatprep.subr.mxu0 0.0
    %3112 = vmatpush1.msra.mxu0 0.0
    %3113 = vmatprep.subr.mxu0 0.0
    %3114 = vmatpush1.msra.mxu0 0.0
    %3115 = vmatprep.subr.mxu0 0.0
    %3116 = vmatpush1.msra.mxu0 0.0
    %3117 = vmatprep.subr.mxu0 0.0
    %3118 = vmatpush1.msra.mxu0 0.0
    %3119 = vmatprep.subr.mxu0 0.0
    %3120 = vmatpush1.msra.mxu0 0.0
    %3121 = vmatprep.mubr.f32.mxu0 0.0
    %3122 = vmatmul.mubr.f32.gmra.mrb[0].mxu0 %v2981
    %v3123 = vpop.f32.mrb[0].mxu0
    %v3124 = vadd.f32 %v3056, %v3123
    %v3125 = vpop.f32.mrb[0].mxu0
    %3126 = vmatprep.mubr.f32.mxu0 0.0
    %3127 = vmatmul.mubr.f32.gmra.mrb[0].mxu0 %v2982
    %v3128 = vpop.f32.mrb[0].mxu0
    %v3129 = vadd.f32 %v3056, %v3128
    %v3130 = vpop.f32.mrb[0].mxu0
    %3131 = vmatprep.mubr.f32.mxu0 0.0
    %3132 = vmatmul.mubr.f32.gmra.mrb[0].mxu0 %v2983
    %v3133 = vpop.f32.mrb[0].mxu0
    %v3134 = vadd.f32 %v3056, %v3133
    %v3135 = vpop.f32.mrb[0].mxu0
    %3136 = vmatprep.mubr.f32.mxu0 0.0
    %3137 = vmatmul.mubr.f32.gmra.mrb[0].mxu0 %v2984
    %v3138 = vpop.f32.mrb[0].mxu0
    %v3139 = vadd.f32 %v3056, %v3138
    %v3140 = vpop.f32.mrb[0].mxu0
    %3141 = vdwg.mxu0
    %3142 = vmatprep.subr.mxu0 0.0
    %3143 = vmatpush1.msra.mxu0 %v1128
    %3144 = vmatprep.subr.mxu0 0.0
    %3145 = vmatpush1.msra.mxu0 %v1129
    %3146 = vmatprep.subr.mxu0 0.0
    %3147 = vmatpush1.msra.mxu0 %v1130
    %3148 = vmatprep.subr.mxu0 0.0
    %3149 = vmatpush1.msra.mxu0 %v1131
    %3150 = vmatprep.subr.mxu0 0.0
    %3151 = vmatpush1.msra.mxu0 %v1132
    %3152 = vmatprep.subr.mxu0 0.0
    %3153 = vmatpush1.msra.mxu0 %v1133
    %3154 = vmatprep.subr.mxu0 0.0
    %3155 = vmatpush1.msra.mxu0 %v1134
    %3156 = vmatprep.subr.mxu0 0.0
    %3157 = vmatpush1.msra.mxu0 %v1135
    %3158 = vmatprep.subr.mxu0 0.0
    %3159 = vmatpush1.msra.mxu0 %v1136
    %3160 = vmatprep.subr.mxu0 0.0
    %3161 = vmatpush1.msra.mxu0 %v1137
    %3162 = vmatprep.subr.mxu0 0.0
    %3163 = vmatpush1.msra.mxu0 %v1138
    %3164 = vmatprep.subr.mxu0 0.0
    %3165 = vmatpush1.msra.mxu0 %v1139
    %3166 = vmatprep.subr.mxu0 0.0
    %3167 = vmatpush1.msra.mxu0 %v1140
    %3168 = vmatprep.subr.mxu0 0.0
    %3169 = vmatpush1.msra.mxu0 %v1141
    %3170 = vmatprep.subr.mxu0 0.0
    %3171 = vmatpush1.msra.mxu0 %v1142
    %3172 = vmatprep.subr.mxu0 0.0
    %3173 = vmatpush1.msra.mxu0 %v1143
    %3174 = vmatprep.subr.mxu0 0.0
    %3175 = vmatpush1.msra.mxu0 0.0
    %3176 = vmatprep.subr.mxu0 0.0
    %3177 = vmatpush1.msra.mxu0 0.0
    %3178 = vmatprep.subr.mxu0 0.0
    %3179 = vmatpush1.msra.mxu0 0.0
    %3180 = vmatprep.subr.mxu0 0.0
    %3181 = vmatpush1.msra.mxu0 0.0
    %3182 = vmatprep.subr.mxu0 0.0
    %3183 = vmatpush1.msra.mxu0 0.0
    %3184 = vmatprep.subr.mxu0 0.0
    %3185 = vmatpush1.msra.mxu0 0.0
    %3186 = vmatprep.subr.mxu0 0.0
    %3187 = vmatpush1.msra.mxu0 0.0
    %3188 = vmatprep.subr.mxu0 0.0
    %3189 = vmatpush1.msra.mxu0 0.0
    %3190 = vmatprep.subr.mxu0 0.0
    %3191 = vmatpush1.msra.mxu0 0.0
    %3192 = vmatprep.subr.mxu0 0.0
    %3193 = vmatpush1.msra.mxu0 0.0
    %3194 = vmatprep.subr.mxu0 0.0
    %3195 = vmatpush1.msra.mxu0 0.0
    %3196 = vmatprep.subr.mxu0 0.0
    %3197 = vmatpush1.msra.mxu0 0.0
    %3198 = vmatprep.subr.mxu0 0.0
    %3199 = vmatpush1.msra.mxu0 0.0
    %3200 = vmatprep.subr.mxu0 0.0
    %3201 = vmatpush1.msra.mxu0 0.0
    %3202 = vmatprep.subr.mxu0 0.0
    %3203 = vmatpush1.msra.mxu0 0.0
    %3204 = vmatprep.subr.mxu0 0.0
    %3205 = vmatpush1.msra.mxu0 0.0
    %3206 = vmatprep.mubr.f32.mxu0 0.0
    %3207 = vmatmul.mubr.f32.gmra.mrb[0].mxu0 %v3124
    %v3208 = vpop.f32.mrb[0].mxu0
    %v3209 = vadd.f32 0.0, %v3208
    %v3210 = vpop.f32.mrb[0].mxu0
    %3211 = vmatprep.mubr.f32.mxu0 0.0
    %3212 = vmatmul.mubr.f32.gmra.mrb[0].mxu0 %v3129
    %v3213 = vpop.f32.mrb[0].mxu0
    %v3214 = vadd.f32 0.0, %v3213
    %v3215 = vpop.f32.mrb[0].mxu0
    %3216 = vmatprep.mubr.f32.mxu0 0.0
    %3217 = vmatmul.mubr.f32.gmra.mrb[0].mxu0 %v3134
    %v3218 = vpop.f32.mrb[0].mxu0
    %v3219 = vadd.f32 0.0, %v3218
    %v3220 = vpop.f32.mrb[0].mxu0
    %3221 = vmatprep.mubr.f32.mxu0 0.0
    %3222 = vmatmul.mubr.f32.gmra.mrb[0].mxu0 %v3139
    %v3223 = vpop.f32.mrb[0].mxu0
    %v3224 = vadd.f32 0.0, %v3223
    %v3225 = vpop.f32.mrb[0].mxu0
    %3226 = vdwg.mxu0
    %v3227 = vmul.f32 %v3124, %v230
    %v3228 = vmul.f32 %v3129, %v333
    %v3229 = vmul.f32 %v3134, %v436
    %v3230 = vmul.f32 %v3139, %v539
    %v3231 = vmul.f32 %v3209, %v643
    %v3232 = vmul.f32 %v3214, %v747
    %v3233 = vmul.f32 %v3219, %v851
    %v3234 = vmul.f32 %v3224, %v955
    %v3235 = vadd.f32 %v3227, %v3231
    %v3236 = vadd.f32 %v3228, %v3232
    %v3237 = vadd.f32 %v3229, %v3233
    %v3238 = vadd.f32 %v3230, %v3234
    %v3239 = vlaneseq
    %v3240 = vshrl.u32 %v3239, 7
    %v3241 = vsub.s32 7, %v3240
    %v3242 = vrot.slane %v93, %v3241
    %3243 = vmatprep.subr.mxu0 0.0
    %3244 = vmatpush1.msra.mxu0 %v3003
    %3245 = vmatprep.subr.mxu0 0.0
    %3246 = vmatpush1.msra.mxu0 %v3004
    %3247 = vmatprep.subr.mxu0 0.0
    %3248 = vmatpush1.msra.mxu0 %v3005
    %3249 = vmatprep.subr.mxu0 0.0
    %3250 = vmatpush1.msra.mxu0 %v3006
    %3251 = vmatprep.subr.mxu0 0.0
    %3252 = vmatpush1.msra.mxu0 %v3007
    %3253 = vmatprep.subr.mxu0 0.0
    %3254 = vmatpush1.msra.mxu0 %v3008
    %3255 = vmatprep.subr.mxu0 0.0
    %3256 = vmatpush1.msra.mxu0 %v3009
    %3257 = vmatprep.subr.mxu0 0.0
    %3258 = vmatpush1.msra.mxu0 %v3010
    %3259 = vmatprep.subr.mxu0 0.0
    %3260 = vmatpush1.msra.mxu0 %v3011
    %3261 = vmatprep.subr.mxu0 0.0
    %3262 = vmatpush1.msra.mxu0 %v3012
    %3263 = vmatprep.subr.mxu0 0.0
    %3264 = vmatpush1.msra.mxu0 %v3013
    %3265 = vmatprep.subr.mxu0 0.0
    %3266 = vmatpush1.msra.mxu0 %v3014
    %3267 = vmatprep.subr.mxu0 0.0
    %3268 = vmatpush1.msra.mxu0 %v3015
    %3269 = vmatprep.subr.mxu0 0.0
    %3270 = vmatpush1.msra.mxu0 %v3016
    %3271 = vmatprep.subr.mxu0 0.0
    %3272 = vmatpush1.msra.mxu0 %v3017
    %3273 = vmatprep.subr.mxu0 0.0
    %3274 = vmatpush1.msra.mxu0 %v3018
    %3275 = vmatprep.subr.mxu0 0.0
    %3276 = vmatpush1.msra.mxu0 0.0
    %3277 = vmatprep.subr.mxu0 0.0
    %3278 = vmatpush1.msra.mxu0 0.0
    %3279 = vmatprep.subr.mxu0 0.0
    %3280 = vmatpush1.msra.mxu0 0.0
    %3281 = vmatprep.subr.mxu0 0.0
    %3282 = vmatpush1.msra.mxu0 0.0
    %3283 = vmatprep.subr.mxu0 0.0
    %3284 = vmatpush1.msra.mxu0 0.0
    %3285 = vmatprep.subr.mxu0 0.0
    %3286 = vmatpush1.msra.mxu0 0.0
    %3287 = vmatprep.subr.mxu0 0.0
    %3288 = vmatpush1.msra.mxu0 0.0
    %3289 = vmatprep.subr.mxu0 0.0
    %3290 = vmatpush1.msra.mxu0 0.0
    %3291 = vmatprep.subr.mxu0 0.0
    %3292 = vmatpush1.msra.mxu0 0.0
    %3293 = vmatprep.subr.mxu0 0.0
    %3294 = vmatpush1.msra.mxu0 0.0
    %3295 = vmatprep.subr.mxu0 0.0
    %3296 = vmatpush1.msra.mxu0 0.0
    %3297 = vmatprep.subr.mxu0 0.0
    %3298 = vmatpush1.msra.mxu0 0.0
    %3299 = vmatprep.subr.mxu0 0.0
    %3300 = vmatpush1.msra.mxu0 0.0
    %3301 = vmatprep.subr.mxu0 0.0
    %3302 = vmatpush1.msra.mxu0 0.0
    %3303 = vmatprep.subr.mxu0 0.0
    %3304 = vmatpush1.msra.mxu0 0.0
    %3305 = vmatprep.subr.mxu0 0.0
    %3306 = vmatpush1.msra.mxu0 0.0
    %3307 = vmatprep.mubr.f32.mxu0 0.0
    %3308 = vmatmul.mubr.f32.gmra.mrb[0].mxu0 %v2981
    %v3309 = vpop.f32.mrb[0].mxu0
    %v3310 = vadd.f32 %v3242, %v3309
    %v3311 = vpop.f32.mrb[0].mxu0
    %3312 = vmatprep.mubr.f32.mxu0 0.0
    %3313 = vmatmul.mubr.f32.gmra.mrb[0].mxu0 %v2982
    %v3314 = vpop.f32.mrb[0].mxu0
    %v3315 = vadd.f32 %v3242, %v3314
    %v3316 = vpop.f32.mrb[0].mxu0
    %3317 = vmatprep.mubr.f32.mxu0 0.0
    %3318 = vmatmul.mubr.f32.gmra.mrb[0].mxu0 %v2983
    %v3319 = vpop.f32.mrb[0].mxu0
    %v3320 = vadd.f32 %v3242, %v3319
    %v3321 = vpop.f32.mrb[0].mxu0
    %3322 = vmatprep.mubr.f32.mxu0 0.0
    %3323 = vmatmul.mubr.f32.gmra.mrb[0].mxu0 %v2984
    %v3324 = vpop.f32.mrb[0].mxu0
    %v3325 = vadd.f32 %v3242, %v3324
    %v3326 = vpop.f32.mrb[0].mxu0
    %3327 = vdwg.mxu0
    %3328 = vmatprep.subr.mxu0 0.0
    %3329 = vmatpush1.msra.mxu0 %v1128
    %3330 = vmatprep.subr.mxu0 0.0
    %3331 = vmatpush1.msra.mxu0 %v1129
    %3332 = vmatprep.subr.mxu0 0.0
    %3333 = vmatpush1.msra.mxu0 %v1130
    %3334 = vmatprep.subr.mxu0 0.0
    %3335 = vmatpush1.msra.mxu0 %v1131
    %3336 = vmatprep.subr.mxu0 0.0
    %3337 = vmatpush1.msra.mxu0 %v1132
    %3338 = vmatprep.subr.mxu0 0.0
    %3339 = vmatpush1.msra.mxu0 %v1133
    %3340 = vmatprep.subr.mxu0 0.0
    %3341 = vmatpush1.msra.mxu0 %v1134
    %3342 = vmatprep.subr.mxu0 0.0
    %3343 = vmatpush1.msra.mxu0 %v1135
    %3344 = vmatprep.subr.mxu0 0.0
    %3345 = vmatpush1.msra.mxu0 %v1136
    %3346 = vmatprep.subr.mxu0 0.0
    %3347 = vmatpush1.msra.mxu0 %v1137
    %3348 = vmatprep.subr.mxu0 0.0
    %3349 = vmatpush1.msra.mxu0 %v1138
    %3350 = vmatprep.subr.mxu0 0.0
    %3351 = vmatpush1.msra.mxu0 %v1139
    %3352 = vmatprep.subr.mxu0 0.0
    %3353 = vmatpush1.msra.mxu0 %v1140
    %3354 = vmatprep.subr.mxu0 0.0
    %3355 = vmatpush1.msra.mxu0 %v1141
    %3356 = vmatprep.subr.mxu0 0.0
    %3357 = vmatpush1.msra.mxu0 %v1142
    %3358 = vmatprep.subr.mxu0 0.0
    %3359 = vmatpush1.msra.mxu0 %v1143
    %3360 = vmatprep.subr.mxu0 0.0
    %3361 = vmatpush1.msra.mxu0 0.0
    %3362 = vmatprep.subr.mxu0 0.0
    %3363 = vmatpush1.msra.mxu0 0.0
    %3364 = vmatprep.subr.mxu0 0.0
    %3365 = vmatpush1.msra.mxu0 0.0
    %3366 = vmatprep.subr.mxu0 0.0
    %3367 = vmatpush1.msra.mxu0 0.0
    %3368 = vmatprep.subr.mxu0 0.0
    %3369 = vmatpush1.msra.mxu0 0.0
    %3370 = vmatprep.subr.mxu0 0.0
    %3371 = vmatpush1.msra.mxu0 0.0
    %3372 = vmatprep.subr.mxu0 0.0
    %3373 = vmatpush1.msra.mxu0 0.0
    %3374 = vmatprep.subr.mxu0 0.0
    %3375 = vmatpush1.msra.mxu0 0.0
    %3376 = vmatprep.subr.mxu0 0.0
    %3377 = vmatpush1.msra.mxu0 0.0
    %3378 = vmatprep.subr.mxu0 0.0
    %3379 = vmatpush1.msra.mxu0 0.0
    %3380 = vmatprep.subr.mxu0 0.0
    %3381 = vmatpush1.msra.mxu0 0.0
    %3382 = vmatprep.subr.mxu0 0.0
    %3383 = vmatpush1.msra.mxu0 0.0
    %3384 = vmatprep.subr.mxu0 0.0
    %3385 = vmatpush1.msra.mxu0 0.0
    %3386 = vmatprep.subr.mxu0 0.0
    %3387 = vmatpush1.msra.mxu0 0.0
    %3388 = vmatprep.subr.mxu0 0.0
    %3389 = vmatpush1.msra.mxu0 0.0
    %3390 = vmatprep.subr.mxu0 0.0
    %3391 = vmatpush1.msra.mxu0 0.0
    %3392 = vmatprep.mubr.f32.mxu0 0.0
    %3393 = vmatmul.mubr.f32.gmra.mrb[0].mxu0 %v3310
    %v3394 = vpop.f32.mrb[0].mxu0
    %v3395 = vadd.f32 0.0, %v3394
    %v3396 = vpop.f32.mrb[0].mxu0
    %3397 = vmatprep.mubr.f32.mxu0 0.0
    %3398 = vmatmul.mubr.f32.gmra.mrb[0].mxu0 %v3315
    %v3399 = vpop.f32.mrb[0].mxu0
    %v3400 = vadd.f32 0.0, %v3399
    %v3401 = vpop.f32.mrb[0].mxu0
    %3402 = vmatprep.mubr.f32.mxu0 0.0
    %3403 = vmatmul.mubr.f32.gmra.mrb[0].mxu0 %v3320
    %v3404 = vpop.f32.mrb[0].mxu0
    %v3405 = vadd.f32 0.0, %v3404
    %v3406 = vpop.f32.mrb[0].mxu0
    %3407 = vmatprep.mubr.f32.mxu0 0.0
    %3408 = vmatmul.mubr.f32.gmra.mrb[0].mxu0 %v3325
    %v3409 = vpop.f32.mrb[0].mxu0
    %v3410 = vadd.f32 0.0, %v3409
    %v3411 = vpop.f32.mrb[0].mxu0
    %3412 = vdwg.mxu0
    %v3413 = vmul.f32 %v3310, %v230
    %v3414 = vmul.f32 %v3315, %v333
    %v3415 = vmul.f32 %v3320, %v436
    %v3416 = vmul.f32 %v3325, %v539
    %v3417 = vmul.f32 %v3395, %v643
    %v3418 = vmul.f32 %v3400, %v747
    %v3419 = vmul.f32 %v3405, %v851
    %v3420 = vmul.f32 %v3410, %v955
    %v3421 = vadd.f32 %v3413, %v3417
    %v3422 = vadd.f32 %v3414, %v3418
    %v3423 = vadd.f32 %v3415, %v3419
    %v3424 = vadd.f32 %v3416, %v3420
    %v3425 = vlaneseq
    %v3426 = vshrl.u32 %v3425, 7
    %v3427 = vsub.s32 0, %v3426
    %v3428 = vrot.slane %v94, %v3427
    %3429 = vmatprep.subr.mxu0 0.0
    %3430 = vmatpush1.msra.mxu0 %v3020
    %3431 = vmatprep.subr.mxu0 0.0
    %3432 = vmatpush1.msra.mxu0 %v3021
    %3433 = vmatprep.subr.mxu0 0.0
    %3434 = vmatpush1.msra.mxu0 %v3022
    %3435 = vmatprep.subr.mxu0 0.0
    %3436 = vmatpush1.msra.mxu0 %v3023
    %3437 = vmatprep.subr.mxu0 0.0
    %3438 = vmatpush1.msra.mxu0 %v3024
    %3439 = vmatprep.subr.mxu0 0.0
    %3440 = vmatpush1.msra.mxu0 %v3025
    %3441 = vmatprep.subr.mxu0 0.0
    %3442 = vmatpush1.msra.mxu0 %v3026
    %3443 = vmatprep.subr.mxu0 0.0
    %3444 = vmatpush1.msra.mxu0 %v3027
    %3445 = vmatprep.subr.mxu0 0.0
    %3446 = vmatpush1.msra.mxu0 %v3028
    %3447 = vmatprep.subr.mxu0 0.0
    %3448 = vmatpush1.msra.mxu0 %v3029
    %3449 = vmatprep.subr.mxu0 0.0
    %3450 = vmatpush1.msra.mxu0 %v3030
    %3451 = vmatprep.subr.mxu0 0.0
    %3452 = vmatpush1.msra.mxu0 %v3031
    %3453 = vmatprep.subr.mxu0 0.0
    %3454 = vmatpush1.msra.mxu0 %v3032
    %3455 = vmatprep.subr.mxu0 0.0
    %3456 = vmatpush1.msra.mxu0 %v3033
    %3457 = vmatprep.subr.mxu0 0.0
    %3458 = vmatpush1.msra.mxu0 %v3034
    %3459 = vmatprep.subr.mxu0 0.0
    %3460 = vmatpush1.msra.mxu0 %v3035
    %3461 = vmatprep.subr.mxu0 0.0
    %3462 = vmatpush1.msra.mxu0 0.0
    %3463 = vmatprep.subr.mxu0 0.0
    %3464 = vmatpush1.msra.mxu0 0.0
    %3465 = vmatprep.subr.mxu0 0.0
    %3466 = vmatpush1.msra.mxu0 0.0
    %3467 = vmatprep.subr.mxu0 0.0
    %3468 = vmatpush1.msra.mxu0 0.0
    %3469 = vmatprep.subr.mxu0 0.0
    %3470 = vmatpush1.msra.mxu0 0.0
    %3471 = vmatprep.subr.mxu0 0.0
    %3472 = vmatpush1.msra.mxu0 0.0
    %3473 = vmatprep.subr.mxu0 0.0
    %3474 = vmatpush1.msra.mxu0 0.0
    %3475 = vmatprep.subr.mxu0 0.0
    %3476 = vmatpush1.msra.mxu0 0.0
    %3477 = vmatprep.subr.mxu0 0.0
    %3478 = vmatpush1.msra.mxu0 0.0
    %3479 = vmatprep.subr.mxu0 0.0
    %3480 = vmatpush1.msra.mxu0 0.0
    %3481 = vmatprep.subr.mxu0 0.0
    %3482 = vmatpush1.msra.mxu0 0.0
    %3483 = vmatprep.subr.mxu0 0.0
    %3484 = vmatpush1.msra.mxu0 0.0
    %3485 = vmatprep.subr.mxu0 0.0
    %3486 = vmatpush1.msra.mxu0 0.0
    %3487 = vmatprep.subr.mxu0 0.0
    %3488 = vmatpush1.msra.mxu0 0.0
    %3489 = vmatprep.subr.mxu0 0.0
    %3490 = vmatpush1.msra.mxu0 0.0
    %3491 = vmatprep.subr.mxu0 0.0
    %3492 = vmatpush1.msra.mxu0 0.0
    %3493 = vmatprep.mubr.f32.mxu0 0.0
    %3494 = vmatmul.mubr.f32.gmra.mrb[0].mxu0 %v2981
    %v3495 = vpop.f32.mrb[0].mxu0
    %v3496 = vadd.f32 %v3428, %v3495
    %v3497 = vpop.f32.mrb[0].mxu0
    %3498 = vmatprep.mubr.f32.mxu0 0.0
    %3499 = vmatmul.mubr.f32.gmra.mrb[0].mxu0 %v2982
    %v3500 = vpop.f32.mrb[0].mxu0
    %v3501 = vadd.f32 %v3428, %v3500
    %v3502 = vpop.f32.mrb[0].mxu0
    %3503 = vmatprep.mubr.f32.mxu0 0.0
    %3504 = vmatmul.mubr.f32.gmra.mrb[0].mxu0 %v2983
    %v3505 = vpop.f32.mrb[0].mxu0
    %v3506 = vadd.f32 %v3428, %v3505
    %v3507 = vpop.f32.mrb[0].mxu0
    %3508 = vmatprep.mubr.f32.mxu0 0.0
    %3509 = vmatmul.mubr.f32.gmra.mrb[0].mxu0 %v2984
    %v3510 = vpop.f32.mrb[0].mxu0
    %v3511 = vadd.f32 %v3428, %v3510
    %v3512 = vpop.f32.mrb[0].mxu0
    %3513 = vdwg.mxu0
    %v3515 = vsel %vm1672, %v3235, 0
    %v3518 = vsel %vm1672, %v3236, 0
    %v3521 = vsel %vm1672, %v3237, 0
    %v3524 = vsel %vm1672, %v3238, 0
    %v3527 = vsel %vm1672, %v3421, 0
    %v3530 = vsel %vm1672, %v3422, 0
    %v3533 = vsel %vm1672, %v3423, 0
    %v3536 = vsel %vm1672, %v3424, 0
    %3538 = vmatprep.subr.mxu0 0.0
    %3539 = vmatpush1.xpose.msra.mxu0 %v3527
    %3540 = vmatprep.subr.mxu0 0.0
    %3541 = vmatpush1.xpose.msra.mxu0 %v3530
    %3542 = vmatprep.subr.mxu0 0.0
    %3543 = vmatpush1.xpose.msra.mxu0 %v3533
    %3544 = vmatprep.subr.mxu0 0.0
    %3545 = vmatpush1.xpose.msra.mxu0 %v3536
    %3546 = vmatprep.subr.mxu0 0.0
    %3547 = vmatpush1.xpose.msra.mxu0 0.0
    %3548 = vmatprep.subr.mxu0 0.0
    %3549 = vmatpush1.xpose.msra.mxu0 0.0
    %3550 = vmatprep.subr.mxu0 0.0
    %3551 = vmatpush1.xpose.msra.mxu0 0.0
    %3552 = vmatprep.subr.mxu0 0.0
    %3553 = vmatpush1.xpose.msra.mxu0 0.0
    %3554 = vmatprep.subr.mxu0 0.0
    %3555 = vmatpush1.xpose.msra.mxu0 0.0
    %3556 = vmatprep.subr.mxu0 0.0
    %3557 = vmatpush1.xpose.msra.mxu0 0.0
    %3558 = vmatprep.subr.mxu0 0.0
    %3559 = vmatpush1.xpose.msra.mxu0 0.0
    %3560 = vmatprep.subr.mxu0 0.0
    %3561 = vmatpush1.xpose.msra.mxu0 0.0
    %3562 = vmatprep.subr.mxu0 0.0
    %3563 = vmatpush1.xpose.msra.mxu0 0.0
    %3564 = vmatprep.subr.mxu0 0.0
    %3565 = vmatpush1.xpose.msra.mxu0 0.0
    %3566 = vmatprep.subr.mxu0 0.0
    %3567 = vmatpush1.xpose.msra.mxu0 0.0
    %3568 = vmatprep.subr.mxu0 0.0
    %3569 = vmatpush1.xpose.msra.mxu0 0.0
    %3570 = vmatprep.subr.mxu0 0.0
    %3571 = vmatpush1.xpose.msra.mxu0 0.0
    %3572 = vmatprep.subr.mxu0 0.0
    %3573 = vmatpush1.xpose.msra.mxu0 0.0
    %3574 = vmatprep.subr.mxu0 0.0
    %3575 = vmatpush1.xpose.msra.mxu0 0.0
    %3576 = vmatprep.subr.mxu0 0.0
    %3577 = vmatpush1.xpose.msra.mxu0 0.0
    %3578 = vmatprep.subr.mxu0 0.0
    %3579 = vmatpush1.xpose.msra.mxu0 0.0
    %3580 = vmatprep.subr.mxu0 0.0
    %3581 = vmatpush1.xpose.msra.mxu0 0.0
    %3582 = vmatprep.subr.mxu0 0.0
    %3583 = vmatpush1.xpose.msra.mxu0 0.0
    %3584 = vmatprep.subr.mxu0 0.0
    %3585 = vmatpush1.xpose.msra.mxu0 0.0
    %3586 = vmatprep.subr.mxu0 0.0
    %3587 = vmatpush1.xpose.msra.mxu0 0.0
    %3588 = vmatprep.subr.mxu0 0.0
    %3589 = vmatpush1.xpose.msra.mxu0 0.0
    %3590 = vmatprep.subr.mxu0 0.0
    %3591 = vmatpush1.xpose.msra.mxu0 0.0
    %3592 = vmatprep.subr.mxu0 0.0
    %3593 = vmatpush1.xpose.msra.mxu0 0.0
    %3594 = vmatprep.subr.mxu0 0.0
    %3595 = vmatpush1.xpose.msra.mxu0 0.0
    %3596 = vmatprep.subr.mxu0 0.0
    %3597 = vmatpush1.xpose.msra.mxu0 0.0
    %3598 = vmatprep.subr.mxu0 0.0
    %3599 = vmatpush1.xpose.msra.mxu0 0.0
    %3600 = vmatprep.subr.mxu0 0.0
    %3601 = vmatpush1.xpose.msra.mxu0 0.0
    %3602 = vmatprep.mubr.f32.mxu0 0.0
    %3603 = vmatmul.mubr.f32.gmra.mrb[0].mxu0 %v3515
    %v3604 = vpop.f32.mrb[0].mxu0
    %v3605 = vadd.f32 0.0, %v3604
    %v3606 = vpop.f32.mrb[0].mxu0
    %3607 = vmatprep.mubr.f32.mxu0 0.0
    %3608 = vmatmul.mubr.f32.gmra.mrb[0].mxu0 %v3518
    %v3609 = vpop.f32.mrb[0].mxu0
    %v3610 = vadd.f32 0.0, %v3609
    %v3611 = vpop.f32.mrb[0].mxu0
    %3612 = vmatprep.mubr.f32.mxu0 0.0
    %3613 = vmatmul.mubr.f32.gmra.mrb[0].mxu0 %v3521
    %v3614 = vpop.f32.mrb[0].mxu0
    %v3615 = vadd.f32 0.0, %v3614
    %v3616 = vpop.f32.mrb[0].mxu0
    %3617 = vmatprep.mubr.f32.mxu0 0.0
    %3618 = vmatmul.mubr.f32.gmra.mrb[0].mxu0 %v3524
    %v3619 = vpop.f32.mrb[0].mxu0
    %v3620 = vadd.f32 0.0, %v3619
    %v3621 = vpop.f32.mrb[0].mxu0
    %3622 = vdwg.mxu0
    %v3623 = vmul.f32 %v3605, 0.088388346
    %v3624 = vmul.f32 %v3610, 0.088388346
    %v3625 = vmul.f32 %v3615, 0.088388346
    %v3626 = vmul.f32 %v3620, 0.088388346
    %v3627 = vsel %vm120, %v3623, -1e+30
    %v3628 = vsel %vm121, %v3624, -1e+30
    %v3629 = vsel %vm122, %v3625, -1e+30
    %v3630 = vsel %vm123, %v3626, -1e+30
    %v3631 = vsel %vm1672, %v3627, -inf
    %3632 = vmax.xlane.f32.xlu0 %v3631
    %v3633 = vpop.xlane.xlu0 %3632
    %v3634 = vsel %vm1672, %v3628, -inf
    %3635 = vmax.xlane.f32.xlu0 %v3634
    %v3636 = vpop.xlane.xlu0 %3635
    %v3637 = vsel %vm1672, %v3629, -inf
    %3638 = vmax.xlane.f32.xlu0 %v3637
    %v3639 = vpop.xlane.xlu0 %3638
    %v3640 = vsel %vm1672, %v3630, -inf
    %3641 = vmax.xlane.f32.xlu0 %v3640
    %v3642 = vpop.xlane.xlu0 %3641
    %v3643 = vsub.f32 %v3627, %v3633
    %v3644 = vsub.f32 %v3628, %v3636
    %v3645 = vsub.f32 %v3629, %v3639
    %v3646 = vsub.f32 %v3630, %v3642
    %v3647 = vmul.f32 %v3643, 1.442695
    %v3648 = vpow.pop %v3647
    %v3649 = vmul.f32 %v3644, 1.442695
    %v3650 = vpow.pop %v3649
    %v3651 = vmul.f32 %v3645, 1.442695
    %v3652 = vpow.pop %v3651
    %v3653 = vmul.f32 %v3646, 1.442695
    %v3654 = vpow.pop %v3653
    %v3655 = vsel %vm1672, %v3648, 0.0
    %3656 = vadd.xlane.f32.xlu0 %v3655
    %v3657 = vpop.xlane.xlu0 %3656
    %v3658 = vsel %vm1672, %v3650, 0.0
    %3659 = vadd.xlane.f32.xlu0 %v3658
    %v3660 = vpop.xlane.xlu0 %3659
    %v3661 = vsel %vm1672, %v3652, 0.0
    %3662 = vadd.xlane.f32.xlu0 %v3661
    %v3663 = vpop.xlane.xlu0 %3662
    %v3664 = vsel %vm1672, %v3654, 0.0
    %3665 = vadd.xlane.f32.xlu0 %v3664
    %v3666 = vpop.xlane.xlu0 %3665
    %v3667 = vrcp.pop %v3657
    %v3668 = vrcp.pop %v3660
    %v3669 = vrcp.pop %v3663
    %v3670 = vrcp.pop %v3666
    %v3671 = vmul.f32 %v3648, %v3667
    %v3672 = vmul.f32 %v3650, %v3668
    %v3673 = vmul.f32 %v3652, %v3669
    %v3674 = vmul.f32 %v3654, %v3670
    %v3676 = vsel %vm1672, %v3671, 0
    %v3679 = vsel %vm1672, %v3672, 0
    %v3682 = vsel %vm1672, %v3673, 0
    %v3685 = vsel %vm1672, %v3674, 0
    %3687 = vmatprep.subr.mxu0 0.0
    %3688 = vmatpush1.msra.mxu0 %v3496
    %3689 = vmatprep.subr.mxu0 0.0
    %3690 = vmatpush1.msra.mxu0 %v3501
    %3691 = vmatprep.subr.mxu0 0.0
    %3692 = vmatpush1.msra.mxu0 %v3506
    %3693 = vmatprep.subr.mxu0 0.0
    %3694 = vmatpush1.msra.mxu0 %v3511
    %3695 = vmatprep.subr.mxu0 0.0
    %3696 = vmatpush1.msra.mxu0 0.0
    %3697 = vmatprep.subr.mxu0 0.0
    %3698 = vmatpush1.msra.mxu0 0.0
    %3699 = vmatprep.subr.mxu0 0.0
    %3700 = vmatpush1.msra.mxu0 0.0
    %3701 = vmatprep.subr.mxu0 0.0
    %3702 = vmatpush1.msra.mxu0 0.0
    %3703 = vmatprep.subr.mxu0 0.0
    %3704 = vmatpush1.msra.mxu0 0.0
    %3705 = vmatprep.subr.mxu0 0.0
    %3706 = vmatpush1.msra.mxu0 0.0
    %3707 = vmatprep.subr.mxu0 0.0
    %3708 = vmatpush1.msra.mxu0 0.0
    %3709 = vmatprep.subr.mxu0 0.0
    %3710 = vmatpush1.msra.mxu0 0.0
    %3711 = vmatprep.subr.mxu0 0.0
    %3712 = vmatpush1.msra.mxu0 0.0
    %3713 = vmatprep.subr.mxu0 0.0
    %3714 = vmatpush1.msra.mxu0 0.0
    %3715 = vmatprep.subr.mxu0 0.0
    %3716 = vmatpush1.msra.mxu0 0.0
    %3717 = vmatprep.subr.mxu0 0.0
    %3718 = vmatpush1.msra.mxu0 0.0
    %3719 = vmatprep.subr.mxu0 0.0
    %3720 = vmatpush1.msra.mxu0 0.0
    %3721 = vmatprep.subr.mxu0 0.0
    %3722 = vmatpush1.msra.mxu0 0.0
    %3723 = vmatprep.subr.mxu0 0.0
    %3724 = vmatpush1.msra.mxu0 0.0
    %3725 = vmatprep.subr.mxu0 0.0
    %3726 = vmatpush1.msra.mxu0 0.0
    %3727 = vmatprep.subr.mxu0 0.0
    %3728 = vmatpush1.msra.mxu0 0.0
    %3729 = vmatprep.subr.mxu0 0.0
    %3730 = vmatpush1.msra.mxu0 0.0
    %3731 = vmatprep.subr.mxu0 0.0
    %3732 = vmatpush1.msra.mxu0 0.0
    %3733 = vmatprep.subr.mxu0 0.0
    %3734 = vmatpush1.msra.mxu0 0.0
    %3735 = vmatprep.subr.mxu0 0.0
    %3736 = vmatpush1.msra.mxu0 0.0
    %3737 = vmatprep.subr.mxu0 0.0
    %3738 = vmatpush1.msra.mxu0 0.0
    %3739 = vmatprep.subr.mxu0 0.0
    %3740 = vmatpush1.msra.mxu0 0.0
    %3741 = vmatprep.subr.mxu0 0.0
    %3742 = vmatpush1.msra.mxu0 0.0
    %3743 = vmatprep.subr.mxu0 0.0
    %3744 = vmatpush1.msra.mxu0 0.0
    %3745 = vmatprep.subr.mxu0 0.0
    %3746 = vmatpush1.msra.mxu0 0.0
    %3747 = vmatprep.subr.mxu0 0.0
    %3748 = vmatpush1.msra.mxu0 0.0
    %3749 = vmatprep.subr.mxu0 0.0
    %3750 = vmatpush1.msra.mxu0 0.0
    %3751 = vmatprep.mubr.f32.mxu0 0.0
    %3752 = vmatmul.mubr.f32.gmra.mrb[0].mxu0 %v3676
    %v3753 = vpop.f32.mrb[0].mxu0
    %v3754 = vadd.f32 0.0, %v3753
    %v3755 = vpop.f32.mrb[0].mxu0
    %3756 = vmatprep.mubr.f32.mxu0 0.0
    %3757 = vmatmul.mubr.f32.gmra.mrb[0].mxu0 %v3679
    %v3758 = vpop.f32.mrb[0].mxu0
    %v3759 = vadd.f32 0.0, %v3758
    %v3760 = vpop.f32.mrb[0].mxu0
    %3761 = vmatprep.mubr.f32.mxu0 0.0
    %3762 = vmatmul.mubr.f32.gmra.mrb[0].mxu0 %v3682
    %v3763 = vpop.f32.mrb[0].mxu0
    %v3764 = vadd.f32 0.0, %v3763
    %v3765 = vpop.f32.mrb[0].mxu0
    %3766 = vmatprep.mubr.f32.mxu0 0.0
    %3767 = vmatmul.mubr.f32.gmra.mrb[0].mxu0 %v3685
    %v3768 = vpop.f32.mrb[0].mxu0
    %v3769 = vadd.f32 0.0, %v3768
    %v3770 = vpop.f32.mrb[0].mxu0
    %3771 = vdwg.mxu0
    %3772 = vrot.lane.b32.xlu0 %v3235, 96
    %v3773 = vpop.permute.xlu0 %3772
    %3774 = vrot.lane.b32.xlu0 %v3236, 96
    %v3775 = vpop.permute.xlu0 %3774
    %3776 = vrot.lane.b32.xlu0 %v3237, 96
    %v3777 = vpop.permute.xlu0 %3776
    %3778 = vrot.lane.b32.xlu0 %v3238, 96
    %v3779 = vpop.permute.xlu0 %3778
    %3780 = vrot.lane.b32.xlu0 %v3421, 96
    %v3781 = vpop.permute.xlu0 %3780
    %3782 = vrot.lane.b32.xlu0 %v3422, 96
    %v3783 = vpop.permute.xlu0 %3782
    %3784 = vrot.lane.b32.xlu0 %v3423, 96
    %v3785 = vpop.permute.xlu0 %3784
    %3786 = vrot.lane.b32.xlu0 %v3424, 96
    %v3787 = vpop.permute.xlu0 %3786
    %v3788 = vsel %vm1672, %v3773, 0
    %v3790 = vsel %vm1672, %v3775, 0
    %v3792 = vsel %vm1672, %v3777, 0
    %v3794 = vsel %vm1672, %v3779, 0
    %v3796 = vsel %vm1672, %v3781, 0
    %v3798 = vsel %vm1672, %v3783, 0
    %v3800 = vsel %vm1672, %v3785, 0
    %v3802 = vsel %vm1672, %v3787, 0
    %3804 = vmatprep.subr.mxu0 0.0
    %3805 = vmatpush1.xpose.msra.mxu0 %v3796
    %3806 = vmatprep.subr.mxu0 0.0
    %3807 = vmatpush1.xpose.msra.mxu0 %v3798
    %3808 = vmatprep.subr.mxu0 0.0
    %3809 = vmatpush1.xpose.msra.mxu0 %v3800
    %3810 = vmatprep.subr.mxu0 0.0
    %3811 = vmatpush1.xpose.msra.mxu0 %v3802
    %3812 = vmatprep.subr.mxu0 0.0
    %3813 = vmatpush1.xpose.msra.mxu0 0.0
    %3814 = vmatprep.subr.mxu0 0.0
    %3815 = vmatpush1.xpose.msra.mxu0 0.0
    %3816 = vmatprep.subr.mxu0 0.0
    %3817 = vmatpush1.xpose.msra.mxu0 0.0
    %3818 = vmatprep.subr.mxu0 0.0
    %3819 = vmatpush1.xpose.msra.mxu0 0.0
    %3820 = vmatprep.subr.mxu0 0.0
    %3821 = vmatpush1.xpose.msra.mxu0 0.0
    %3822 = vmatprep.subr.mxu0 0.0
    %3823 = vmatpush1.xpose.msra.mxu0 0.0
    %3824 = vmatprep.subr.mxu0 0.0
    %3825 = vmatpush1.xpose.msra.mxu0 0.0
    %3826 = vmatprep.subr.mxu0 0.0
    %3827 = vmatpush1.xpose.msra.mxu0 0.0
    %3828 = vmatprep.subr.mxu0 0.0
    %3829 = vmatpush1.xpose.msra.mxu0 0.0
    %3830 = vmatprep.subr.mxu0 0.0
    %3831 = vmatpush1.xpose.msra.mxu0 0.0
    %3832 = vmatprep.subr.mxu0 0.0
    %3833 = vmatpush1.xpose.msra.mxu0 0.0
    %3834 = vmatprep.subr.mxu0 0.0
    %3835 = vmatpush1.xpose.msra.mxu0 0.0
    %3836 = vmatprep.subr.mxu0 0.0
    %3837 = vmatpush1.xpose.msra.mxu0 0.0
    %3838 = vmatprep.subr.mxu0 0.0
    %3839 = vmatpush1.xpose.msra.mxu0 0.0
    %3840 = vmatprep.subr.mxu0 0.0
    %3841 = vmatpush1.xpose.msra.mxu0 0.0
    %3842 = vmatprep.subr.mxu0 0.0
    %3843 = vmatpush1.xpose.msra.mxu0 0.0
    %3844 = vmatprep.subr.mxu0 0.0
    %3845 = vmatpush1.xpose.msra.mxu0 0.0
    %3846 = vmatprep.subr.mxu0 0.0
    %3847 = vmatpush1.xpose.msra.mxu0 0.0
    %3848 = vmatprep.subr.mxu0 0.0
    %3849 = vmatpush1.xpose.msra.mxu0 0.0
    %3850 = vmatprep.subr.mxu0 0.0
    %3851 = vmatpush1.xpose.msra.mxu0 0.0
    %3852 = vmatprep.subr.mxu0 0.0
    %3853 = vmatpush1.xpose.msra.mxu0 0.0
    %3854 = vmatprep.subr.mxu0 0.0
    %3855 = vmatpush1.xpose.msra.mxu0 0.0
    %3856 = vmatprep.subr.mxu0 0.0
    %3857 = vmatpush1.xpose.msra.mxu0 0.0
    %3858 = vmatprep.subr.mxu0 0.0
    %3859 = vmatpush1.xpose.msra.mxu0 0.0
    %3860 = vmatprep.subr.mxu0 0.0
    %3861 = vmatpush1.xpose.msra.mxu0 0.0
    %3862 = vmatprep.subr.mxu0 0.0
    %3863 = vmatpush1.xpose.msra.mxu0 0.0
    %3864 = vmatprep.subr.mxu0 0.0
    %3865 = vmatpush1.xpose.msra.mxu0 0.0
    %3866 = vmatprep.subr.mxu0 0.0
    %3867 = vmatpush1.xpose.msra.mxu0 0.0
    %3868 = vmatprep.mubr.f32.mxu0 0.0
    %3869 = vmatmul.mubr.f32.gmra.mrb[0].mxu0 %v3788
    %v3870 = vpop.f32.mrb[0].mxu0
    %v3871 = vadd.f32 0.0, %v3870
    %v3872 = vpop.f32.mrb[0].mxu0
    %3873 = vmatprep.mubr.f32.mxu0 0.0
    %3874 = vmatmul.mubr.f32.gmra.mrb[0].mxu0 %v3790
    %v3875 = vpop.f32.mrb[0].mxu0
    %v3876 = vadd.f32 0.0, %v3875
    %v3877 = vpop.f32.mrb[0].mxu0
    %3878 = vmatprep.mubr.f32.mxu0 0.0
    %3879 = vmatmul.mubr.f32.gmra.mrb[0].mxu0 %v3792
    %v3880 = vpop.f32.mrb[0].mxu0
    %v3881 = vadd.f32 0.0, %v3880
    %v3882 = vpop.f32.mrb[0].mxu0
    %3883 = vmatprep.mubr.f32.mxu0 0.0
    %3884 = vmatmul.mubr.f32.gmra.mrb[0].mxu0 %v3794
    %v3885 = vpop.f32.mrb[0].mxu0
    %v3886 = vadd.f32 0.0, %v3885
    %v3887 = vpop.f32.mrb[0].mxu0
    %3888 = vdwg.mxu0
    %v3889 = vmul.f32 %v3871, 0.088388346
    %v3890 = vmul.f32 %v3876, 0.088388346
    %v3891 = vmul.f32 %v3881, 0.088388346
    %v3892 = vmul.f32 %v3886, 0.088388346
    %v3893 = vsel %vm120, %v3889, -1e+30
    %v3894 = vsel %vm121, %v3890, -1e+30
    %v3895 = vsel %vm122, %v3891, -1e+30
    %v3896 = vsel %vm123, %v3892, -1e+30
    %v3897 = vsel %vm1672, %v3893, -inf
    %3898 = vmax.xlane.f32.xlu0 %v3897
    %v3899 = vpop.xlane.xlu0 %3898
    %v3900 = vsel %vm1672, %v3894, -inf
    %3901 = vmax.xlane.f32.xlu0 %v3900
    %v3902 = vpop.xlane.xlu0 %3901
    %v3903 = vsel %vm1672, %v3895, -inf
    %3904 = vmax.xlane.f32.xlu0 %v3903
    %v3905 = vpop.xlane.xlu0 %3904
    %v3906 = vsel %vm1672, %v3896, -inf
    %3907 = vmax.xlane.f32.xlu0 %v3906
    %v3908 = vpop.xlane.xlu0 %3907
    %v3909 = vsub.f32 %v3893, %v3899
    %v3910 = vsub.f32 %v3894, %v3902
    %v3911 = vsub.f32 %v3895, %v3905
    %v3912 = vsub.f32 %v3896, %v3908
    %v3913 = vmul.f32 %v3909, 1.442695
    %v3914 = vpow.pop %v3913
    %v3915 = vmul.f32 %v3910, 1.442695
    %v3916 = vpow.pop %v3915
    %v3917 = vmul.f32 %v3911, 1.442695
    %v3918 = vpow.pop %v3917
    %v3919 = vmul.f32 %v3912, 1.442695
    %v3920 = vpow.pop %v3919
    %v3921 = vsel %vm1672, %v3914, 0.0
    %3922 = vadd.xlane.f32.xlu0 %v3921
    %v3923 = vpop.xlane.xlu0 %3922
    %v3924 = vsel %vm1672, %v3916, 0.0
    %3925 = vadd.xlane.f32.xlu0 %v3924
    %v3926 = vpop.xlane.xlu0 %3925
    %v3927 = vsel %vm1672, %v3918, 0.0
    %3928 = vadd.xlane.f32.xlu0 %v3927
    %v3929 = vpop.xlane.xlu0 %3928
    %v3930 = vsel %vm1672, %v3920, 0.0
    %3931 = vadd.xlane.f32.xlu0 %v3930
    %v3932 = vpop.xlane.xlu0 %3931
    %v3933 = vrcp.pop %v3923
    %v3934 = vrcp.pop %v3926
    %v3935 = vrcp.pop %v3929
    %v3936 = vrcp.pop %v3932
    %v3937 = vmul.f32 %v3914, %v3933
    %v3938 = vmul.f32 %v3916, %v3934
    %v3939 = vmul.f32 %v3918, %v3935
    %v3940 = vmul.f32 %v3920, %v3936
    %3945 = vrot.lane.b32.xlu0 %v3496, 96
    %v3946 = vpop.permute.xlu0 %3945
    %3947 = vrot.lane.b32.xlu0 %v3501, 96
    %v3948 = vpop.permute.xlu0 %3947
    %3949 = vrot.lane.b32.xlu0 %v3506, 96
    %v3950 = vpop.permute.xlu0 %3949
    %3951 = vrot.lane.b32.xlu0 %v3511, 96
    %v3952 = vpop.permute.xlu0 %3951
    %v3958 = vsel %vm1672, %v3937, 0
    %v3961 = vsel %vm1672, %v3938, 0
    %v3964 = vsel %vm1672, %v3939, 0
    %v3967 = vsel %vm1672, %v3940, 0
    %3969 = vmatprep.subr.mxu0 0.0
    %3970 = vmatpush1.msra.mxu0 %v3946
    %3971 = vmatprep.subr.mxu0 0.0
    %3972 = vmatpush1.msra.mxu0 %v3948
    %3973 = vmatprep.subr.mxu0 0.0
    %3974 = vmatpush1.msra.mxu0 %v3950
    %3975 = vmatprep.subr.mxu0 0.0
    %3976 = vmatpush1.msra.mxu0 %v3952
    %3977 = vmatprep.subr.mxu0 0.0
    %3978 = vmatpush1.msra.mxu0 0.0
    %3979 = vmatprep.subr.mxu0 0.0
    %3980 = vmatpush1.msra.mxu0 0.0
    %3981 = vmatprep.subr.mxu0 0.0
    %3982 = vmatpush1.msra.mxu0 0.0
    %3983 = vmatprep.subr.mxu0 0.0
    %3984 = vmatpush1.msra.mxu0 0.0
    %3985 = vmatprep.subr.mxu0 0.0
    %3986 = vmatpush1.msra.mxu0 0.0
    %3987 = vmatprep.subr.mxu0 0.0
    %3988 = vmatpush1.msra.mxu0 0.0
    %3989 = vmatprep.subr.mxu0 0.0
    %3990 = vmatpush1.msra.mxu0 0.0
    %3991 = vmatprep.subr.mxu0 0.0
    %3992 = vmatpush1.msra.mxu0 0.0
    %3993 = vmatprep.subr.mxu0 0.0
    %3994 = vmatpush1.msra.mxu0 0.0
    %3995 = vmatprep.subr.mxu0 0.0
    %3996 = vmatpush1.msra.mxu0 0.0
    %3997 = vmatprep.subr.mxu0 0.0
    %3998 = vmatpush1.msra.mxu0 0.0
    %3999 = vmatprep.subr.mxu0 0.0
    %4000 = vmatpush1.msra.mxu0 0.0
    %4001 = vmatprep.subr.mxu0 0.0
    %4002 = vmatpush1.msra.mxu0 0.0
    %4003 = vmatprep.subr.mxu0 0.0
    %4004 = vmatpush1.msra.mxu0 0.0
    %4005 = vmatprep.subr.mxu0 0.0
    %4006 = vmatpush1.msra.mxu0 0.0
    %4007 = vmatprep.subr.mxu0 0.0
    %4008 = vmatpush1.msra.mxu0 0.0
    %4009 = vmatprep.subr.mxu0 0.0
    %4010 = vmatpush1.msra.mxu0 0.0
    %4011 = vmatprep.subr.mxu0 0.0
    %4012 = vmatpush1.msra.mxu0 0.0
    %4013 = vmatprep.subr.mxu0 0.0
    %4014 = vmatpush1.msra.mxu0 0.0
    %4015 = vmatprep.subr.mxu0 0.0
    %4016 = vmatpush1.msra.mxu0 0.0
    %4017 = vmatprep.subr.mxu0 0.0
    %4018 = vmatpush1.msra.mxu0 0.0
    %4019 = vmatprep.subr.mxu0 0.0
    %4020 = vmatpush1.msra.mxu0 0.0
    %4021 = vmatprep.subr.mxu0 0.0
    %4022 = vmatpush1.msra.mxu0 0.0
    %4023 = vmatprep.subr.mxu0 0.0
    %4024 = vmatpush1.msra.mxu0 0.0
    %4025 = vmatprep.subr.mxu0 0.0
    %4026 = vmatpush1.msra.mxu0 0.0
    %4027 = vmatprep.subr.mxu0 0.0
    %4028 = vmatpush1.msra.mxu0 0.0
    %4029 = vmatprep.subr.mxu0 0.0
    %4030 = vmatpush1.msra.mxu0 0.0
    %4031 = vmatprep.subr.mxu0 0.0
    %4032 = vmatpush1.msra.mxu0 0.0
    %4033 = vmatprep.mubr.f32.mxu0 0.0
    %4034 = vmatmul.mubr.f32.gmra.mrb[0].mxu0 %v3958
    %v4035 = vpop.f32.mrb[0].mxu0
    %v4036 = vadd.f32 0.0, %v4035
    %v4037 = vpop.f32.mrb[0].mxu0
    %4038 = vmatprep.mubr.f32.mxu0 0.0
    %4039 = vmatmul.mubr.f32.gmra.mrb[0].mxu0 %v3961
    %v4040 = vpop.f32.mrb[0].mxu0
    %v4041 = vadd.f32 0.0, %v4040
    %v4042 = vpop.f32.mrb[0].mxu0
    %4043 = vmatprep.mubr.f32.mxu0 0.0
    %4044 = vmatmul.mubr.f32.gmra.mrb[0].mxu0 %v3964
    %v4045 = vpop.f32.mrb[0].mxu0
    %v4046 = vadd.f32 0.0, %v4045
    %v4047 = vpop.f32.mrb[0].mxu0
    %4048 = vmatprep.mubr.f32.mxu0 0.0
    %4049 = vmatmul.mubr.f32.gmra.mrb[0].mxu0 %v3967
    %v4050 = vpop.f32.mrb[0].mxu0
    %v4051 = vadd.f32 0.0, %v4050
    %v4052 = vpop.f32.mrb[0].mxu0
    %4053 = vdwg.mxu0
    %4054 = vrot.lane.b32.xlu0 %v3235, 64
    %v4055 = vpop.permute.xlu0 %4054
    %4056 = vrot.lane.b32.xlu0 %v3236, 64
    %v4057 = vpop.permute.xlu0 %4056
    %4058 = vrot.lane.b32.xlu0 %v3237, 64
    %v4059 = vpop.permute.xlu0 %4058
    %4060 = vrot.lane.b32.xlu0 %v3238, 64
    %v4061 = vpop.permute.xlu0 %4060
    %4062 = vrot.lane.b32.xlu0 %v3421, 64
    %v4063 = vpop.permute.xlu0 %4062
    %4064 = vrot.lane.b32.xlu0 %v3422, 64
    %v4065 = vpop.permute.xlu0 %4064
    %4066 = vrot.lane.b32.xlu0 %v3423, 64
    %v4067 = vpop.permute.xlu0 %4066
    %4068 = vrot.lane.b32.xlu0 %v3424, 64
    %v4069 = vpop.permute.xlu0 %4068
    %v4070 = vsel %vm1672, %v4055, 0
    %v4072 = vsel %vm1672, %v4057, 0
    %v4074 = vsel %vm1672, %v4059, 0
    %v4076 = vsel %vm1672, %v4061, 0
    %v4078 = vsel %vm1672, %v4063, 0
    %v4080 = vsel %vm1672, %v4065, 0
    %v4082 = vsel %vm1672, %v4067, 0
    %v4084 = vsel %vm1672, %v4069, 0
    %4086 = vmatprep.subr.mxu0 0.0
    %4087 = vmatpush1.xpose.msra.mxu0 %v4078
    %4088 = vmatprep.subr.mxu0 0.0
    %4089 = vmatpush1.xpose.msra.mxu0 %v4080
    %4090 = vmatprep.subr.mxu0 0.0
    %4091 = vmatpush1.xpose.msra.mxu0 %v4082
    %4092 = vmatprep.subr.mxu0 0.0
    %4093 = vmatpush1.xpose.msra.mxu0 %v4084
    %4094 = vmatprep.subr.mxu0 0.0
    %4095 = vmatpush1.xpose.msra.mxu0 0.0
    %4096 = vmatprep.subr.mxu0 0.0
    %4097 = vmatpush1.xpose.msra.mxu0 0.0
    %4098 = vmatprep.subr.mxu0 0.0
    %4099 = vmatpush1.xpose.msra.mxu0 0.0
    %4100 = vmatprep.subr.mxu0 0.0
    %4101 = vmatpush1.xpose.msra.mxu0 0.0
    %4102 = vmatprep.subr.mxu0 0.0
    %4103 = vmatpush1.xpose.msra.mxu0 0.0
    %4104 = vmatprep.subr.mxu0 0.0
    %4105 = vmatpush1.xpose.msra.mxu0 0.0
    %4106 = vmatprep.subr.mxu0 0.0
    %4107 = vmatpush1.xpose.msra.mxu0 0.0
    %4108 = vmatprep.subr.mxu0 0.0
    %4109 = vmatpush1.xpose.msra.mxu0 0.0
    %4110 = vmatprep.subr.mxu0 0.0
    %4111 = vmatpush1.xpose.msra.mxu0 0.0
    %4112 = vmatprep.subr.mxu0 0.0
    %4113 = vmatpush1.xpose.msra.mxu0 0.0
    %4114 = vmatprep.subr.mxu0 0.0
    %4115 = vmatpush1.xpose.msra.mxu0 0.0
    %4116 = vmatprep.subr.mxu0 0.0
    %4117 = vmatpush1.xpose.msra.mxu0 0.0
    %4118 = vmatprep.subr.mxu0 0.0
    %4119 = vmatpush1.xpose.msra.mxu0 0.0
    %4120 = vmatprep.subr.mxu0 0.0
    %4121 = vmatpush1.xpose.msra.mxu0 0.0
    %4122 = vmatprep.subr.mxu0 0.0
    %4123 = vmatpush1.xpose.msra.mxu0 0.0
    %4124 = vmatprep.subr.mxu0 0.0
    %4125 = vmatpush1.xpose.msra.mxu0 0.0
    %4126 = vmatprep.subr.mxu0 0.0
    %4127 = vmatpush1.xpose.msra.mxu0 0.0
    %4128 = vmatprep.subr.mxu0 0.0
    %4129 = vmatpush1.xpose.msra.mxu0 0.0
    %4130 = vmatprep.subr.mxu0 0.0
    %4131 = vmatpush1.xpose.msra.mxu0 0.0
    %4132 = vmatprep.subr.mxu0 0.0
    %4133 = vmatpush1.xpose.msra.mxu0 0.0
    %4134 = vmatprep.subr.mxu0 0.0
    %4135 = vmatpush1.xpose.msra.mxu0 0.0
    %4136 = vmatprep.subr.mxu0 0.0
    %4137 = vmatpush1.xpose.msra.mxu0 0.0
    %4138 = vmatprep.subr.mxu0 0.0
    %4139 = vmatpush1.xpose.msra.mxu0 0.0
    %4140 = vmatprep.subr.mxu0 0.0
    %4141 = vmatpush1.xpose.msra.mxu0 0.0
    %4142 = vmatprep.subr.mxu0 0.0
    %4143 = vmatpush1.xpose.msra.mxu0 0.0
    %4144 = vmatprep.subr.mxu0 0.0
    %4145 = vmatpush1.xpose.msra.mxu0 0.0
    %4146 = vmatprep.subr.mxu0 0.0
    %4147 = vmatpush1.xpose.msra.mxu0 0.0
    %4148 = vmatprep.subr.mxu0 0.0
    %4149 = vmatpush1.xpose.msra.mxu0 0.0
    %4150 = vmatprep.mubr.f32.mxu0 0.0
    %4151 = vmatmul.mubr.f32.gmra.mrb[0].mxu0 %v4070
    %v4152 = vpop.f32.mrb[0].mxu0
    %v4153 = vadd.f32 0.0, %v4152
    %v4154 = vpop.f32.mrb[0].mxu0
    %4155 = vmatprep.mubr.f32.mxu0 0.0
    %4156 = vmatmul.mubr.f32.gmra.mrb[0].mxu0 %v4072
    %v4157 = vpop.f32.mrb[0].mxu0
    %v4158 = vadd.f32 0.0, %v4157
    %v4159 = vpop.f32.mrb[0].mxu0
    %4160 = vmatprep.mubr.f32.mxu0 0.0
    %4161 = vmatmul.mubr.f32.gmra.mrb[0].mxu0 %v4074
    %v4162 = vpop.f32.mrb[0].mxu0
    %v4163 = vadd.f32 0.0, %v4162
    %v4164 = vpop.f32.mrb[0].mxu0
    %4165 = vmatprep.mubr.f32.mxu0 0.0
    %4166 = vmatmul.mubr.f32.gmra.mrb[0].mxu0 %v4076
    %v4167 = vpop.f32.mrb[0].mxu0
    %v4168 = vadd.f32 0.0, %v4167
    %v4169 = vpop.f32.mrb[0].mxu0
    %4170 = vdwg.mxu0
    %v4171 = vmul.f32 %v4153, 0.088388346
    %v4172 = vmul.f32 %v4158, 0.088388346
    %v4173 = vmul.f32 %v4163, 0.088388346
    %v4174 = vmul.f32 %v4168, 0.088388346
    %v4175 = vsel %vm120, %v4171, -1e+30
    %v4176 = vsel %vm121, %v4172, -1e+30
    %v4177 = vsel %vm122, %v4173, -1e+30
    %v4178 = vsel %vm123, %v4174, -1e+30
    %v4179 = vsel %vm1672, %v4175, -inf
    %4180 = vmax.xlane.f32.xlu0 %v4179
    %v4181 = vpop.xlane.xlu0 %4180
    %v4182 = vsel %vm1672, %v4176, -inf
    %4183 = vmax.xlane.f32.xlu0 %v4182
    %v4184 = vpop.xlane.xlu0 %4183
    %v4185 = vsel %vm1672, %v4177, -inf
    %4186 = vmax.xlane.f32.xlu0 %v4185
    %v4187 = vpop.xlane.xlu0 %4186
    %v4188 = vsel %vm1672, %v4178, -inf
    %4189 = vmax.xlane.f32.xlu0 %v4188
    %v4190 = vpop.xlane.xlu0 %4189
    %v4191 = vsub.f32 %v4175, %v4181
    %v4192 = vsub.f32 %v4176, %v4184
    %v4193 = vsub.f32 %v4177, %v4187
    %v4194 = vsub.f32 %v4178, %v4190
    %v4195 = vmul.f32 %v4191, 1.442695
    %v4196 = vpow.pop %v4195
    %v4197 = vmul.f32 %v4192, 1.442695
    %v4198 = vpow.pop %v4197
    %v4199 = vmul.f32 %v4193, 1.442695
    %v4200 = vpow.pop %v4199
    %v4201 = vmul.f32 %v4194, 1.442695
    %v4202 = vpow.pop %v4201
    %v4203 = vsel %vm1672, %v4196, 0.0
    %4204 = vadd.xlane.f32.xlu0 %v4203
    %v4205 = vpop.xlane.xlu0 %4204
    %v4206 = vsel %vm1672, %v4198, 0.0
    %4207 = vadd.xlane.f32.xlu0 %v4206
    %v4208 = vpop.xlane.xlu0 %4207
    %v4209 = vsel %vm1672, %v4200, 0.0
    %4210 = vadd.xlane.f32.xlu0 %v4209
    %v4211 = vpop.xlane.xlu0 %4210
    %v4212 = vsel %vm1672, %v4202, 0.0
    %4213 = vadd.xlane.f32.xlu0 %v4212
    %v4214 = vpop.xlane.xlu0 %4213
    %v4215 = vrcp.pop %v4205
    %v4216 = vrcp.pop %v4208
    %v4217 = vrcp.pop %v4211
    %v4218 = vrcp.pop %v4214
    %v4219 = vmul.f32 %v4196, %v4215
    %v4220 = vmul.f32 %v4198, %v4216
    %v4221 = vmul.f32 %v4200, %v4217
    %v4222 = vmul.f32 %v4202, %v4218
    %4223 = vrot.lane.b32.xlu0 %v3496, 64
    %v4224 = vpop.permute.xlu0 %4223
    %4225 = vrot.lane.b32.xlu0 %v3501, 64
    %v4226 = vpop.permute.xlu0 %4225
    %4227 = vrot.lane.b32.xlu0 %v3506, 64
    %v4228 = vpop.permute.xlu0 %4227
    %4229 = vrot.lane.b32.xlu0 %v3511, 64
    %v4230 = vpop.permute.xlu0 %4229
    %v4236 = vsel %vm1672, %v4219, 0
    %v4239 = vsel %vm1672, %v4220, 0
    %v4242 = vsel %vm1672, %v4221, 0
    %v4245 = vsel %vm1672, %v4222, 0
    %4247 = vmatprep.subr.mxu0 0.0
    %4248 = vmatpush1.msra.mxu0 %v4224
    %4249 = vmatprep.subr.mxu0 0.0
    %4250 = vmatpush1.msra.mxu0 %v4226
    %4251 = vmatprep.subr.mxu0 0.0
    %4252 = vmatpush1.msra.mxu0 %v4228
    %4253 = vmatprep.subr.mxu0 0.0
    %4254 = vmatpush1.msra.mxu0 %v4230
    %4255 = vmatprep.subr.mxu0 0.0
    %4256 = vmatpush1.msra.mxu0 0.0
    %4257 = vmatprep.subr.mxu0 0.0
    %4258 = vmatpush1.msra.mxu0 0.0
    %4259 = vmatprep.subr.mxu0 0.0
    %4260 = vmatpush1.msra.mxu0 0.0
    %4261 = vmatprep.subr.mxu0 0.0
    %4262 = vmatpush1.msra.mxu0 0.0
    %4263 = vmatprep.subr.mxu0 0.0
    %4264 = vmatpush1.msra.mxu0 0.0
    %4265 = vmatprep.subr.mxu0 0.0
    %4266 = vmatpush1.msra.mxu0 0.0
    %4267 = vmatprep.subr.mxu0 0.0
    %4268 = vmatpush1.msra.mxu0 0.0
    %4269 = vmatprep.subr.mxu0 0.0
    %4270 = vmatpush1.msra.mxu0 0.0
    %4271 = vmatprep.subr.mxu0 0.0
    %4272 = vmatpush1.msra.mxu0 0.0
    %4273 = vmatprep.subr.mxu0 0.0
    %4274 = vmatpush1.msra.mxu0 0.0
    %4275 = vmatprep.subr.mxu0 0.0
    %4276 = vmatpush1.msra.mxu0 0.0
    %4277 = vmatprep.subr.mxu0 0.0
    %4278 = vmatpush1.msra.mxu0 0.0
    %4279 = vmatprep.subr.mxu0 0.0
    %4280 = vmatpush1.msra.mxu0 0.0
    %4281 = vmatprep.subr.mxu0 0.0
    %4282 = vmatpush1.msra.mxu0 0.0
    %4283 = vmatprep.subr.mxu0 0.0
    %4284 = vmatpush1.msra.mxu0 0.0
    %4285 = vmatprep.subr.mxu0 0.0
    %4286 = vmatpush1.msra.mxu0 0.0
    %4287 = vmatprep.subr.mxu0 0.0
    %4288 = vmatpush1.msra.mxu0 0.0
    %4289 = vmatprep.subr.mxu0 0.0
    %4290 = vmatpush1.msra.mxu0 0.0
    %4291 = vmatprep.subr.mxu0 0.0
    %4292 = vmatpush1.msra.mxu0 0.0
    %4293 = vmatprep.subr.mxu0 0.0
    %4294 = vmatpush1.msra.mxu0 0.0
    %4295 = vmatprep.subr.mxu0 0.0
    %4296 = vmatpush1.msra.mxu0 0.0
    %4297 = vmatprep.subr.mxu0 0.0
    %4298 = vmatpush1.msra.mxu0 0.0
    %4299 = vmatprep.subr.mxu0 0.0
    %4300 = vmatpush1.msra.mxu0 0.0
    %4301 = vmatprep.subr.mxu0 0.0
    %4302 = vmatpush1.msra.mxu0 0.0
    %4303 = vmatprep.subr.mxu0 0.0
    %4304 = vmatpush1.msra.mxu0 0.0
    %4305 = vmatprep.subr.mxu0 0.0
    %4306 = vmatpush1.msra.mxu0 0.0
    %4307 = vmatprep.subr.mxu0 0.0
    %4308 = vmatpush1.msra.mxu0 0.0
    %4309 = vmatprep.subr.mxu0 0.0
    %4310 = vmatpush1.msra.mxu0 0.0
    %4311 = vmatprep.mubr.f32.mxu0 0.0
    %4312 = vmatmul.mubr.f32.gmra.mrb[0].mxu0 %v4236
    %v4313 = vpop.f32.mrb[0].mxu0
    %v4314 = vadd.f32 0.0, %v4313
    %v4315 = vpop.f32.mrb[0].mxu0
    %4316 = vmatprep.mubr.f32.mxu0 0.0
    %4317 = vmatmul.mubr.f32.gmra.mrb[0].mxu0 %v4239
    %v4318 = vpop.f32.mrb[0].mxu0
    %v4319 = vadd.f32 0.0, %v4318
    %v4320 = vpop.f32.mrb[0].mxu0
    %4321 = vmatprep.mubr.f32.mxu0 0.0
    %4322 = vmatmul.mubr.f32.gmra.mrb[0].mxu0 %v4242
    %v4323 = vpop.f32.mrb[0].mxu0
    %v4324 = vadd.f32 0.0, %v4323
    %v4325 = vpop.f32.mrb[0].mxu0
    %4326 = vmatprep.mubr.f32.mxu0 0.0
    %4327 = vmatmul.mubr.f32.gmra.mrb[0].mxu0 %v4245
    %v4328 = vpop.f32.mrb[0].mxu0
    %v4329 = vadd.f32 0.0, %v4328
    %v4330 = vpop.f32.mrb[0].mxu0
    %4331 = vdwg.mxu0
    %4332 = vrot.lane.b32.xlu0 %v3235, 32
    %v4333 = vpop.permute.xlu0 %4332
    %4334 = vrot.lane.b32.xlu0 %v3236, 32
    %v4335 = vpop.permute.xlu0 %4334
    %4336 = vrot.lane.b32.xlu0 %v3237, 32
    %v4337 = vpop.permute.xlu0 %4336
    %4338 = vrot.lane.b32.xlu0 %v3238, 32
    %v4339 = vpop.permute.xlu0 %4338
    %4340 = vrot.lane.b32.xlu0 %v3421, 32
    %v4341 = vpop.permute.xlu0 %4340
    %4342 = vrot.lane.b32.xlu0 %v3422, 32
    %v4343 = vpop.permute.xlu0 %4342
    %4344 = vrot.lane.b32.xlu0 %v3423, 32
    %v4345 = vpop.permute.xlu0 %4344
    %4346 = vrot.lane.b32.xlu0 %v3424, 32
    %v4347 = vpop.permute.xlu0 %4346
    %v4348 = vsel %vm1672, %v4333, 0
    %v4350 = vsel %vm1672, %v4335, 0
    %v4352 = vsel %vm1672, %v4337, 0
    %v4354 = vsel %vm1672, %v4339, 0
    %v4356 = vsel %vm1672, %v4341, 0
    %v4358 = vsel %vm1672, %v4343, 0
    %v4360 = vsel %vm1672, %v4345, 0
    %v4362 = vsel %vm1672, %v4347, 0
    %4364 = vmatprep.subr.mxu0 0.0
    %4365 = vmatpush1.xpose.msra.mxu0 %v4356
    %4366 = vmatprep.subr.mxu0 0.0
    %4367 = vmatpush1.xpose.msra.mxu0 %v4358
    %4368 = vmatprep.subr.mxu0 0.0
    %4369 = vmatpush1.xpose.msra.mxu0 %v4360
    %4370 = vmatprep.subr.mxu0 0.0
    %4371 = vmatpush1.xpose.msra.mxu0 %v4362
    %4372 = vmatprep.subr.mxu0 0.0
    %4373 = vmatpush1.xpose.msra.mxu0 0.0
    %4374 = vmatprep.subr.mxu0 0.0
    %4375 = vmatpush1.xpose.msra.mxu0 0.0
    %4376 = vmatprep.subr.mxu0 0.0
    %4377 = vmatpush1.xpose.msra.mxu0 0.0
    %4378 = vmatprep.subr.mxu0 0.0
    %4379 = vmatpush1.xpose.msra.mxu0 0.0
    %4380 = vmatprep.subr.mxu0 0.0
    %4381 = vmatpush1.xpose.msra.mxu0 0.0
    %4382 = vmatprep.subr.mxu0 0.0
    %4383 = vmatpush1.xpose.msra.mxu0 0.0
    %4384 = vmatprep.subr.mxu0 0.0
    %4385 = vmatpush1.xpose.msra.mxu0 0.0
    %4386 = vmatprep.subr.mxu0 0.0
    %4387 = vmatpush1.xpose.msra.mxu0 0.0
    %4388 = vmatprep.subr.mxu0 0.0
    %4389 = vmatpush1.xpose.msra.mxu0 0.0
    %4390 = vmatprep.subr.mxu0 0.0
    %4391 = vmatpush1.xpose.msra.mxu0 0.0
    %4392 = vmatprep.subr.mxu0 0.0
    %4393 = vmatpush1.xpose.msra.mxu0 0.0
    %4394 = vmatprep.subr.mxu0 0.0
    %4395 = vmatpush1.xpose.msra.mxu0 0.0
    %4396 = vmatprep.subr.mxu0 0.0
    %4397 = vmatpush1.xpose.msra.mxu0 0.0
    %4398 = vmatprep.subr.mxu0 0.0
    %4399 = vmatpush1.xpose.msra.mxu0 0.0
    %4400 = vmatprep.subr.mxu0 0.0
    %4401 = vmatpush1.xpose.msra.mxu0 0.0
    %4402 = vmatprep.subr.mxu0 0.0
    %4403 = vmatpush1.xpose.msra.mxu0 0.0
    %4404 = vmatprep.subr.mxu0 0.0
    %4405 = vmatpush1.xpose.msra.mxu0 0.0
    %4406 = vmatprep.subr.mxu0 0.0
    %4407 = vmatpush1.xpose.msra.mxu0 0.0
    %4408 = vmatprep.subr.mxu0 0.0
    %4409 = vmatpush1.xpose.msra.mxu0 0.0
    %4410 = vmatprep.subr.mxu0 0.0
    %4411 = vmatpush1.xpose.msra.mxu0 0.0
    %4412 = vmatprep.subr.mxu0 0.0
    %4413 = vmatpush1.xpose.msra.mxu0 0.0
    %4414 = vmatprep.subr.mxu0 0.0
    %4415 = vmatpush1.xpose.msra.mxu0 0.0
    %4416 = vmatprep.subr.mxu0 0.0
    %4417 = vmatpush1.xpose.msra.mxu0 0.0
    %4418 = vmatprep.subr.mxu0 0.0
    %4419 = vmatpush1.xpose.msra.mxu0 0.0
    %4420 = vmatprep.subr.mxu0 0.0
    %4421 = vmatpush1.xpose.msra.mxu0 0.0
    %4422 = vmatprep.subr.mxu0 0.0
    %4423 = vmatpush1.xpose.msra.mxu0 0.0
    %4424 = vmatprep.subr.mxu0 0.0
    %4425 = vmatpush1.xpose.msra.mxu0 0.0
    %4426 = vmatprep.subr.mxu0 0.0
    %4427 = vmatpush1.xpose.msra.mxu0 0.0
    %4428 = vmatprep.mubr.f32.mxu0 0.0
    %4429 = vmatmul.mubr.f32.gmra.mrb[0].mxu0 %v4348
    %v4430 = vpop.f32.mrb[0].mxu0
    %v4431 = vadd.f32 0.0, %v4430
    %v4432 = vpop.f32.mrb[0].mxu0
    %4433 = vmatprep.mubr.f32.mxu0 0.0
    %4434 = vmatmul.mubr.f32.gmra.mrb[0].mxu0 %v4350
    %v4435 = vpop.f32.mrb[0].mxu0
    %v4436 = vadd.f32 0.0, %v4435
    %v4437 = vpop.f32.mrb[0].mxu0
    %4438 = vmatprep.mubr.f32.mxu0 0.0
    %4439 = vmatmul.mubr.f32.gmra.mrb[0].mxu0 %v4352
    %v4440 = vpop.f32.mrb[0].mxu0
    %v4441 = vadd.f32 0.0, %v4440
    %v4442 = vpop.f32.mrb[0].mxu0
    %4443 = vmatprep.mubr.f32.mxu0 0.0
    %4444 = vmatmul.mubr.f32.gmra.mrb[0].mxu0 %v4354
    %v4445 = vpop.f32.mrb[0].mxu0
    %v4446 = vadd.f32 0.0, %v4445
    %v4447 = vpop.f32.mrb[0].mxu0
    %4448 = vdwg.mxu0
    %v4449 = vmul.f32 %v4431, 0.088388346
    %v4450 = vmul.f32 %v4436, 0.088388346
    %v4451 = vmul.f32 %v4441, 0.088388346
    %v4452 = vmul.f32 %v4446, 0.088388346
    %v4453 = vsel %vm120, %v4449, -1e+30
    %v4454 = vsel %vm121, %v4450, -1e+30
    %v4455 = vsel %vm122, %v4451, -1e+30
    %v4456 = vsel %vm123, %v4452, -1e+30
    %v4457 = vsel %vm1672, %v4453, -inf
    %4458 = vmax.xlane.f32.xlu0 %v4457
    %v4459 = vpop.xlane.xlu0 %4458
    %v4460 = vsel %vm1672, %v4454, -inf
    %4461 = vmax.xlane.f32.xlu0 %v4460
    %v4462 = vpop.xlane.xlu0 %4461
    %v4463 = vsel %vm1672, %v4455, -inf
    %4464 = vmax.xlane.f32.xlu0 %v4463
    %v4465 = vpop.xlane.xlu0 %4464
    %v4466 = vsel %vm1672, %v4456, -inf
    %4467 = vmax.xlane.f32.xlu0 %v4466
    %v4468 = vpop.xlane.xlu0 %4467
    %v4469 = vsub.f32 %v4453, %v4459
    %v4470 = vsub.f32 %v4454, %v4462
    %v4471 = vsub.f32 %v4455, %v4465
    %v4472 = vsub.f32 %v4456, %v4468
    %v4473 = vmul.f32 %v4469, 1.442695
    %v4474 = vpow.pop %v4473
    %v4475 = vmul.f32 %v4470, 1.442695
    %v4476 = vpow.pop %v4475
    %v4477 = vmul.f32 %v4471, 1.442695
    %v4478 = vpow.pop %v4477
    %v4479 = vmul.f32 %v4472, 1.442695
    %v4480 = vpow.pop %v4479
    %v4481 = vsel %vm1672, %v4474, 0.0
    %4482 = vadd.xlane.f32.xlu0 %v4481
    %v4483 = vpop.xlane.xlu0 %4482
    %v4484 = vsel %vm1672, %v4476, 0.0
    %4485 = vadd.xlane.f32.xlu0 %v4484
    %v4486 = vpop.xlane.xlu0 %4485
    %v4487 = vsel %vm1672, %v4478, 0.0
    %4488 = vadd.xlane.f32.xlu0 %v4487
    %v4489 = vpop.xlane.xlu0 %4488
    %v4490 = vsel %vm1672, %v4480, 0.0
    %4491 = vadd.xlane.f32.xlu0 %v4490
    %v4492 = vpop.xlane.xlu0 %4491
    %v4493 = vrcp.pop %v4483
    %v4494 = vrcp.pop %v4486
    %v4495 = vrcp.pop %v4489
    %v4496 = vrcp.pop %v4492
    %v4497 = vmul.f32 %v4474, %v4493
    %v4498 = vmul.f32 %v4476, %v4494
    %v4499 = vmul.f32 %v4478, %v4495
    %v4500 = vmul.f32 %v4480, %v4496
    %4501 = vrot.lane.b32.xlu0 %v3496, 32
    %v4502 = vpop.permute.xlu0 %4501
    %4503 = vrot.lane.b32.xlu0 %v3501, 32
    %v4504 = vpop.permute.xlu0 %4503
    %4505 = vrot.lane.b32.xlu0 %v3506, 32
    %v4506 = vpop.permute.xlu0 %4505
    %4507 = vrot.lane.b32.xlu0 %v3511, 32
    %v4508 = vpop.permute.xlu0 %4507
    %v4514 = vsel %vm1672, %v4497, 0
    %v4517 = vsel %vm1672, %v4498, 0
    %v4520 = vsel %vm1672, %v4499, 0
    %v4523 = vsel %vm1672, %v4500, 0
    %4525 = vmatprep.subr.mxu0 0.0
    %4526 = vmatpush1.msra.mxu0 %v4502
    %4527 = vmatprep.subr.mxu0 0.0
    %4528 = vmatpush1.msra.mxu0 %v4504
    %4529 = vmatprep.subr.mxu0 0.0
    %4530 = vmatpush1.msra.mxu0 %v4506
    %4531 = vmatprep.subr.mxu0 0.0
    %4532 = vmatpush1.msra.mxu0 %v4508
    %4533 = vmatprep.subr.mxu0 0.0
    %4534 = vmatpush1.msra.mxu0 0.0
    %4535 = vmatprep.subr.mxu0 0.0
    %4536 = vmatpush1.msra.mxu0 0.0
    %4537 = vmatprep.subr.mxu0 0.0
    %4538 = vmatpush1.msra.mxu0 0.0
    %4539 = vmatprep.subr.mxu0 0.0
    %4540 = vmatpush1.msra.mxu0 0.0
    %4541 = vmatprep.subr.mxu0 0.0
    %4542 = vmatpush1.msra.mxu0 0.0
    %4543 = vmatprep.subr.mxu0 0.0
    %4544 = vmatpush1.msra.mxu0 0.0
    %4545 = vmatprep.subr.mxu0 0.0
    %4546 = vmatpush1.msra.mxu0 0.0
    %4547 = vmatprep.subr.mxu0 0.0
    %4548 = vmatpush1.msra.mxu0 0.0
    %4549 = vmatprep.subr.mxu0 0.0
    %4550 = vmatpush1.msra.mxu0 0.0
    %4551 = vmatprep.subr.mxu0 0.0
    %4552 = vmatpush1.msra.mxu0 0.0
    %4553 = vmatprep.subr.mxu0 0.0
    %4554 = vmatpush1.msra.mxu0 0.0
    %4555 = vmatprep.subr.mxu0 0.0
    %4556 = vmatpush1.msra.mxu0 0.0
    %4557 = vmatprep.subr.mxu0 0.0
    %4558 = vmatpush1.msra.mxu0 0.0
    %4559 = vmatprep.subr.mxu0 0.0
    %4560 = vmatpush1.msra.mxu0 0.0
    %4561 = vmatprep.subr.mxu0 0.0
    %4562 = vmatpush1.msra.mxu0 0.0
    %4563 = vmatprep.subr.mxu0 0.0
    %4564 = vmatpush1.msra.mxu0 0.0
    %4565 = vmatprep.subr.mxu0 0.0
    %4566 = vmatpush1.msra.mxu0 0.0
    %4567 = vmatprep.subr.mxu0 0.0
    %4568 = vmatpush1.msra.mxu0 0.0
    %4569 = vmatprep.subr.mxu0 0.0
    %4570 = vmatpush1.msra.mxu0 0.0
    %4571 = vmatprep.subr.mxu0 0.0
    %4572 = vmatpush1.msra.mxu0 0.0
    %4573 = vmatprep.subr.mxu0 0.0
    %4574 = vmatpush1.msra.mxu0 0.0
    %4575 = vmatprep.subr.mxu0 0.0
    %4576 = vmatpush1.msra.mxu0 0.0
    %4577 = vmatprep.subr.mxu0 0.0
    %4578 = vmatpush1.msra.mxu0 0.0
    %4579 = vmatprep.subr.mxu0 0.0
    %4580 = vmatpush1.msra.mxu0 0.0
    %4581 = vmatprep.subr.mxu0 0.0
    %4582 = vmatpush1.msra.mxu0 0.0
    %4583 = vmatprep.subr.mxu0 0.0
    %4584 = vmatpush1.msra.mxu0 0.0
    %4585 = vmatprep.subr.mxu0 0.0
    %4586 = vmatpush1.msra.mxu0 0.0
    %4587 = vmatprep.subr.mxu0 0.0
    %4588 = vmatpush1.msra.mxu0 0.0
    %4589 = vmatprep.mubr.f32.mxu0 0.0
    %4590 = vmatmul.mubr.f32.gmra.mrb[0].mxu0 %v4514
    %v4591 = vpop.f32.mrb[0].mxu0
    %v4592 = vadd.f32 0.0, %v4591
    %v4593 = vpop.f32.mrb[0].mxu0
    %4594 = vmatprep.mubr.f32.mxu0 0.0
    %4595 = vmatmul.mubr.f32.gmra.mrb[0].mxu0 %v4517
    %v4596 = vpop.f32.mrb[0].mxu0
    %v4597 = vadd.f32 0.0, %v4596
    %v4598 = vpop.f32.mrb[0].mxu0
    %4599 = vmatprep.mubr.f32.mxu0 0.0
    %4600 = vmatmul.mubr.f32.gmra.mrb[0].mxu0 %v4520
    %v4601 = vpop.f32.mrb[0].mxu0
    %v4602 = vadd.f32 0.0, %v4601
    %v4603 = vpop.f32.mrb[0].mxu0
    %4604 = vmatprep.mubr.f32.mxu0 0.0
    %4605 = vmatmul.mubr.f32.gmra.mrb[0].mxu0 %v4523
    %v4606 = vpop.f32.mrb[0].mxu0
    %v4607 = vadd.f32 0.0, %v4606
    %v4608 = vpop.f32.mrb[0].mxu0
    %4609 = vdwg.mxu0
    %4614 = vrot.lane.b32.xlu0 %v4036, 32
    %v4615 = vpop.permute.xlu0 %4614
    %4616 = vrot.lane.b32.xlu0 %v4041, 32
    %v4617 = vpop.permute.xlu0 %4616
    %4618 = vrot.lane.b32.xlu0 %v4046, 32
    %v4619 = vpop.permute.xlu0 %4618
    %4620 = vrot.lane.b32.xlu0 %v4051, 32
    %v4621 = vpop.permute.xlu0 %4620
    %4630 = vrot.lane.b32.xlu0 %v4314, 64
    %v4631 = vpop.permute.xlu0 %4630
    %4632 = vrot.lane.b32.xlu0 %v4319, 64
    %v4633 = vpop.permute.xlu0 %4632
    %4634 = vrot.lane.b32.xlu0 %v4324, 64
    %v4635 = vpop.permute.xlu0 %4634
    %4636 = vrot.lane.b32.xlu0 %v4329, 64
    %v4637 = vpop.permute.xlu0 %4636
    %4646 = vrot.lane.b32.xlu0 %v4592, 96
    %v4647 = vpop.permute.xlu0 %4646
    %4648 = vrot.lane.b32.xlu0 %v4597, 96
    %v4649 = vpop.permute.xlu0 %4648
    %4650 = vrot.lane.b32.xlu0 %v4602, 96
    %v4651 = vpop.permute.xlu0 %4650
    %4652 = vrot.lane.b32.xlu0 %v4607, 96
    %v4653 = vpop.permute.xlu0 %4652
    %v4658 = vsel %vm1672, %v3754, %v4615
    %v4659 = vsel %vm1672, %v3759, %v4617
    %v4660 = vsel %vm1672, %v3764, %v4619
    %v4661 = vsel %vm1672, %v3769, %v4621
    %v4662 = vsel %vm2821, %v4658, %v4631
    %v4663 = vsel %vm2821, %v4659, %v4633
    %v4664 = vsel %vm2821, %v4660, %v4635
    %v4665 = vsel %vm2821, %v4661, %v4637
    %v4666 = vsel %vm2826, %v4662, %v4647
    %v4667 = vsel %vm2826, %v4663, %v4649
    %v4668 = vsel %vm2826, %v4664, %v4651
    %v4669 = vsel %vm2826, %v4665, %v4653
    %v4670 = vlaneseq
    %v4671 = vshrl.u32 %v4670, 7
    %v4672 = vsub.s32 1, %v4671
    %v4673 = vrot.slane %v94, %v4672
    %4674 = vmatprep.subr.mxu0 0.0
    %4675 = vmatpush1.msra.mxu0 %v3037
    %4676 = vmatprep.subr.mxu0 0.0
    %4677 = vmatpush1.msra.mxu0 %v3038
    %4678 = vmatprep.subr.mxu0 0.0
    %4679 = vmatpush1.msra.mxu0 %v3039
    %4680 = vmatprep.subr.mxu0 0.0
    %4681 = vmatpush1.msra.mxu0 %v3040
    %4682 = vmatprep.subr.mxu0 0.0
    %4683 = vmatpush1.msra.mxu0 %v3041
    %4684 = vmatprep.subr.mxu0 0.0
    %4685 = vmatpush1.msra.mxu0 %v3042
    %4686 = vmatprep.subr.mxu0 0.0
    %4687 = vmatpush1.msra.mxu0 %v3043
    %4688 = vmatprep.subr.mxu0 0.0
    %4689 = vmatpush1.msra.mxu0 %v3044
    %4690 = vmatprep.subr.mxu0 0.0
    %4691 = vmatpush1.msra.mxu0 %v3045
    %4692 = vmatprep.subr.mxu0 0.0
    %4693 = vmatpush1.msra.mxu0 %v3046
    %4694 = vmatprep.subr.mxu0 0.0
    %4695 = vmatpush1.msra.mxu0 %v3047
    %4696 = vmatprep.subr.mxu0 0.0
    %4697 = vmatpush1.msra.mxu0 %v3048
    %4698 = vmatprep.subr.mxu0 0.0
    %4699 = vmatpush1.msra.mxu0 %v3049
    %4700 = vmatprep.subr.mxu0 0.0
    %4701 = vmatpush1.msra.mxu0 %v3050
    %4702 = vmatprep.subr.mxu0 0.0
    %4703 = vmatpush1.msra.mxu0 %v3051
    %4704 = vmatprep.subr.mxu0 0.0
    %4705 = vmatpush1.msra.mxu0 %v3052
    %4706 = vmatprep.subr.mxu0 0.0
    %4707 = vmatpush1.msra.mxu0 0.0
    %4708 = vmatprep.subr.mxu0 0.0
    %4709 = vmatpush1.msra.mxu0 0.0
    %4710 = vmatprep.subr.mxu0 0.0
    %4711 = vmatpush1.msra.mxu0 0.0
    %4712 = vmatprep.subr.mxu0 0.0
    %4713 = vmatpush1.msra.mxu0 0.0
    %4714 = vmatprep.subr.mxu0 0.0
    %4715 = vmatpush1.msra.mxu0 0.0
    %4716 = vmatprep.subr.mxu0 0.0
    %4717 = vmatpush1.msra.mxu0 0.0
    %4718 = vmatprep.subr.mxu0 0.0
    %4719 = vmatpush1.msra.mxu0 0.0
    %4720 = vmatprep.subr.mxu0 0.0
    %4721 = vmatpush1.msra.mxu0 0.0
    %4722 = vmatprep.subr.mxu0 0.0
    %4723 = vmatpush1.msra.mxu0 0.0
    %4724 = vmatprep.subr.mxu0 0.0
    %4725 = vmatpush1.msra.mxu0 0.0
    %4726 = vmatprep.subr.mxu0 0.0
    %4727 = vmatpush1.msra.mxu0 0.0
    %4728 = vmatprep.subr.mxu0 0.0
    %4729 = vmatpush1.msra.mxu0 0.0
    %4730 = vmatprep.subr.mxu0 0.0
    %4731 = vmatpush1.msra.mxu0 0.0
    %4732 = vmatprep.subr.mxu0 0.0
    %4733 = vmatpush1.msra.mxu0 0.0
    %4734 = vmatprep.subr.mxu0 0.0
    %4735 = vmatpush1.msra.mxu0 0.0
    %4736 = vmatprep.subr.mxu0 0.0
    %4737 = vmatpush1.msra.mxu0 0.0
    %4738 = vmatprep.mubr.f32.mxu0 0.0
    %4739 = vmatmul.mubr.f32.gmra.mrb[0].mxu0 %v4666
    %v4740 = vpop.f32.mrb[0].mxu0
    %v4741 = vadd.f32 %v4673, %v4740
    %v4742 = vpop.f32.mrb[0].mxu0
    %4743 = vmatprep.mubr.f32.mxu0 0.0
    %4744 = vmatmul.mubr.f32.gmra.mrb[0].mxu0 %v4667
    %v4745 = vpop.f32.mrb[0].mxu0
    %v4746 = vadd.f32 %v4673, %v4745
    %v4747 = vpop.f32.mrb[0].mxu0
    %4748 = vmatprep.mubr.f32.mxu0 0.0
    %4749 = vmatmul.mubr.f32.gmra.mrb[0].mxu0 %v4668
    %v4750 = vpop.f32.mrb[0].mxu0
    %v4751 = vadd.f32 %v4673, %v4750
    %v4752 = vpop.f32.mrb[0].mxu0
    %4753 = vmatprep.mubr.f32.mxu0 0.0
    %4754 = vmatmul.mubr.f32.gmra.mrb[0].mxu0 %v4669
    %v4755 = vpop.f32.mrb[0].mxu0
    %v4756 = vadd.f32 %v4673, %v4755
    %v4757 = vpop.f32.mrb[0].mxu0
    %4758 = vdwg.mxu0
    %v4759 = vadd.f32 %v2981, %v4741
    %v4760 = vadd.f32 %v2982, %v4746
    %v4761 = vadd.f32 %v2983, %v4751
    %v4762 = vadd.f32 %v2984, %v4756
    %4763 = vadd.xlane.f32.xlu0 %v4759
    %v4764 = vpop.xlane.xlu0 %4763
    %4765 = vadd.xlane.f32.xlu0 %v4760
    %v4766 = vpop.xlane.xlu0 %4765
    %4767 = vadd.xlane.f32.xlu0 %v4761
    %v4768 = vpop.xlane.xlu0 %4767
    %4769 = vadd.xlane.f32.xlu0 %v4762
    %v4770 = vpop.xlane.xlu0 %4769
    %v4771 = vmul.f32 %v4764, %v2932
    %v4772 = vmul.f32 %v4766, %v2932
    %v4773 = vmul.f32 %v4768, %v2932
    %v4774 = vmul.f32 %v4770, %v2932
    %v4775 = vsub.f32 %v4759, %v4771
    %v4776 = vsub.f32 %v4760, %v4772
    %v4777 = vsub.f32 %v4761, %v4773
    %v4778 = vsub.f32 %v4762, %v4774
    %v4779 = vmul.f32 %v4775, %v4775
    %v4780 = vmul.f32 %v4776, %v4776
    %v4781 = vmul.f32 %v4777, %v4777
    %v4782 = vmul.f32 %v4778, %v4778
    %4783 = vadd.xlane.f32.xlu0 %v4779
    %v4784 = vpop.xlane.xlu0 %4783
    %4785 = vadd.xlane.f32.xlu0 %v4780
    %v4786 = vpop.xlane.xlu0 %4785
    %4787 = vadd.xlane.f32.xlu0 %v4781
    %v4788 = vpop.xlane.xlu0 %4787
    %4789 = vadd.xlane.f32.xlu0 %v4782
    %v4790 = vpop.xlane.xlu0 %4789
    %v4791 = vmul.f32 %v4784, %v2932
    %v4792 = vmul.f32 %v4786, %v2932
    %v4793 = vmul.f32 %v4788, %v2932
    %v4794 = vmul.f32 %v4790, %v2932
    %v4795 = vadd.f32 %v4791, 1e-05
    %v4796 = vadd.f32 %v4792, 1e-05
    %v4797 = vadd.f32 %v4793, 1e-05
    %v4798 = vadd.f32 %v4794, 1e-05
    %v4799 = vrsqrt.pop %v4795
    %v4800 = vrsqrt.pop %v4796
    %v4801 = vrsqrt.pop %v4797
    %v4802 = vrsqrt.pop %v4798
    %v4803 = vmul.f32 %v4775, %v4799
    %v4804 = vmul.f32 %v4776, %v4800
    %v4805 = vmul.f32 %v4777, %v4801
    %v4806 = vmul.f32 %v4778, %v4802
    %v4807 = vlaneseq
    %v4808 = vshrl.u32 %v4807, 7
    %v4809 = vsub.s32 2, %v4808
    %v4810 = vrot.slane %v94, %v4809
    %v4811 = vmul.f32 %v4803, %v4810
    %v4812 = vmul.f32 %v4804, %v4810
    %v4813 = vmul.f32 %v4805, %v4810
    %v4814 = vmul.f32 %v4806, %v4810
    %v4815 = vlaneseq
    %v4816 = vshrl.u32 %v4815, 7
    %v4817 = vsub.s32 3, %v4816
    %v4818 = vrot.slane %v94, %v4817
    %v4819 = vadd.f32 %v4811, %v4818
    %v4820 = vadd.f32 %v4812, %v4818
    %v4821 = vadd.f32 %v4813, %v4818
    %v4822 = vadd.f32 %v4814, %v4818
    %v4823 = vld [vmem:[#allocation8] sm:$0xff]
    %v4824 = vld [vmem:[#allocation8 + $0x8] sm:$0xff]
    %v4825 = vld [vmem:[#allocation8 + $0x10] sm:$0xff]
    %v4826 = vld [vmem:[#allocation8 + $0x18] sm:$0xff]
    %v4827 = vld [vmem:[#allocation8 + $0x20] sm:$0xff]
    %v4828 = vld [vmem:[#allocation8 + $0x28] sm:$0xff]
    %v4829 = vld [vmem:[#allocation8 + $0x30] sm:$0xff]
    %v4830 = vld [vmem:[#allocation8 + $0x38] sm:$0xff]
    %v4831 = vld [vmem:[#allocation8 + $0x40] sm:$0xff]
    %v4832 = vld [vmem:[#allocation8 + $0x48] sm:$0xff]
    %v4833 = vld [vmem:[#allocation8 + $0x50] sm:$0xff]
    %v4834 = vld [vmem:[#allocation8 + $0x58] sm:$0xff]
    %v4835 = vld [vmem:[#allocation8 + $0x60] sm:$0xff]
    %v4836 = vld [vmem:[#allocation8 + $0x68] sm:$0xff]
    %v4837 = vld [vmem:[#allocation8 + $0x70] sm:$0xff]
    %v4838 = vld [vmem:[#allocation8 + $0x78] sm:$0xff]
    %v4839 = vld [vmem:[#allocation8 + $0x80] sm:$0xff]
    %v4840 = vld [vmem:[#allocation8 + $0x88] sm:$0xff]
    %v4841 = vld [vmem:[#allocation8 + $0x90] sm:$0xff]
    %v4842 = vld [vmem:[#allocation8 + $0x98] sm:$0xff]
    %v4843 = vld [vmem:[#allocation8 + $0xa0] sm:$0xff]
    %v4844 = vld [vmem:[#allocation8 + $0xa8] sm:$0xff]
    %v4845 = vld [vmem:[#allocation8 + $0xb0] sm:$0xff]
    %v4846 = vld [vmem:[#allocation8 + $0xb8] sm:$0xff]
    %v4847 = vld [vmem:[#allocation8 + $0xc0] sm:$0xff]
    %v4848 = vld [vmem:[#allocation8 + $0xc8] sm:$0xff]
    %v4849 = vld [vmem:[#allocation8 + $0xd0] sm:$0xff]
    %v4850 = vld [vmem:[#allocation8 + $0xd8] sm:$0xff]
    %v4851 = vld [vmem:[#allocation8 + $0xe0] sm:$0xff]
    %v4852 = vld [vmem:[#allocation8 + $0xe8] sm:$0xff]
    %v4853 = vld [vmem:[#allocation8 + $0xf0] sm:$0xff]
    %v4854 = vld [vmem:[#allocation8 + $0xf8] sm:$0xff]
    %v4855 = vld [vmem:[#allocation8 + $0x100] sm:$0xff]
    %v4856 = vld [vmem:[#allocation8 + $0x108] sm:$0xff]
    %v4857 = vld [vmem:[#allocation8 + $0x110] sm:$0xff]
    %v4858 = vld [vmem:[#allocation8 + $0x118] sm:$0xff]
    %v4859 = vld [vmem:[#allocation8 + $0x120] sm:$0xff]
    %v4860 = vld [vmem:[#allocation8 + $0x128] sm:$0xff]
    %v4861 = vld [vmem:[#allocation8 + $0x130] sm:$0xff]
    %v4862 = vld [vmem:[#allocation8 + $0x138] sm:$0xff]
    %v4863 = vld [vmem:[#allocation8 + $0x140] sm:$0xff]
    %v4864 = vld [vmem:[#allocation8 + $0x148] sm:$0xff]
    %v4865 = vld [vmem:[#allocation8 + $0x150] sm:$0xff]
    %v4866 = vld [vmem:[#allocation8 + $0x158] sm:$0xff]
    %v4867 = vld [vmem:[#allocation8 + $0x160] sm:$0xff]
    %v4868 = vld [vmem:[#allocation8 + $0x168] sm:$0xff]
    %v4869 = vld [vmem:[#allocation8 + $0x170] sm:$0xff]
    %v4870 = vld [vmem:[#allocation8 + $0x178] sm:$0xff]
    %v4871 = vld [vmem:[#allocation8 + $0x180] sm:$0xff]
    %v4872 = vld [vmem:[#allocation8 + $0x188] sm:$0xff]
    %v4873 = vld [vmem:[#allocation8 + $0x190] sm:$0xff]
    %v4874 = vld [vmem:[#allocation8 + $0x198] sm:$0xff]
    %v4875 = vld [vmem:[#allocation8 + $0x1a0] sm:$0xff]
    %v4876 = vld [vmem:[#allocation8 + $0x1a8] sm:$0xff]
    %v4877 = vld [vmem:[#allocation8 + $0x1b0] sm:$0xff]
    %v4878 = vld [vmem:[#allocation8 + $0x1b8] sm:$0xff]
    %v4879 = vld [vmem:[#allocation8 + $0x1c0] sm:$0xff]
    %v4880 = vld [vmem:[#allocation8 + $0x1c8] sm:$0xff]
    %v4881 = vld [vmem:[#allocation8 + $0x1d0] sm:$0xff]
    %v4882 = vld [vmem:[#allocation8 + $0x1d8] sm:$0xff]
    %v4883 = vld [vmem:[#allocation8 + $0x1e0] sm:$0xff]
    %v4884 = vld [vmem:[#allocation8 + $0x1e8] sm:$0xff]
    %v4885 = vld [vmem:[#allocation8 + $0x1f0] sm:$0xff]
    %v4886 = vld [vmem:[#allocation8 + $0x1f8] sm:$0xff]
    %s4887 = scalar_lea.vmem [#allocation8], 512
    %v4888 = vld [vmem:[%s4887] ss:$8 sm:$0xf]
    %v4890 = vlaneseq
    %v4891 = vshrl.u32 %v4890, 7
    %v4892 = vsub.s32 0, %v4891
    %v4893 = vrot.slane %v4888, %v4892
    %v4894 = vlaneseq
    %v4895 = vshrl.u32 %v4894, 7
    %v4896 = vsub.s32 1, %v4895
    %v4897 = vrot.slane %v4888, %v4896
    %v4898 = vlaneseq
    %v4899 = vshrl.u32 %v4898, 7
    %v4900 = vsub.s32 2, %v4899
    %v4901 = vrot.slane %v4888, %v4900
    %v4902 = vlaneseq
    %v4903 = vshrl.u32 %v4902, 7
    %v4904 = vsub.s32 3, %v4903
    %v4905 = vrot.slane %v4888, %v4904
    %4910 = vmatprep.subr.mxu0 %v4824
    %4911 = vmatpush1.msra.mxu0 %v4823
    %4912 = vmatprep.subr.mxu0 %v4828
    %4913 = vmatpush1.msra.mxu0 %v4827
    %4914 = vmatprep.subr.mxu0 %v4832
    %4915 = vmatpush1.msra.mxu0 %v4831
    %4916 = vmatprep.subr.mxu0 %v4836
    %4917 = vmatpush1.msra.mxu0 %v4835
    %4918 = vmatprep.subr.mxu0 %v4840
    %4919 = vmatpush1.msra.mxu0 %v4839
    %4920 = vmatprep.subr.mxu0 %v4844
    %4921 = vmatpush1.msra.mxu0 %v4843
    %4922 = vmatprep.subr.mxu0 %v4848
    %4923 = vmatpush1.msra.mxu0 %v4847
    %4924 = vmatprep.subr.mxu0 %v4852
    %4925 = vmatpush1.msra.mxu0 %v4851
    %4926 = vmatprep.subr.mxu0 %v4856
    %4927 = vmatpush1.msra.mxu0 %v4855
    %4928 = vmatprep.subr.mxu0 %v4860
    %4929 = vmatpush1.msra.mxu0 %v4859
    %4930 = vmatprep.subr.mxu0 %v4864
    %4931 = vmatpush1.msra.mxu0 %v4863
    %4932 = vmatprep.subr.mxu0 %v4868
    %4933 = vmatpush1.msra.mxu0 %v4867
    %4934 = vmatprep.subr.mxu0 %v4872
    %4935 = vmatpush1.msra.mxu0 %v4871
    %4936 = vmatprep.subr.mxu0 %v4876
    %4937 = vmatpush1.msra.mxu0 %v4875
    %4938 = vmatprep.subr.mxu0 %v4880
    %4939 = vmatpush1.msra.mxu0 %v4879
    %4940 = vmatprep.subr.mxu0 %v4884
    %4941 = vmatpush1.msra.mxu0 %v4883
    %4942 = vmatprep.subr.mxu0 0.0
    %4943 = vmatpush1.msra.mxu0 0.0
    %4944 = vmatprep.subr.mxu0 0.0
    %4945 = vmatpush1.msra.mxu0 0.0
    %4946 = vmatprep.subr.mxu0 0.0
    %4947 = vmatpush1.msra.mxu0 0.0
    %4948 = vmatprep.subr.mxu0 0.0
    %4949 = vmatpush1.msra.mxu0 0.0
    %4950 = vmatprep.subr.mxu0 0.0
    %4951 = vmatpush1.msra.mxu0 0.0
    %4952 = vmatprep.subr.mxu0 0.0
    %4953 = vmatpush1.msra.mxu0 0.0
    %4954 = vmatprep.subr.mxu0 0.0
    %4955 = vmatpush1.msra.mxu0 0.0
    %4956 = vmatprep.subr.mxu0 0.0
    %4957 = vmatpush1.msra.mxu0 0.0
    %4958 = vmatprep.subr.mxu0 0.0
    %4959 = vmatpush1.msra.mxu0 0.0
    %4960 = vmatprep.subr.mxu0 0.0
    %4961 = vmatpush1.msra.mxu0 0.0
    %4962 = vmatprep.subr.mxu0 0.0
    %4963 = vmatpush1.msra.mxu0 0.0
    %4964 = vmatprep.subr.mxu0 0.0
    %4965 = vmatpush1.msra.mxu0 0.0
    %4966 = vmatprep.subr.mxu0 0.0
    %4967 = vmatpush1.msra.mxu0 0.0
    %4968 = vmatprep.subr.mxu0 0.0
    %4969 = vmatpush1.msra.mxu0 0.0
    %4970 = vmatprep.subr.mxu0 0.0
    %4971 = vmatpush1.msra.mxu0 0.0
    %4972 = vmatprep.subr.mxu0 0.0
    %4973 = vmatpush1.msra.mxu0 0.0
    %4974 = vmatprep.mubr.f32.mxu0 0.0
    %4975 = vmatmul.mubr.f32.gmra.mrb[0].mxu0 %v4819
    %v4976 = vpop.f32.mrb[0].mxu0
    %v4977 = vadd.f32 %v4893, %v4976
    %v4978 = vpop.f32.mrb[0].mxu0
    %v4979 = vadd.f32 %v4897, %v4978
    %4980 = vmatprep.mubr.f32.mxu0 0.0
    %4981 = vmatmul.mubr.f32.gmra.mrb[0].mxu0 %v4820
    %v4982 = vpop.f32.mrb[0].mxu0
    %v4983 = vadd.f32 %v4893, %v4982
    %v4984 = vpop.f32.mrb[0].mxu0
    %v4985 = vadd.f32 %v4897, %v4984
    %4986 = vmatprep.mubr.f32.mxu0 0.0
    %4987 = vmatmul.mubr.f32.gmra.mrb[0].mxu0 %v4821
    %v4988 = vpop.f32.mrb[0].mxu0
    %v4989 = vadd.f32 %v4893, %v4988
    %v4990 = vpop.f32.mrb[0].mxu0
    %v4991 = vadd.f32 %v4897, %v4990
    %4992 = vmatprep.mubr.f32.mxu0 0.0
    %4993 = vmatmul.mubr.f32.gmra.mrb[0].mxu0 %v4822
    %v4994 = vpop.f32.mrb[0].mxu0
    %v4995 = vadd.f32 %v4893, %v4994
    %v4996 = vpop.f32.mrb[0].mxu0
    %v4997 = vadd.f32 %v4897, %v4996
    %4998 = vdwg.mxu0
    %4999 = vmatprep.subr.mxu0 %v4826
    %5000 = vmatpush1.msra.mxu0 %v4825
    %5001 = vmatprep.subr.mxu0 %v4830
    %5002 = vmatpush1.msra.mxu0 %v4829
    %5003 = vmatprep.subr.mxu0 %v4834
    %5004 = vmatpush1.msra.mxu0 %v4833
    %5005 = vmatprep.subr.mxu0 %v4838
    %5006 = vmatpush1.msra.mxu0 %v4837
    %5007 = vmatprep.subr.mxu0 %v4842
    %5008 = vmatpush1.msra.mxu0 %v4841
    %5009 = vmatprep.subr.mxu0 %v4846
    %5010 = vmatpush1.msra.mxu0 %v4845
    %5011 = vmatprep.subr.mxu0 %v4850
    %5012 = vmatpush1.msra.mxu0 %v4849
    %5013 = vmatprep.subr.mxu0 %v4854
    %5014 = vmatpush1.msra.mxu0 %v4853
    %5015 = vmatprep.subr.mxu0 %v4858
    %5016 = vmatpush1.msra.mxu0 %v4857
    %5017 = vmatprep.subr.mxu0 %v4862
    %5018 = vmatpush1.msra.mxu0 %v4861
    %5019 = vmatprep.subr.mxu0 %v4866
    %5020 = vmatpush1.msra.mxu0 %v4865
    %5021 = vmatprep.subr.mxu0 %v4870
    %5022 = vmatpush1.msra.mxu0 %v4869
    %5023 = vmatprep.subr.mxu0 %v4874
    %5024 = vmatpush1.msra.mxu0 %v4873
    %5025 = vmatprep.subr.mxu0 %v4878
    %5026 = vmatpush1.msra.mxu0 %v4877
    %5027 = vmatprep.subr.mxu0 %v4882
    %5028 = vmatpush1.msra.mxu0 %v4881
    %5029 = vmatprep.subr.mxu0 %v4886
    %5030 = vmatpush1.msra.mxu0 %v4885
    %5031 = vmatprep.subr.mxu0 0.0
    %5032 = vmatpush1.msra.mxu0 0.0
    %5033 = vmatprep.subr.mxu0 0.0
    %5034 = vmatpush1.msra.mxu0 0.0
    %5035 = vmatprep.subr.mxu0 0.0
    %5036 = vmatpush1.msra.mxu0 0.0
    %5037 = vmatprep.subr.mxu0 0.0
    %5038 = vmatpush1.msra.mxu0 0.0
    %5039 = vmatprep.subr.mxu0 0.0
    %5040 = vmatpush1.msra.mxu0 0.0
    %5041 = vmatprep.subr.mxu0 0.0
    %5042 = vmatpush1.msra.mxu0 0.0
    %5043 = vmatprep.subr.mxu0 0.0
    %5044 = vmatpush1.msra.mxu0 0.0
    %5045 = vmatprep.subr.mxu0 0.0
    %5046 = vmatpush1.msra.mxu0 0.0
    %5047 = vmatprep.subr.mxu0 0.0
    %5048 = vmatpush1.msra.mxu0 0.0
    %5049 = vmatprep.subr.mxu0 0.0
    %5050 = vmatpush1.msra.mxu0 0.0
    %5051 = vmatprep.subr.mxu0 0.0
    %5052 = vmatpush1.msra.mxu0 0.0
    %5053 = vmatprep.subr.mxu0 0.0
    %5054 = vmatpush1.msra.mxu0 0.0
    %5055 = vmatprep.subr.mxu0 0.0
    %5056 = vmatpush1.msra.mxu0 0.0
    %5057 = vmatprep.subr.mxu0 0.0
    %5058 = vmatpush1.msra.mxu0 0.0
    %5059 = vmatprep.subr.mxu0 0.0
    %5060 = vmatpush1.msra.mxu0 0.0
    %5061 = vmatprep.subr.mxu0 0.0
    %5062 = vmatpush1.msra.mxu0 0.0
    %5063 = vmatprep.mubr.f32.mxu0 0.0
    %5064 = vmatmul.mubr.f32.gmra.mrb[0].mxu0 %v4819
    %v5065 = vpop.f32.mrb[0].mxu0
    %v5066 = vadd.f32 %v4901, %v5065
    %v5067 = vpop.f32.mrb[0].mxu0
    %v5068 = vadd.f32 %v4905, %v5067
    %5069 = vmatprep.mubr.f32.mxu0 0.0
    %5070 = vmatmul.mubr.f32.gmra.mrb[0].mxu0 %v4820
    %v5071 = vpop.f32.mrb[0].mxu0
    %v5072 = vadd.f32 %v4901, %v5071
    %v5073 = vpop.f32.mrb[0].mxu0
    %v5074 = vadd.f32 %v4905, %v5073
    %5075 = vmatprep.mubr.f32.mxu0 0.0
    %5076 = vmatmul.mubr.f32.gmra.mrb[0].mxu0 %v4821
    %v5077 = vpop.f32.mrb[0].mxu0
    %v5078 = vadd.f32 %v4901, %v5077
    %v5079 = vpop.f32.mrb[0].mxu0
    %v5080 = vadd.f32 %v4905, %v5079
    %5081 = vmatprep.mubr.f32.mxu0 0.0
    %5082 = vmatmul.mubr.f32.gmra.mrb[0].mxu0 %v4822
    %v5083 = vpop.f32.mrb[0].mxu0
    %v5084 = vadd.f32 %v4901, %v5083
    %v5085 = vpop.f32.mrb[0].mxu0
    %v5086 = vadd.f32 %v4905, %v5085
    %5087 = vdwg.mxu0
    %v5088 = vmax.f32 %v4977, 0.0
    %v5089 = vmax.f32 %v4979, 0.0
    %v5090 = vmax.f32 %v5066, 0.0
    %v5091 = vmax.f32 %v5068, 0.0
    %v5092 = vmax.f32 %v4983, 0.0
    %v5093 = vmax.f32 %v4985, 0.0
    %v5094 = vmax.f32 %v5072, 0.0
    %v5095 = vmax.f32 %v5074, 0.0
    %v5096 = vmax.f32 %v4989, 0.0
    %v5097 = vmax.f32 %v4991, 0.0
    %v5098 = vmax.f32 %v5078, 0.0
    %v5099 = vmax.f32 %v5080, 0.0
    %v5100 = vmax.f32 %v4995, 0.0
    %v5101 = vmax.f32 %v4997, 0.0
    %v5102 = vmax.f32 %v5084, 0.0
    %v5103 = vmax.f32 %v5086, 0.0
    %v5104 = vld [vmem:[#allocation10] sm:$0xff]
    %v5105 = vld [vmem:[#allocation10 + $0x8] sm:$0xff]
    %v5106 = vld [vmem:[#allocation10 + $0x10] sm:$0xff]
    %v5107 = vld [vmem:[#allocation10 + $0x18] sm:$0xff]
    %v5108 = vld [vmem:[#allocation10 + $0x20] sm:$0xff]
    %v5109 = vld [vmem:[#allocation10 + $0x28] sm:$0xff]
    %v5110 = vld [vmem:[#allocation10 + $0x30] sm:$0xff]
    %v5111 = vld [vmem:[#allocation10 + $0x38] sm:$0xff]
    %v5112 = vld [vmem:[#allocation10 + $0x40] sm:$0xff]
    %v5113 = vld [vmem:[#allocation10 + $0x48] sm:$0xff]
    %v5114 = vld [vmem:[#allocation10 + $0x50] sm:$0xff]
    %v5115 = vld [vmem:[#allocation10 + $0x58] sm:$0xff]
    %v5116 = vld [vmem:[#allocation10 + $0x60] sm:$0xff]
    %v5117 = vld [vmem:[#allocation10 + $0x68] sm:$0xff]
    %v5118 = vld [vmem:[#allocation10 + $0x70] sm:$0xff]
    %v5119 = vld [vmem:[#allocation10 + $0x78] sm:$0xff]
    %v5120 = vld [vmem:[#allocation10 + $0x80] sm:$0xff]
    %v5121 = vld [vmem:[#allocation10 + $0x88] sm:$0xff]
    %v5122 = vld [vmem:[#allocation10 + $0x90] sm:$0xff]
    %v5123 = vld [vmem:[#allocation10 + $0x98] sm:$0xff]
    %v5124 = vld [vmem:[#allocation10 + $0xa0] sm:$0xff]
    %v5125 = vld [vmem:[#allocation10 + $0xa8] sm:$0xff]
    %v5126 = vld [vmem:[#allocation10 + $0xb0] sm:$0xff]
    %v5127 = vld [vmem:[#allocation10 + $0xb8] sm:$0xff]
    %v5128 = vld [vmem:[#allocation10 + $0xc0] sm:$0xff]
    %v5129 = vld [vmem:[#allocation10 + $0xc8] sm:$0xff]
    %v5130 = vld [vmem:[#allocation10 + $0xd0] sm:$0xff]
    %v5131 = vld [vmem:[#allocation10 + $0xd8] sm:$0xff]
    %v5132 = vld [vmem:[#allocation10 + $0xe0] sm:$0xff]
    %v5133 = vld [vmem:[#allocation10 + $0xe8] sm:$0xff]
    %v5134 = vld [vmem:[#allocation10 + $0xf0] sm:$0xff]
    %v5135 = vld [vmem:[#allocation10 + $0xf8] sm:$0xff]
    %v5136 = vld [vmem:[#allocation10 + $0x100] sm:$0xff]
    %v5137 = vld [vmem:[#allocation10 + $0x108] sm:$0xff]
    %v5138 = vld [vmem:[#allocation10 + $0x110] sm:$0xff]
    %v5139 = vld [vmem:[#allocation10 + $0x118] sm:$0xff]
    %v5140 = vld [vmem:[#allocation10 + $0x120] sm:$0xff]
    %v5141 = vld [vmem:[#allocation10 + $0x128] sm:$0xff]
    %v5142 = vld [vmem:[#allocation10 + $0x130] sm:$0xff]
    %v5143 = vld [vmem:[#allocation10 + $0x138] sm:$0xff]
    %v5144 = vld [vmem:[#allocation10 + $0x140] sm:$0xff]
    %v5145 = vld [vmem:[#allocation10 + $0x148] sm:$0xff]
    %v5146 = vld [vmem:[#allocation10 + $0x150] sm:$0xff]
    %v5147 = vld [vmem:[#allocation10 + $0x158] sm:$0xff]
    %v5148 = vld [vmem:[#allocation10 + $0x160] sm:$0xff]
    %v5149 = vld [vmem:[#allocation10 + $0x168] sm:$0xff]
    %v5150 = vld [vmem:[#allocation10 + $0x170] sm:$0xff]
    %v5151 = vld [vmem:[#allocation10 + $0x178] sm:$0xff]
    %v5152 = vld [vmem:[#allocation10 + $0x180] sm:$0xff]
    %v5153 = vld [vmem:[#allocation10 + $0x188] sm:$0xff]
    %v5154 = vld [vmem:[#allocation10 + $0x190] sm:$0xff]
    %v5155 = vld [vmem:[#allocation10 + $0x198] sm:$0xff]
    %v5156 = vld [vmem:[#allocation10 + $0x1a0] sm:$0xff]
    %v5157 = vld [vmem:[#allocation10 + $0x1a8] sm:$0xff]
    %v5158 = vld [vmem:[#allocation10 + $0x1b0] sm:$0xff]
    %v5159 = vld [vmem:[#allocation10 + $0x1b8] sm:$0xff]
    %v5160 = vld [vmem:[#allocation10 + $0x1c0] sm:$0xff]
    %v5161 = vld [vmem:[#allocation10 + $0x1c8] sm:$0xff]
    %v5162 = vld [vmem:[#allocation10 + $0x1d0] sm:$0xff]
    %v5163 = vld [vmem:[#allocation10 + $0x1d8] sm:$0xff]
    %v5164 = vld [vmem:[#allocation10 + $0x1e0] sm:$0xff]
    %v5165 = vld [vmem:[#allocation10 + $0x1e8] sm:$0xff]
    %v5166 = vld [vmem:[#allocation10 + $0x1f0] sm:$0xff]
    %v5167 = vld [vmem:[#allocation10 + $0x1f8] sm:$0xff]
    %v5168 = vlaneseq
    %v5169 = vshrl.u32 %v5168, 7
    %v5170 = vsub.s32 4, %v5169
    %v5171 = vrot.slane %v94, %v5170
    %5172 = vmatprep.subr.mxu0 0.0
    %5173 = vmatpush1.msra.mxu0 %v5104
    %5174 = vmatprep.subr.mxu0 0.0
    %5175 = vmatpush1.msra.mxu0 %v5105
    %5176 = vmatprep.subr.mxu0 0.0
    %5177 = vmatpush1.msra.mxu0 %v5106
    %5178 = vmatprep.subr.mxu0 0.0
    %5179 = vmatpush1.msra.mxu0 %v5107
    %5180 = vmatprep.subr.mxu0 0.0
    %5181 = vmatpush1.msra.mxu0 %v5108
    %5182 = vmatprep.subr.mxu0 0.0
    %5183 = vmatpush1.msra.mxu0 %v5109
    %5184 = vmatprep.subr.mxu0 0.0
    %5185 = vmatpush1.msra.mxu0 %v5110
    %5186 = vmatprep.subr.mxu0 0.0
    %5187 = vmatpush1.msra.mxu0 %v5111
    %5188 = vmatprep.subr.mxu0 0.0
    %5189 = vmatpush1.msra.mxu0 %v5112
    %5190 = vmatprep.subr.mxu0 0.0
    %5191 = vmatpush1.msra.mxu0 %v5113
    %5192 = vmatprep.subr.mxu0 0.0
    %5193 = vmatpush1.msra.mxu0 %v5114
    %5194 = vmatprep.subr.mxu0 0.0
    %5195 = vmatpush1.msra.mxu0 %v5115
    %5196 = vmatprep.subr.mxu0 0.0
    %5197 = vmatpush1.msra.mxu0 %v5116
    %5198 = vmatprep.subr.mxu0 0.0
    %5199 = vmatpush1.msra.mxu0 %v5117
    %5200 = vmatprep.subr.mxu0 0.0
    %5201 = vmatpush1.msra.mxu0 %v5118
    %5202 = vmatprep.subr.mxu0 0.0
    %5203 = vmatpush1.msra.mxu0 %v5119
    %5204 = vmatprep.subr.mxu0 0.0
    %5205 = vmatpush1.msra.mxu0 %v5120
    %5206 = vmatprep.subr.mxu0 0.0
    %5207 = vmatpush1.msra.mxu0 %v5121
    %5208 = vmatprep.subr.mxu0 0.0
    %5209 = vmatpush1.msra.mxu0 %v5122
    %5210 = vmatprep.subr.mxu0 0.0
    %5211 = vmatpush1.msra.mxu0 %v5123
    %5212 = vmatprep.subr.mxu0 0.0
    %5213 = vmatpush1.msra.mxu0 %v5124
    %5214 = vmatprep.subr.mxu0 0.0
    %5215 = vmatpush1.msra.mxu0 %v5125
    %5216 = vmatprep.subr.mxu0 0.0
    %5217 = vmatpush1.msra.mxu0 %v5126
    %5218 = vmatprep.subr.mxu0 0.0
    %5219 = vmatpush1.msra.mxu0 %v5127
    %5220 = vmatprep.subr.mxu0 0.0
    %5221 = vmatpush1.msra.mxu0 %v5128
    %5222 = vmatprep.subr.mxu0 0.0
    %5223 = vmatpush1.msra.mxu0 %v5129
    %5224 = vmatprep.subr.mxu0 0.0
    %5225 = vmatpush1.msra.mxu0 %v5130
    %5226 = vmatprep.subr.mxu0 0.0
    %5227 = vmatpush1.msra.mxu0 %v5131
    %5228 = vmatprep.subr.mxu0 0.0
    %5229 = vmatpush1.msra.mxu0 %v5132
    %5230 = vmatprep.subr.mxu0 0.0
    %5231 = vmatpush1.msra.mxu0 %v5133
    %5232 = vmatprep.subr.mxu0 0.0
    %5233 = vmatpush1.msra.mxu0 %v5134
    %5234 = vmatprep.subr.mxu0 0.0
    %5235 = vmatpush1.msra.mxu0 %v5135
    %5236 = vmatprep.mubr.f32.mxu0 %v5089
    %5237 = vmatmul.mubr.f32.gmra.mrb[0].mxu0 %v5088
    %v5238 = vpop.f32.mrb[0].mxu0
    %v5239 = vadd.f32 %v5171, %v5238
    %v5240 = vpop.f32.mrb[0].mxu0
    %5241 = vmatprep.mubr.f32.mxu0 %v5093
    %5242 = vmatmul.mubr.f32.gmra.mrb[0].mxu0 %v5092
    %v5243 = vpop.f32.mrb[0].mxu0
    %v5244 = vadd.f32 %v5171, %v5243
    %v5245 = vpop.f32.mrb[0].mxu0
    %5246 = vmatprep.mubr.f32.mxu0 %v5097
    %5247 = vmatmul.mubr.f32.gmra.mrb[0].mxu0 %v5096
    %v5248 = vpop.f32.mrb[0].mxu0
    %v5249 = vadd.f32 %v5171, %v5248
    %v5250 = vpop.f32.mrb[0].mxu0
    %5251 = vmatprep.mubr.f32.mxu0 %v5101
    %5252 = vmatmul.mubr.f32.gmra.mrb[0].mxu0 %v5100
    %v5253 = vpop.f32.mrb[0].mxu0
    %v5254 = vadd.f32 %v5171, %v5253
    %v5255 = vpop.f32.mrb[0].mxu0
    %5256 = vdwg.mxu0
    %5257 = vmatprep.subr.mxu0 0.0
    %5258 = vmatpush1.msra.mxu0 %v5136
    %5259 = vmatprep.subr.mxu0 0.0
    %5260 = vmatpush1.msra.mxu0 %v5137
    %5261 = vmatprep.subr.mxu0 0.0
    %5262 = vmatpush1.msra.mxu0 %v5138
    %5263 = vmatprep.subr.mxu0 0.0
    %5264 = vmatpush1.msra.mxu0 %v5139
    %5265 = vmatprep.subr.mxu0 0.0
    %5266 = vmatpush1.msra.mxu0 %v5140
    %5267 = vmatprep.subr.mxu0 0.0
    %5268 = vmatpush1.msra.mxu0 %v5141
    %5269 = vmatprep.subr.mxu0 0.0
    %5270 = vmatpush1.msra.mxu0 %v5142
    %5271 = vmatprep.subr.mxu0 0.0
    %5272 = vmatpush1.msra.mxu0 %v5143
    %5273 = vmatprep.subr.mxu0 0.0
    %5274 = vmatpush1.msra.mxu0 %v5144
    %5275 = vmatprep.subr.mxu0 0.0
    %5276 = vmatpush1.msra.mxu0 %v5145
    %5277 = vmatprep.subr.mxu0 0.0
    %5278 = vmatpush1.msra.mxu0 %v5146
    %5279 = vmatprep.subr.mxu0 0.0
    %5280 = vmatpush1.msra.mxu0 %v5147
    %5281 = vmatprep.subr.mxu0 0.0
    %5282 = vmatpush1.msra.mxu0 %v5148
    %5283 = vmatprep.subr.mxu0 0.0
    %5284 = vmatpush1.msra.mxu0 %v5149
    %5285 = vmatprep.subr.mxu0 0.0
    %5286 = vmatpush1.msra.mxu0 %v5150
    %5287 = vmatprep.subr.mxu0 0.0
    %5288 = vmatpush1.msra.mxu0 %v5151
    %5289 = vmatprep.subr.mxu0 0.0
    %5290 = vmatpush1.msra.mxu0 %v5152
    %5291 = vmatprep.subr.mxu0 0.0
    %5292 = vmatpush1.msra.mxu0 %v5153
    %5293 = vmatprep.subr.mxu0 0.0
    %5294 = vmatpush1.msra.mxu0 %v5154
    %5295 = vmatprep.subr.mxu0 0.0
    %5296 = vmatpush1.msra.mxu0 %v5155
    %5297 = vmatprep.subr.mxu0 0.0
    %5298 = vmatpush1.msra.mxu0 %v5156
    %5299 = vmatprep.subr.mxu0 0.0
    %5300 = vmatpush1.msra.mxu0 %v5157
    %5301 = vmatprep.subr.mxu0 0.0
    %5302 = vmatpush1.msra.mxu0 %v5158
    %5303 = vmatprep.subr.mxu0 0.0
    %5304 = vmatpush1.msra.mxu0 %v5159
    %5305 = vmatprep.subr.mxu0 0.0
    %5306 = vmatpush1.msra.mxu0 %v5160
    %5307 = vmatprep.subr.mxu0 0.0
    %5308 = vmatpush1.msra.mxu0 %v5161
    %5309 = vmatprep.subr.mxu0 0.0
    %5310 = vmatpush1.msra.mxu0 %v5162
    %5311 = vmatprep.subr.mxu0 0.0
    %5312 = vmatpush1.msra.mxu0 %v5163
    %5313 = vmatprep.subr.mxu0 0.0
    %5314 = vmatpush1.msra.mxu0 %v5164
    %5315 = vmatprep.subr.mxu0 0.0
    %5316 = vmatpush1.msra.mxu0 %v5165
    %5317 = vmatprep.subr.mxu0 0.0
    %5318 = vmatpush1.msra.mxu0 %v5166
    %5319 = vmatprep.subr.mxu0 0.0
    %5320 = vmatpush1.msra.mxu0 %v5167
    %5321 = vmatprep.mubr.f32.mxu0 %v5091
    %5322 = vmatmul.mubr.f32.gmra.mrb[0].mxu0 %v5090
    %v5323 = vpop.f32.mrb[0].mxu0
    %v5324 = vadd.f32 %v5239, %v5323
    %v5325 = vpop.f32.mrb[0].mxu0
    %5326 = vmatprep.mubr.f32.mxu0 %v5095
    %5327 = vmatmul.mubr.f32.gmra.mrb[0].mxu0 %v5094
    %v5328 = vpop.f32.mrb[0].mxu0
    %v5329 = vadd.f32 %v5244, %v5328
    %v5330 = vpop.f32.mrb[0].mxu0
    %5331 = vmatprep.mubr.f32.mxu0 %v5099
    %5332 = vmatmul.mubr.f32.gmra.mrb[0].mxu0 %v5098
    %v5333 = vpop.f32.mrb[0].mxu0
    %v5334 = vadd.f32 %v5249, %v5333
    %v5335 = vpop.f32.mrb[0].mxu0
    %5336 = vmatprep.mubr.f32.mxu0 %v5103
    %5337 = vmatmul.mubr.f32.gmra.mrb[0].mxu0 %v5102
    %v5338 = vpop.f32.mrb[0].mxu0
    %v5339 = vadd.f32 %v5254, %v5338
    %v5340 = vpop.f32.mrb[0].mxu0
    %5341 = vdwg.mxu0
    %v5342 = vadd.f32 %v4819, %v5324
    %v5343 = vadd.f32 %v4820, %v5329
    %v5344 = vadd.f32 %v4821, %v5334
    %v5345 = vadd.f32 %v4822, %v5339
    %5346 = vadd.xlane.f32.xlu0 %v5342
    %v5347 = vpop.xlane.xlu0 %5346
    %5348 = vadd.xlane.f32.xlu0 %v5343
    %v5349 = vpop.xlane.xlu0 %5348
    %5350 = vadd.xlane.f32.xlu0 %v5344
    %v5351 = vpop.xlane.xlu0 %5350
    %5352 = vadd.xlane.f32.xlu0 %v5345
    %v5353 = vpop.xlane.xlu0 %5352
    %v5354 = vmul.f32 %v5347, %v2932
    %v5355 = vmul.f32 %v5349, %v2932
    %v5356 = vmul.f32 %v5351, %v2932
    %v5357 = vmul.f32 %v5353, %v2932
    %v5358 = vsub.f32 %v5342, %v5354
    %v5359 = vsub.f32 %v5343, %v5355
    %v5360 = vsub.f32 %v5344, %v5356
    %v5361 = vsub.f32 %v5345, %v5357
    %v5362 = vmul.f32 %v5358, %v5358
    %v5363 = vmul.f32 %v5359, %v5359
    %v5364 = vmul.f32 %v5360, %v5360
    %v5365 = vmul.f32 %v5361, %v5361
    %5366 = vadd.xlane.f32.xlu0 %v5362
    %v5367 = vpop.xlane.xlu0 %5366
    %5368 = vadd.xlane.f32.xlu0 %v5363
    %v5369 = vpop.xlane.xlu0 %5368
    %5370 = vadd.xlane.f32.xlu0 %v5364
    %v5371 = vpop.xlane.xlu0 %5370
    %5372 = vadd.xlane.f32.xlu0 %v5365
    %v5373 = vpop.xlane.xlu0 %5372
    %v5374 = vmul.f32 %v5367, %v2932
    %v5375 = vmul.f32 %v5369, %v2932
    %v5376 = vmul.f32 %v5371, %v2932
    %v5377 = vmul.f32 %v5373, %v2932
    %v5378 = vadd.f32 %v5374, 1e-05
    %v5379 = vadd.f32 %v5375, 1e-05
    %v5380 = vadd.f32 %v5376, 1e-05
    %v5381 = vadd.f32 %v5377, 1e-05
    %v5382 = vrsqrt.pop %v5378
    %v5383 = vrsqrt.pop %v5379
    %v5384 = vrsqrt.pop %v5380
    %v5385 = vrsqrt.pop %v5381
    %v5386 = vmul.f32 %v5358, %v5382
    %v5387 = vmul.f32 %v5359, %v5383
    %v5388 = vmul.f32 %v5360, %v5384
    %v5389 = vmul.f32 %v5361, %v5385
    %v5390 = vlaneseq
    %v5391 = vshrl.u32 %v5390, 7
    %v5392 = vsub.s32 5, %v5391
    %v5393 = vrot.slane %v94, %v5392
    %v5394 = vmul.f32 %v5386, %v5393
    %v5395 = vmul.f32 %v5387, %v5393
    %v5396 = vmul.f32 %v5388, %v5393
    %v5397 = vmul.f32 %v5389, %v5393
    %v5398 = vlaneseq
    %v5399 = vshrl.u32 %v5398, 7
    %v5400 = vsub.s32 6, %v5399
    %v5401 = vrot.slane %v94, %v5400
    %v5402 = vadd.f32 %v5394, %v5401
    %v5403 = vadd.f32 %v5395, %v5401
    %v5404 = vadd.f32 %v5396, %v5401
    %v5405 = vadd.f32 %v5397, %v5401
    %5406 = vst [vmem:[#allocation11] sm:$0xff] %v5402
    %5407 = vst [vmem:[#allocation11 + $0x8] sm:$0xff] %v5403
    %5408 = vst [vmem:[#allocation11 + $0x10] sm:$0xff] %v5404
    %5409 = vst [vmem:[#allocation11 + $0x18] sm:$0xff] %v5405
    // Predicated region
    $region42: #{tpu_custom_call.1} parent=1 // pred_check
      _
    $region43: #{tpu_custom_call.1} parent=1 // pred_check_branch
      %5411 = sbr.rel (0) target = $region45
    $region44: #{tpu_custom_call.1} parent=1 // pred_region
      %s5413 = ssub.s32 512, 512
      %5414 = vsyncadd [#allocation4], %s5413
      %s5415 = sshll.u32 [#allocation11], 4
      %s5416 = int_to_ptr.vmem [resolvable:$true] %s5415
      %5421 = dma.vmem_to_hbm [thread:$0]  %s5416, 512, %s5, [#allocation4], 128, 128, 8
    $region45: #{tpu_custom_call.1} parent=1 // pred_fallthru
      _
    // Predicated region
    $region46: #{tpu_custom_call.1} parent=1 // pred_check
      _
    $region47: #{tpu_custom_call.1} parent=1 // pred_check_branch
      %5423 = sbr.rel (0) target = $region49
    $region48: #{tpu_custom_call.1} parent=1 // pred_region
      %5424 = dma.done [#allocation4], 512
    $region49: #{tpu_custom_call.1} parent=1 // pred_fallthru
      _
    %5425 = vsyncpa [#allocation3], 1
    %5426 = vsyncpa [#allocation6], 1
    %5427 = vsyncpa [#allocation9], 1
    %5428 = vsyncpa [#allocation4], 1

</llo_original>
